<compile_context>
chip_gen: v5e
topology: v5e:2x2
jax: 0.10.0
libtpu: 0.0.40
codegen_flags: <defaults>
</compile_context>

<pallas_src>
import functools

import jax
import jax.numpy as jnp
from jax import lax
from jax.experimental import pallas as pl
from jax.experimental.pallas import tpu as pltpu


# ----------------------------------------------------------------------------
# Fused kernel: b_blk images per grid step
# ----------------------------------------------------------------------------
def _down_kernel(x_ref, w1_ref, b1_ref, w2_ref, b2_ref, o_ref, p1_ref, p2_ref,
                 *, b_blk, ho, wo):
    """MaxPool2d(2) -> (conv3x3 + folded-BN + ReLU) x 2, all resident in VMEM.

    Flat layout used by both padded scratches (row width = wo):
      [ halo: wo+1 zero rows |
        image 0: ho*wo real rows, 2*wo zero junk rows |
        image 1: ...                                   |
        halo: wo+1 zero rows ]
    A 3x3 tap (dy, dx) of output row r is then the single contiguous row
    (r + (dy-1)*wo + (dx-1)); dy padding comes from the real zero rows, dx
    padding from the iota masks below.

    x_ref:  (b_blk*ho, 2, wo, 2*cin)  pooling-friendly view of the NHWC input
    w1_ref: (9, cin,  cmid)           conv1 taps, BN1 folded; tap t = (t//3, t%3)
    b1_ref: (1, cmid)                 conv1 bias with BN1 folded
    w2_ref: (9, cmid, cout)
    b2_ref: (1, cout)
    o_ref:  (m, cout)                 flat output incl. junk rows (dropped outside)
    p1_ref: (m + 2*(wo+1), cin)       flat padded pooled image
    p2_ref: (m + 2*(wo+1), cmid)      flat padded mid activation
    """
    cin = x_ref.shape[-1] // 2
    hb = ho + 2                      # per-image rows in the flat layout (2 junk rows)
    pad = wo + 1                     # top/bottom halo margin (rows)
    m = b_blk * hb * wo              # matmul M (includes the junk rows)
    f32 = jnp.float32

    # ---- re-zero only the small always-zero regions (halo + junk rows) ------
    # These rows are read as the dy-direction zero padding but are never
    # written by the data stores below; re-zeroing them is a handful of tiny
    # stores per step and is correct no matter how the parallel grid axis is
    # partitioned across TensorCores (unlike a program_id==0-only init).
    def zero_rows(ref, start, n_rows):
        ref[pl.ds(start, n_rows), :] = jnp.zeros((n_rows, ref.shape[1]), f32)

    zero_rows(p1_ref, 0, pad)                       # p1 top halo
    zero_rows(p2_ref, 0, pad)                       # p2 top halo
    zero_rows(p2_ref, pad + m, pad)                 # p2 bottom halo
    for b in range(b_blk):                          # p1 junk rows (+ bottom halo)
        start = pad + b * hb * wo + ho * wo
        n_rows = 2 * wo + (pad if b == b_blk - 1 else 0)
        zero_rows(p1_ref, start, n_rows)

    # ---- 2x2 / stride-2 max pool: two elementwise maxes ---------------------
    xb = x_ref[...]                                       # (b_blk*ho, 2, wo, 2*cin)
    rows = jnp.maximum(xb[:, 0], xb[:, 1])                # row-pair max
    pooled = jnp.maximum(rows[..., :cin], rows[..., cin:])  # (b_blk*ho, wo, cin)
    pooled = pooled.reshape(b_blk * ho * wo, cin)         # flat (position, channel)

    # ---- place the pooled rows: ONE contiguous store per image --------------
    for b in range(b_blk):
        p1_ref[pl.ds(pad + b * hb * wo, ho * wo), :] = (
            pooled[b * ho * wo:(b + 1) * ho * wo])

    # ---- in-kernel masks (no (M,1) HBM mask input, no vector integer div) ---
    ridx = lax.broadcasted_iota(jnp.int32, (m, 1), 0)
    if wo & (wo - 1) == 0:
        col = jnp.bitwise_and(ridx, wo - 1)               # r % wo (pow2 fast path)
    else:
        col = ridx % wo
    mask_l = (col >= 1).astype(f32)                       # left neighbour exists
    mask_r = (col <= wo - 2).astype(f32)                  # right neighbour exists
    # "real row" mask, built from per-image range compares (b_blk is tiny).
    row_ok = jnp.logical_and(ridx >= 0, ridx < ho * wo)
    for b in range(1, b_blk):
        lo = b * hb * wo
        row_ok = jnp.logical_or(
            row_ok, jnp.logical_and(ridx >= lo, ridx < lo + ho * wo))

    # ---- conv3x3 on the flat layout: each tap is one contiguous slab --------
    def conv3x3(p_ref, w_ref, b_ref):
        w = w_ref[...]                                    # (9, k, c_out)

        def dx_group(dx):                                 # sum of the 3 dy taps
            acc = None
            for dy in range(3):
                slab = p_ref[pl.ds(pad + (dy - 1) * wo + (dx - 1), m), :]
                d = jnp.dot(slab, w[3 * dy + dx], preferred_element_type=f32)
                acc = d if acc is None else acc + d       # acc starts from a dot
            return acc

        acc = dx_group(1)                                 # centre column: unmasked
        acc = acc + mask_l * dx_group(0)                  # w-1 taps
        acc = acc + mask_r * dx_group(2)                  # w+1 taps
        return jnp.maximum(acc + b_ref[...], 0.0)         # folded-BN bias + ReLU

    mid = conv3x3(p1_ref, w1_ref, b1_ref)                 # (m, cmid) f32
    mid = jnp.where(row_ok, mid, 0.0)                     # junk rows -> exact zeros
    # TODO(synk): training-mode dropout RNG masking not implemented (eval = identity).

    p2_ref[pl.ds(pad, m), :] = mid                        # ONE contiguous store

    y = conv3x3(p2_ref, w2_ref, b2_ref)                   # (m, cout)
    o_ref[...] = y.astype(o_ref.dtype)                    # whole-block store


# ----------------------------------------------------------------------------
# Parameter preparation (outside the hot path): fold BN into conv weights
# ----------------------------------------------------------------------------
def fold_bn_into_conv(w, b, scale, shift):
    """Eval-mode BN: y = conv(x)*scale + (b*scale + shift) folded into w', b'."""
    return w * scale[None, None, None, :], b * scale + shift


def prepare_down_params(p):
    # Keep f32 at toy channel counts so the reference comparison stays tight.
    # At realistic channel counts cast w1/w2 (and the VMEM scratches) to bf16.
    w1, b1 = fold_bn_into_conv(p["w1"], p["b1"], p["scale1"], p["shift1"])
    w2, b2 = fold_bn_into_conv(p["w2"], p["b2"], p["scale2"], p["shift2"])
    kh, kw, cin, cmid = w1.shape
    cout = w2.shape[-1]
    return dict(w1=w1.reshape(kh * kw, cin, cmid), b1=b1.reshape(1, cmid),
                w2=w2.reshape(kh * kw, cmid, cout), b2=b2.reshape(1, cout))


def _pick_batch_block(n):
    """Fold images into M (less per-step overhead) but keep >=2 grid steps when
    possible so v7x's two TensorCores both get work.  At real UNet sizes this
    would additionally be capped by a VMEM budget."""
    if n <= 1:
        return 1
    if n % 2 == 0:
        return max(1, n // 2)
    return 1


# ----------------------------------------------------------------------------
# Wrapper (layout glue only): single pallas_call
# ----------------------------------------------------------------------------
def down_forward(x_nchw, fp, *, batch_block=None):
    """Down: MaxPool2d(2) -> (Conv3x3 + BN + ReLU + Dropout) x 2.  NCHW in/out."""
    n, cin, h, w = x_nchw.shape
    assert h % 2 == 0 and w % 2 == 0, "MaxPool2d(2) path assumes even H and W"
    ho, wo = h // 2, w // 2
    hb, pad = ho + 2, wo + 1
    cmid = fp["w1"].shape[-1]
    cout = fp["w2"].shape[-1]

    b_blk = batch_block if batch_block is not None else _pick_batch_block(n)
    assert n % b_blk == 0
    steps = n // b_blk
    m = b_blk * hb * wo                                  # flat rows per grid step

    # Layout glue: NCHW -> NHWC, then a metadata reshape into the pooling view.
    x_nhwc = jnp.transpose(x_nchw, (0, 2, 3, 1))
    x_pool = x_nhwc.reshape(n * ho, 2, wo, 2 * cin)

    kernel = functools.partial(_down_kernel, b_blk=b_blk, ho=ho, wo=wo)

    out_flat = pl.pallas_call(
        kernel,
        out_shape=jax.ShapeDtypeStruct((steps * m, cout), x_nchw.dtype),
        grid=(steps,),
        in_specs=[
            pl.BlockSpec((b_blk * ho, 2, wo, 2 * cin), lambda i: (i, 0, 0, 0)),
            # Grid-invariant operands: constant index_map => no per-step re-DMA.
            pl.BlockSpec((9, cin, cmid), lambda i: (0, 0, 0)),
            pl.BlockSpec((1, cmid), lambda i: (0, 0)),
            pl.BlockSpec((9, cmid, cout), lambda i: (0, 0, 0)),
            pl.BlockSpec((1, cout), lambda i: (0, 0)),
        ],
        out_specs=pl.BlockSpec((m, cout), lambda i: (i, 0)),
        scratch_shapes=[
            pltpu.VMEM((m + 2 * pad, cin), jnp.float32),   # padded pooled image
            pltpu.VMEM((m + 2 * pad, cmid), jnp.float32),  # padded mid activation
        ],
        compiler_params=pltpu.CompilerParams(
            dimension_semantics=("parallel",),
            # Tiny here; at real sizes raise this (v6e) / re-tile with a halo'd
            # row-block axis so everything fits v7x's 64 MiB VMEM.
            vmem_limit_bytes=32 * 1024 * 1024,
        ),
    )(x_pool, fp["w1"], fp["b1"], fp["w2"], fp["b2"])

    # Drop the per-image junk rows and go back to NCHW (tiny XLA glue here).
    out = out_flat.reshape(n, hb, wo, cout)[:, :ho]
    return jnp.transpose(out, (0, 3, 1, 2))


# ----------------------------------------------------------------------------
# Deterministic parameter init (synthetic; mirrors the module's shapes)
# ----------------------------------------------------------------------------
def init_down_params(key, in_channels, out_channels, eps=1e-5):
    mid_channels = out_channels  # DoubleConv default: mid = out
    ks = jax.random.split(key, 12)

    def bn_fold(kg, kb, km, kv, c):
        gamma = 1.0 + 0.1 * jax.random.normal(kg, (c,), jnp.float32)
        beta = 0.1 * jax.random.normal(kb, (c,), jnp.float32)
        mean = 0.1 * jax.random.normal(km, (c,), jnp.float32)
        var = 1.0 + 0.1 * jnp.abs(jax.random.normal(kv, (c,), jnp.float32))
        scale = gamma / jnp.sqrt(var + eps)
        shift = beta - mean * scale
        return scale, shift

    w1 = 0.1 * jax.random.normal(ks[0], (3, 3, in_channels, mid_channels), jnp.float32)
    b1 = 0.1 * jax.random.normal(ks[1], (mid_channels,), jnp.float32)
    scale1, shift1 = bn_fold(ks[2], ks[3], ks[4], ks[5], mid_channels)

    w2 = 0.1 * jax.random.normal(ks[6], (3, 3, mid_channels, out_channels), jnp.float32)
    b2 = 0.1 * jax.random.normal(ks[7], (out_channels,), jnp.float32)
    scale2, shift2 = bn_fold(ks[8], ks[9], ks[10], ks[11], out_channels)

    return dict(w1=w1, b1=b1, scale1=scale1, shift1=shift1,
                w2=w2, b2=b2, scale2=scale2, shift2=shift2)


# ----------------------------------------------------------------------------
# Pure-JAX reference (correctness sanity check)
# ----------------------------------------------------------------------------
def down_forward_ref(x_nchw, p):
    x = jnp.transpose(x_nchw, (0, 2, 3, 1))
    x = lax.reduce_window(x, -jnp.inf, lax.max, (1, 2, 2, 1), (1, 2, 2, 1), "VALID")

    def cbr(x, w, b, s, sh):
        y = lax.conv_general_dilated(
            x, w, window_strides=(1, 1), padding="SAME",
            dimension_numbers=("NHWC", "HWIO", "NHWC"))
        y = y + b
        y = y * s + sh
        return jnp.maximum(y, 0.0)

    x = cbr(x, p["w1"], p["b1"], p["scale1"], p["shift1"])
    x = cbr(x, p["w2"], p["b2"], p["scale2"], p["shift2"])
    return jnp.transpose(x, (0, 3, 1, 2))


if __name__ == "__main__":
    key = jax.random.PRNGKey(0)
    kx, kp = jax.random.split(key)

    # Small shapes consistent with Down(in_channels=4, out_channels=8).
    # batch=4 exercises batch folding (2 images per grid step, 2 grid steps).
    x = jax.random.normal(kx, (4, 4, 16, 16), jnp.float32)   # NCHW, like PyTorch
    params = init_down_params(kp, in_channels=4, out_channels=8)
    fused_params = prepare_down_params(params)   # BN fold: once, outside hot path

    fwd = jax.jit(lambda xx: down_forward(xx, fused_params))
    y = fwd(x)
    jax.block_until_ready(y)

    assert y.shape == (4, 8, 8, 8), y.shape

    y_ref = down_forward_ref(x, params)
    jax.block_until_ready(y_ref)
    err = float(jnp.max(jnp.abs(y - y_ref)))
    assert jnp.allclose(y, y_ref, atol=5e-4, rtol=5e-4), f"mismatch vs ref: {err}"

    print("KERNEL_OK")
</pallas_src>

<mosaic_0001>
module attributes {stable_mosaic.version = 11 : i64} {
  func.func @_down_kernel(%arg0: i32, %arg1: memref<16x2x8x8xf32, #tpu.memory_space<vmem>>, %arg2: memref<9x4x8xf32, #tpu.memory_space<vmem>>, %arg3: memref<1x8xf32, #tpu.memory_space<vmem>>, %arg4: memref<9x8x8xf32, #tpu.memory_space<vmem>>, %arg5: memref<1x8xf32, #tpu.memory_space<vmem>>, %arg6: memref<160x8xf32, #tpu.memory_space<vmem>>, %arg7: memref<178x4xf32, #tpu.memory_space<vmem>>, %arg8: memref<178x8xf32, #tpu.memory_space<vmem>>) attributes {dimension_semantics = [#tpu.dimension_semantics<parallel>], iteration_bounds = array<i64: 2>, scalar_prefetch = 0 : i64, scratch_operands = 2 : i64, tpu.core_type = #tpu.core_type<tc>, window_params = [{transform_indices = @transform_0, window_bounds = array<i64: 16, 2, 8, 8>}, {pipeline_mode = #tpu.pipeline_mode<synchronous>, transform_indices = @transform_1, window_bounds = array<i64: 9, 4, 8>}, {pipeline_mode = #tpu.pipeline_mode<synchronous>, transform_indices = @transform_2, window_bounds = array<i64: 1, 8>}, {pipeline_mode = #tpu.pipeline_mode<synchronous>, transform_indices = @transform_3, window_bounds = array<i64: 9, 8, 8>}, {pipeline_mode = #tpu.pipeline_mode<synchronous>, transform_indices = @transform_4, window_bounds = array<i64: 1, 8>}, {transform_indices = @transform_5, window_bounds = array<i64: 160, 8>}]} {
    %cst = arith.constant 0.000000e+00 : f32
    %0 = vector.broadcast %cst : f32 to vector<9x4xf32>
    %c0 = arith.constant 0 : index
    %c0_0 = arith.constant 0 : index
    %1 = vector.load %arg7[%c0, %c0_0] : memref<178x4xf32, #tpu.memory_space<vmem>>, vector<9x4xf32>
    tpu.vector_store %arg7[%c0, %c0_0], %0 {strides = array<i32>} : memref<178x4xf32, #tpu.memory_space<vmem>>, vector<9x4xf32>,
    %cst_1 = arith.constant 0.000000e+00 : f32
    %2 = vector.broadcast %cst_1 : f32 to vector<9x8xf32>
    %c0_2 = arith.constant 0 : index
    %c0_3 = arith.constant 0 : index
    %3 = vector.load %arg8[%c0_2, %c0_3] : memref<178x8xf32, #tpu.memory_space<vmem>>, vector<9x8xf32>
    tpu.vector_store %arg8[%c0_2, %c0_3], %2 {strides = array<i32>} : memref<178x8xf32, #tpu.memory_space<vmem>>, vector<9x8xf32>,
    %cst_4 = arith.constant 0.000000e+00 : f32
    %4 = vector.broadcast %cst_4 : f32 to vector<9x8xf32>
    %c169 = arith.constant 169 : index
    %c0_5 = arith.constant 0 : index
    %5 = vector.load %arg8[%c169, %c0_5] : memref<178x8xf32, #tpu.memory_space<vmem>>, vector<9x8xf32>
    tpu.vector_store %arg8[%c169, %c0_5], %4 {strides = array<i32>} : memref<178x8xf32, #tpu.memory_space<vmem>>, vector<9x8xf32>,
    %cst_6 = arith.constant 0.000000e+00 : f32
    %6 = vector.broadcast %cst_6 : f32 to vector<16x4xf32>
    %c73 = arith.constant 73 : index
    %c0_7 = arith.constant 0 : index
    %7 = vector.load %arg7[%c73, %c0_7] : memref<178x4xf32, #tpu.memory_space<vmem>>, vector<16x4xf32>
    tpu.vector_store %arg7[%c73, %c0_7], %6 {strides = array<i32>} : memref<178x4xf32, #tpu.memory_space<vmem>>, vector<16x4xf32>,
    %cst_8 = arith.constant 0.000000e+00 : f32
    %8 = vector.broadcast %cst_8 : f32 to vector<25x4xf32>
    %c153 = arith.constant 153 : index
    %c0_9 = arith.constant 0 : index
    %9 = vector.load %arg7[%c153, %c0_9] : memref<178x4xf32, #tpu.memory_space<vmem>>, vector<25x4xf32>
    tpu.vector_store %arg7[%c153, %c0_9], %8 {strides = array<i32>} : memref<178x4xf32, #tpu.memory_space<vmem>>, vector<25x4xf32>,
    %c0_10 = arith.constant 0 : index
    %c0_11 = arith.constant 0 : index
    %c0_12 = arith.constant 0 : index
    %c0_13 = arith.constant 0 : index
    %10 = vector.load %arg1[%c0_10, %c0_11, %c0_12, %c0_13] : memref<16x2x8x8xf32, #tpu.memory_space<vmem>>, vector<16x2x8x8xf32>
    %11 = vector.extract_strided_slice %10 {offsets = [0, 0, 0, 0], sizes = [16, 1, 8, 8], strides = [1, 1, 1, 1]} : vector<16x2x8x8xf32> to vector<16x1x8x8xf32>
    %12 = vector.shape_cast %11 : vector<16x1x8x8xf32> to vector<16x8x8xf32>
    %13 = vector.extract_strided_slice %10 {offsets = [0, 1, 0, 0], sizes = [16, 1, 8, 8], strides = [1, 1, 1, 1]} : vector<16x2x8x8xf32> to vector<16x1x8x8xf32>
    %14 = vector.shape_cast %13 : vector<16x1x8x8xf32> to vector<16x8x8xf32>
    %15 = arith.maximumf %12, %14 : vector<16x8x8xf32>
    %16 = vector.extract_strided_slice %15 {offsets = [0, 0, 0], sizes = [16, 8, 4], strides = [1, 1, 1]} : vector<16x8x8xf32> to vector<16x8x4xf32>
    %17 = vector.extract_strided_slice %15 {offsets = [0, 0, 4], sizes = [16, 8, 4], strides = [1, 1, 1]} : vector<16x8x8xf32> to vector<16x8x4xf32>
    %18 = arith.maximumf %16, %17 : vector<16x8x4xf32>
    %19 = vector.shape_cast %18 : vector<16x8x4xf32> to vector<128x4xf32>
    %20 = vector.extract_strided_slice %19 {offsets = [0, 0], sizes = [64, 4], strides = [1, 1]} : vector<128x4xf32> to vector<64x4xf32>
    %c9 = arith.constant 9 : index
    %c0_14 = arith.constant 0 : index
    %21 = vector.load %arg7[%c9, %c0_14] : memref<178x4xf32, #tpu.memory_space<vmem>>, vector<64x4xf32>
    tpu.vector_store %arg7[%c9, %c0_14], %20 {strides = array<i32>} : memref<178x4xf32, #tpu.memory_space<vmem>>, vector<64x4xf32>,
    %22 = vector.extract_strided_slice %19 {offsets = [64, 0], sizes = [64, 4], strides = [1, 1]} : vector<128x4xf32> to vector<64x4xf32>
    %c89 = arith.constant 89 : index
    %c0_15 = arith.constant 0 : index
    %23 = vector.load %arg7[%c89, %c0_15] : memref<178x4xf32, #tpu.memory_space<vmem>>, vector<64x4xf32>
    tpu.vector_store %arg7[%c89, %c0_15], %22 {strides = array<i32>} : memref<178x4xf32, #tpu.memory_space<vmem>>, vector<64x4xf32>,
    %24 = tpu.iota {dimensions = array<i32: 0>} : vector<160x1xi32>
    %c7_i32 = arith.constant 7 : i32
    %25 = vector.broadcast %c7_i32 : i32 to vector<160x1xi32>
    %26 = arith.andi %24, %25 : vector<160x1xi32>
    %c1_i32 = arith.constant 1 : i32
    %27 = vector.broadcast %c1_i32 : i32 to vector<160x1xi32>
    %28 = arith.cmpi sge, %26, %27 : vector<160x1xi32>
    %29 = arith.extui %28 : vector<160x1xi1> to vector<160x1xi32>
    %30 = arith.sitofp %29 : vector<160x1xi32> to vector<160x1xf32>
    %c6_i32 = arith.constant 6 : i32
    %31 = vector.broadcast %c6_i32 : i32 to vector<160x1xi32>
    %32 = arith.cmpi sle, %26, %31 : vector<160x1xi32>
    %33 = arith.extui %32 : vector<160x1xi1> to vector<160x1xi32>
    %34 = arith.sitofp %33 : vector<160x1xi32> to vector<160x1xf32>
    %c0_i32 = arith.constant 0 : i32
    %35 = vector.broadcast %c0_i32 : i32 to vector<160x1xi32>
    %36 = arith.cmpi sge, %24, %35 : vector<160x1xi32>
    %c64_i32 = arith.constant 64 : i32
    %37 = vector.broadcast %c64_i32 : i32 to vector<160x1xi32>
    %38 = arith.cmpi slt, %24, %37 : vector<160x1xi32>
    %39 = arith.andi %36, %38 : vector<160x1xi1>
    %c80_i32 = arith.constant 80 : i32
    %40 = vector.broadcast %c80_i32 : i32 to vector<160x1xi32>
    %41 = arith.cmpi sge, %24, %40 : vector<160x1xi32>
    %c144_i32 = arith.constant 144 : i32
    %42 = vector.broadcast %c144_i32 : i32 to vector<160x1xi32>
    %43 = arith.cmpi slt, %24, %42 : vector<160x1xi32>
    %44 = arith.andi %41, %43 : vector<160x1xi1>
    %45 = arith.ori %39, %44 : vector<160x1xi1>
    %c0_16 = arith.constant 0 : index
    %c0_17 = arith.constant 0 : index
    %c0_18 = arith.constant 0 : index
    %46 = vector.load %arg2[%c0_16, %c0_17, %c0_18] : memref<9x4x8xf32, #tpu.memory_space<vmem>>, vector<9x4x8xf32>
    %c1 = arith.constant 1 : index
    %c0_19 = arith.constant 0 : index
    %47 = vector.load %arg7[%c1, %c0_19] : memref<178x4xf32, #tpu.memory_space<vmem>>, vector<160x4xf32>
    %48 = vector.extract_strided_slice %46 {offsets = [1, 0, 0], sizes = [1, 4, 8], strides = [1, 1, 1]} : vector<9x4x8xf32> to vector<1x4x8xf32>
    %49 = vector.shape_cast %48 : vector<1x4x8xf32> to vector<4x8xf32>
    %cst_20 = arith.constant dense<0.000000e+00> : vector<160x8xf32>
    %50 = tpu.matmul %47, %49, %cst_20 {dimension_numbers = #tpu.dot_dimension_numbers<[1], [0], [0], [1], [0, 0, 1, 1], [], []>} : vector<160x4xf32>, vector<4x8xf32>, vector<160x8xf32> -> vector<160x8xf32>
    %c9_21 = arith.constant 9 : index
    %c0_22 = arith.constant 0 : index
    %51 = vector.load %arg7[%c9_21, %c0_22] : memref<178x4xf32, #tpu.memory_space<vmem>>, vector<160x4xf32>
    %52 = vector.extract_strided_slice %46 {offsets = [4, 0, 0], sizes = [1, 4, 8], strides = [1, 1, 1]} : vector<9x4x8xf32> to vector<1x4x8xf32>
    %53 = vector.shape_cast %52 : vector<1x4x8xf32> to vector<4x8xf32>
    %cst_23 = arith.constant dense<0.000000e+00> : vector<160x8xf32>
    %54 = tpu.matmul %51, %53, %cst_23 {dimension_numbers = #tpu.dot_dimension_numbers<[1], [0], [0], [1], [0, 0, 1, 1], [], []>} : vector<160x4xf32>, vector<4x8xf32>, vector<160x8xf32> -> vector<160x8xf32>
    %55 = arith.addf %50, %54 : vector<160x8xf32>
    %c17 = arith.constant 17 : index
    %c0_24 = arith.constant 0 : index
    %56 = vector.load %arg7[%c17, %c0_24] : memref<178x4xf32, #tpu.memory_space<vmem>>, vector<160x4xf32>
    %57 = vector.extract_strided_slice %46 {offsets = [7, 0, 0], sizes = [1, 4, 8], strides = [1, 1, 1]} : vector<9x4x8xf32> to vector<1x4x8xf32>
    %58 = vector.shape_cast %57 : vector<1x4x8xf32> to vector<4x8xf32>
    %cst_25 = arith.constant dense<0.000000e+00> : vector<160x8xf32>
    %59 = tpu.matmul %56, %58, %cst_25 {dimension_numbers = #tpu.dot_dimension_numbers<[1], [0], [0], [1], [0, 0, 1, 1], [], []>} : vector<160x4xf32>, vector<4x8xf32>, vector<160x8xf32> -> vector<160x8xf32>
    %60 = arith.addf %55, %59 : vector<160x8xf32>
    %c0_26 = arith.constant 0 : index
    %c0_27 = arith.constant 0 : index
    %61 = vector.load %arg7[%c0_26, %c0_27] : memref<178x4xf32, #tpu.memory_space<vmem>>, vector<160x4xf32>
    %62 = vector.extract_strided_slice %46 {offsets = [0, 0, 0], sizes = [1, 4, 8], strides = [1, 1, 1]} : vector<9x4x8xf32> to vector<1x4x8xf32>
    %63 = vector.shape_cast %62 : vector<1x4x8xf32> to vector<4x8xf32>
    %cst_28 = arith.constant dense<0.000000e+00> : vector<160x8xf32>
    %64 = tpu.matmul %61, %63, %cst_28 {dimension_numbers = #tpu.dot_dimension_numbers<[1], [0], [0], [1], [0, 0, 1, 1], [], []>} : vector<160x4xf32>, vector<4x8xf32>, vector<160x8xf32> -> vector<160x8xf32>
    %c8 = arith.constant 8 : index
    %c0_29 = arith.constant 0 : index
    %65 = vector.load %arg7[%c8, %c0_29] : memref<178x4xf32, #tpu.memory_space<vmem>>, vector<160x4xf32>
    %66 = vector.extract_strided_slice %46 {offsets = [3, 0, 0], sizes = [1, 4, 8], strides = [1, 1, 1]} : vector<9x4x8xf32> to vector<1x4x8xf32>
    %67 = vector.shape_cast %66 : vector<1x4x8xf32> to vector<4x8xf32>
    %cst_30 = arith.constant dense<0.000000e+00> : vector<160x8xf32>
    %68 = tpu.matmul %65, %67, %cst_30 {dimension_numbers = #tpu.dot_dimension_numbers<[1], [0], [0], [1], [0, 0, 1, 1], [], []>} : vector<160x4xf32>, vector<4x8xf32>, vector<160x8xf32> -> vector<160x8xf32>
    %69 = arith.addf %64, %68 : vector<160x8xf32>
    %c16 = arith.constant 16 : index
    %c0_31 = arith.constant 0 : index
    %70 = vector.load %arg7[%c16, %c0_31] : memref<178x4xf32, #tpu.memory_space<vmem>>, vector<160x4xf32>
    %71 = vector.extract_strided_slice %46 {offsets = [6, 0, 0], sizes = [1, 4, 8], strides = [1, 1, 1]} : vector<9x4x8xf32> to vector<1x4x8xf32>
    %72 = vector.shape_cast %71 : vector<1x4x8xf32> to vector<4x8xf32>
    %cst_32 = arith.constant dense<0.000000e+00> : vector<160x8xf32>
    %73 = tpu.matmul %70, %72, %cst_32 {dimension_numbers = #tpu.dot_dimension_numbers<[1], [0], [0], [1], [0, 0, 1, 1], [], []>} : vector<160x4xf32>, vector<4x8xf32>, vector<160x8xf32> -> vector<160x8xf32>
    %74 = arith.addf %69, %73 : vector<160x8xf32>
    %75 = vector.broadcast %30 : vector<160x1xf32> to vector<160x8xf32>
    %76 = arith.mulf %75, %74 : vector<160x8xf32>
    %77 = arith.addf %60, %76 : vector<160x8xf32>
    %c2 = arith.constant 2 : index
    %c0_33 = arith.constant 0 : index
    %78 = vector.load %arg7[%c2, %c0_33] : memref<178x4xf32, #tpu.memory_space<vmem>>, vector<160x4xf32>
    %79 = vector.extract_strided_slice %46 {offsets = [2, 0, 0], sizes = [1, 4, 8], strides = [1, 1, 1]} : vector<9x4x8xf32> to vector<1x4x8xf32>
    %80 = vector.shape_cast %79 : vector<1x4x8xf32> to vector<4x8xf32>
    %cst_34 = arith.constant dense<0.000000e+00> : vector<160x8xf32>
    %81 = tpu.matmul %78, %80, %cst_34 {dimension_numbers = #tpu.dot_dimension_numbers<[1], [0], [0], [1], [0, 0, 1, 1], [], []>} : vector<160x4xf32>, vector<4x8xf32>, vector<160x8xf32> -> vector<160x8xf32>
    %c10 = arith.constant 10 : index
    %c0_35 = arith.constant 0 : index
    %82 = vector.load %arg7[%c10, %c0_35] : memref<178x4xf32, #tpu.memory_space<vmem>>, vector<160x4xf32>
    %83 = vector.extract_strided_slice %46 {offsets = [5, 0, 0], sizes = [1, 4, 8], strides = [1, 1, 1]} : vector<9x4x8xf32> to vector<1x4x8xf32>
    %84 = vector.shape_cast %83 : vector<1x4x8xf32> to vector<4x8xf32>
    %cst_36 = arith.constant dense<0.000000e+00> : vector<160x8xf32>
    %85 = tpu.matmul %82, %84, %cst_36 {dimension_numbers = #tpu.dot_dimension_numbers<[1], [0], [0], [1], [0, 0, 1, 1], [], []>} : vector<160x4xf32>, vector<4x8xf32>, vector<160x8xf32> -> vector<160x8xf32>
    %86 = arith.addf %81, %85 : vector<160x8xf32>
    %c18 = arith.constant 18 : index
    %c0_37 = arith.constant 0 : index
    %87 = vector.load %arg7[%c18, %c0_37] : memref<178x4xf32, #tpu.memory_space<vmem>>, vector<160x4xf32>
    %88 = vector.extract_strided_slice %46 {offsets = [8, 0, 0], sizes = [1, 4, 8], strides = [1, 1, 1]} : vector<9x4x8xf32> to vector<1x4x8xf32>
    %89 = vector.shape_cast %88 : vector<1x4x8xf32> to vector<4x8xf32>
    %cst_38 = arith.constant dense<0.000000e+00> : vector<160x8xf32>
    %90 = tpu.matmul %87, %89, %cst_38 {dimension_numbers = #tpu.dot_dimension_numbers<[1], [0], [0], [1], [0, 0, 1, 1], [], []>} : vector<160x4xf32>, vector<4x8xf32>, vector<160x8xf32> -> vector<160x8xf32>
    %91 = arith.addf %86, %90 : vector<160x8xf32>
    %92 = vector.broadcast %34 : vector<160x1xf32> to vector<160x8xf32>
    %93 = arith.mulf %92, %91 : vector<160x8xf32>
    %94 = arith.addf %77, %93 : vector<160x8xf32>
    %c0_39 = arith.constant 0 : index
    %c0_40 = arith.constant 0 : index
    %95 = vector.load %arg3[%c0_39, %c0_40] : memref<1x8xf32, #tpu.memory_space<vmem>>, vector<1x8xf32>
    %96 = vector.broadcast %95 : vector<1x8xf32> to vector<160x8xf32>
    %97 = arith.addf %94, %96 : vector<160x8xf32>
    %cst_41 = arith.constant 0.000000e+00 : f32
    %98 = vector.broadcast %cst_41 : f32 to vector<160x8xf32>
    %99 = arith.maximumf %97, %98 : vector<160x8xf32>
    %cst_42 = arith.constant 0.000000e+00 : f32
    %100 = vector.shape_cast %45 : vector<160x1xi1> to vector<160x1xi1>
    %101 = vector.broadcast %100 : vector<160x1xi1> to vector<160x8xi1>
    %102 = vector.broadcast %cst_42 : f32 to vector<160x8xf32>
    %103 = arith.select %101, %99, %102 : vector<160x8xi1>, vector<160x8xf32>
    %c9_43 = arith.constant 9 : index
    %c0_44 = arith.constant 0 : index
    %104 = vector.load %arg8[%c9_43, %c0_44] : memref<178x8xf32, #tpu.memory_space<vmem>>, vector<160x8xf32>
    tpu.vector_store %arg8[%c9_43, %c0_44], %103 {strides = array<i32>} : memref<178x8xf32, #tpu.memory_space<vmem>>, vector<160x8xf32>,
    %c0_45 = arith.constant 0 : index
    %c0_46 = arith.constant 0 : index
    %c0_47 = arith.constant 0 : index
    %105 = vector.load %arg4[%c0_45, %c0_46, %c0_47] : memref<9x8x8xf32, #tpu.memory_space<vmem>>, vector<9x8x8xf32>
    %c1_48 = arith.constant 1 : index
    %c0_49 = arith.constant 0 : index
    %106 = vector.load %arg8[%c1_48, %c0_49] : memref<178x8xf32, #tpu.memory_space<vmem>>, vector<160x8xf32>
    %107 = vector.extract_strided_slice %105 {offsets = [1, 0, 0], sizes = [1, 8, 8], strides = [1, 1, 1]} : vector<9x8x8xf32> to vector<1x8x8xf32>
    %108 = vector.shape_cast %107 : vector<1x8x8xf32> to vector<8x8xf32>
    %cst_50 = arith.constant dense<0.000000e+00> : vector<160x8xf32>
    %109 = tpu.matmul %106, %108, %cst_50 {dimension_numbers = #tpu.dot_dimension_numbers<[1], [0], [0], [1], [0, 0, 1, 1], [], []>} : vector<160x8xf32>, vector<8x8xf32>, vector<160x8xf32> -> vector<160x8xf32>
    %c9_51 = arith.constant 9 : index
    %c0_52 = arith.constant 0 : index
    %110 = vector.load %arg8[%c9_51, %c0_52] : memref<178x8xf32, #tpu.memory_space<vmem>>, vector<160x8xf32>
    %111 = vector.extract_strided_slice %105 {offsets = [4, 0, 0], sizes = [1, 8, 8], strides = [1, 1, 1]} : vector<9x8x8xf32> to vector<1x8x8xf32>
    %112 = vector.shape_cast %111 : vector<1x8x8xf32> to vector<8x8xf32>
    %cst_53 = arith.constant dense<0.000000e+00> : vector<160x8xf32>
    %113 = tpu.matmul %110, %112, %cst_53 {dimension_numbers = #tpu.dot_dimension_numbers<[1], [0], [0], [1], [0, 0, 1, 1], [], []>} : vector<160x8xf32>, vector<8x8xf32>, vector<160x8xf32> -> vector<160x8xf32>
    %114 = arith.addf %109, %113 : vector<160x8xf32>
    %c17_54 = arith.constant 17 : index
    %c0_55 = arith.constant 0 : index
    %115 = vector.load %arg8[%c17_54, %c0_55] : memref<178x8xf32, #tpu.memory_space<vmem>>, vector<160x8xf32>
    %116 = vector.extract_strided_slice %105 {offsets = [7, 0, 0], sizes = [1, 8, 8], strides = [1, 1, 1]} : vector<9x8x8xf32> to vector<1x8x8xf32>
    %117 = vector.shape_cast %116 : vector<1x8x8xf32> to vector<8x8xf32>
    %cst_56 = arith.constant dense<0.000000e+00> : vector<160x8xf32>
    %118 = tpu.matmul %115, %117, %cst_56 {dimension_numbers = #tpu.dot_dimension_numbers<[1], [0], [0], [1], [0, 0, 1, 1], [], []>} : vector<160x8xf32>, vector<8x8xf32>, vector<160x8xf32> -> vector<160x8xf32>
    %119 = arith.addf %114, %118 : vector<160x8xf32>
    %c0_57 = arith.constant 0 : index
    %c0_58 = arith.constant 0 : index
    %120 = vector.load %arg8[%c0_57, %c0_58] : memref<178x8xf32, #tpu.memory_space<vmem>>, vector<160x8xf32>
    %121 = vector.extract_strided_slice %105 {offsets = [0, 0, 0], sizes = [1, 8, 8], strides = [1, 1, 1]} : vector<9x8x8xf32> to vector<1x8x8xf32>
    %122 = vector.shape_cast %121 : vector<1x8x8xf32> to vector<8x8xf32>
    %cst_59 = arith.constant dense<0.000000e+00> : vector<160x8xf32>
    %123 = tpu.matmul %120, %122, %cst_59 {dimension_numbers = #tpu.dot_dimension_numbers<[1], [0], [0], [1], [0, 0, 1, 1], [], []>} : vector<160x8xf32>, vector<8x8xf32>, vector<160x8xf32> -> vector<160x8xf32>
    %c8_60 = arith.constant 8 : index
    %c0_61 = arith.constant 0 : index
    %124 = vector.load %arg8[%c8_60, %c0_61] : memref<178x8xf32, #tpu.memory_space<vmem>>, vector<160x8xf32>
    %125 = vector.extract_strided_slice %105 {offsets = [3, 0, 0], sizes = [1, 8, 8], strides = [1, 1, 1]} : vector<9x8x8xf32> to vector<1x8x8xf32>
    %126 = vector.shape_cast %125 : vector<1x8x8xf32> to vector<8x8xf32>
    %cst_62 = arith.constant dense<0.000000e+00> : vector<160x8xf32>
    %127 = tpu.matmul %124, %126, %cst_62 {dimension_numbers = #tpu.dot_dimension_numbers<[1], [0], [0], [1], [0, 0, 1, 1], [], []>} : vector<160x8xf32>, vector<8x8xf32>, vector<160x8xf32> -> vector<160x8xf32>
    %128 = arith.addf %123, %127 : vector<160x8xf32>
    %c16_63 = arith.constant 16 : index
    %c0_64 = arith.constant 0 : index
    %129 = vector.load %arg8[%c16_63, %c0_64] : memref<178x8xf32, #tpu.memory_space<vmem>>, vector<160x8xf32>
    %130 = vector.extract_strided_slice %105 {offsets = [6, 0, 0], sizes = [1, 8, 8], strides = [1, 1, 1]} : vector<9x8x8xf32> to vector<1x8x8xf32>
    %131 = vector.shape_cast %130 : vector<1x8x8xf32> to vector<8x8xf32>
    %cst_65 = arith.constant dense<0.000000e+00> : vector<160x8xf32>
    %132 = tpu.matmul %129, %131, %cst_65 {dimension_numbers = #tpu.dot_dimension_numbers<[1], [0], [0], [1], [0, 0, 1, 1], [], []>} : vector<160x8xf32>, vector<8x8xf32>, vector<160x8xf32> -> vector<160x8xf32>
    %133 = arith.addf %128, %132 : vector<160x8xf32>
    %134 = vector.broadcast %30 : vector<160x1xf32> to vector<160x8xf32>
    %135 = arith.mulf %134, %133 : vector<160x8xf32>
    %136 = arith.addf %119, %135 : vector<160x8xf32>
    %c2_66 = arith.constant 2 : index
    %c0_67 = arith.constant 0 : index
    %137 = vector.load %arg8[%c2_66, %c0_67] : memref<178x8xf32, #tpu.memory_space<vmem>>, vector<160x8xf32>
    %138 = vector.extract_strided_slice %105 {offsets = [2, 0, 0], sizes = [1, 8, 8], strides = [1, 1, 1]} : vector<9x8x8xf32> to vector<1x8x8xf32>
    %139 = vector.shape_cast %138 : vector<1x8x8xf32> to vector<8x8xf32>
    %cst_68 = arith.constant dense<0.000000e+00> : vector<160x8xf32>
    %140 = tpu.matmul %137, %139, %cst_68 {dimension_numbers = #tpu.dot_dimension_numbers<[1], [0], [0], [1], [0, 0, 1, 1], [], []>} : vector<160x8xf32>, vector<8x8xf32>, vector<160x8xf32> -> vector<160x8xf32>
    %c10_69 = arith.constant 10 : index
    %c0_70 = arith.constant 0 : index
    %141 = vector.load %arg8[%c10_69, %c0_70] : memref<178x8xf32, #tpu.memory_space<vmem>>, vector<160x8xf32>
    %142 = vector.extract_strided_slice %105 {offsets = [5, 0, 0], sizes = [1, 8, 8], strides = [1, 1, 1]} : vector<9x8x8xf32> to vector<1x8x8xf32>
    %143 = vector.shape_cast %142 : vector<1x8x8xf32> to vector<8x8xf32>
    %cst_71 = arith.constant dense<0.000000e+00> : vector<160x8xf32>
    %144 = tpu.matmul %141, %143, %cst_71 {dimension_numbers = #tpu.dot_dimension_numbers<[1], [0], [0], [1], [0, 0, 1, 1], [], []>} : vector<160x8xf32>, vector<8x8xf32>, vector<160x8xf32> -> vector<160x8xf32>
    %145 = arith.addf %140, %144 : vector<160x8xf32>
    %c18_72 = arith.constant 18 : index
    %c0_73 = arith.constant 0 : index
    %146 = vector.load %arg8[%c18_72, %c0_73] : memref<178x8xf32, #tpu.memory_space<vmem>>, vector<160x8xf32>
    %147 = vector.extract_strided_slice %105 {offsets = [8, 0, 0], sizes = [1, 8, 8], strides = [1, 1, 1]} : vector<9x8x8xf32> to vector<1x8x8xf32>
    %148 = vector.shape_cast %147 : vector<1x8x8xf32> to vector<8x8xf32>
    %cst_74 = arith.constant dense<0.000000e+00> : vector<160x8xf32>
    %149 = tpu.matmul %146, %148, %cst_74 {dimension_numbers = #tpu.dot_dimension_numbers<[1], [0], [0], [1], [0, 0, 1, 1], [], []>} : vector<160x8xf32>, vector<8x8xf32>, vector<160x8xf32> -> vector<160x8xf32>
    %150 = arith.addf %145, %149 : vector<160x8xf32>
    %151 = vector.broadcast %34 : vector<160x1xf32> to vector<160x8xf32>
    %152 = arith.mulf %151, %150 : vector<160x8xf32>
    %153 = arith.addf %136, %152 : vector<160x8xf32>
    %c0_75 = arith.constant 0 : index
    %c0_76 = arith.constant 0 : index
    %154 = vector.load %arg5[%c0_75, %c0_76] : memref<1x8xf32, #tpu.memory_space<vmem>>, vector<1x8xf32>
    %155 = vector.broadcast %154 : vector<1x8xf32> to vector<160x8xf32>
    %156 = arith.addf %153, %155 : vector<160x8xf32>
    %cst_77 = arith.constant 0.000000e+00 : f32
    %157 = vector.broadcast %cst_77 : f32 to vector<160x8xf32>
    %158 = arith.maximumf %156, %157 : vector<160x8xf32>
    %c0_78 = arith.constant 0 : index
    %c0_79 = arith.constant 0 : index
    %159 = vector.load %arg6[%c0_78, %c0_79] : memref<160x8xf32, #tpu.memory_space<vmem>>, vector<160x8xf32>
    tpu.vector_store %arg6[%c0_78, %c0_79], %158 {strides = array<i32>} : memref<160x8xf32, #tpu.memory_space<vmem>>, vector<160x8xf32>,
    return
  }
  func.func @transform_0(%arg0: i32) -> (i32, i32, i32, i32) {
    %c0_i32 = arith.constant 0 : i32
    %c0_i32_0 = arith.constant 0 : i32
    %c0_i32_1 = arith.constant 0 : i32
    %c0_i32_2 = arith.constant 0 : i32
    return %arg0, %c0_i32, %c0_i32_0, %c0_i32_1 : i32, i32, i32, i32
  }
  func.func @transform_1(%arg0: i32) -> (i32, i32, i32) {
    %c0_i32 = arith.constant 0 : i32
    %c0_i32_0 = arith.constant 0 : i32
    %c0_i32_1 = arith.constant 0 : i32
    %c0_i32_2 = arith.constant 0 : i32
    return %c0_i32, %c0_i32_0, %c0_i32_1 : i32, i32, i32
  }
  func.func @transform_2(%arg0: i32) -> (i32, i32) {
    %c0_i32 = arith.constant 0 : i32
    %c0_i32_0 = arith.constant 0 : i32
    %c0_i32_1 = arith.constant 0 : i32
    return %c0_i32, %c0_i32_0 : i32, i32
  }
  func.func @transform_3(%arg0: i32) -> (i32, i32, i32) {
    %c0_i32 = arith.constant 0 : i32
    %c0_i32_0 = arith.constant 0 : i32
    %c0_i32_1 = arith.constant 0 : i32
    %c0_i32_2 = arith.constant 0 : i32
    return %c0_i32, %c0_i32_0, %c0_i32_1 : i32, i32, i32
  }
  func.func @transform_4(%arg0: i32) -> (i32, i32) {
    %c0_i32 = arith.constant 0 : i32
    %c0_i32_0 = arith.constant 0 : i32
    %c0_i32_1 = arith.constant 0 : i32
    return %c0_i32, %c0_i32_0 : i32, i32
  }
  func.func @transform_5(%arg0: i32) -> (i32, i32) {
    %c0_i32 = arith.constant 0 : i32
    %c0_i32_0 = arith.constant 0 : i32
    return %arg0, %c0_i32 : i32, i32
  }
}

</mosaic_0001>

<llo_original>
// kernel: _lambda_.1
$region0: #{_lambda_.1}
  #allocation0 [shape = 'u32[]', space=smem, size = 0x4, offset = 0x4, fixed_abs, tag = 'smem constant byte address 0x4 - core index']
  #allocation1 [shape = 'u32[72,128]{1,0:T(1,128)}', space=vmem, size = 0x9000, scoped, tag = 'internal scratch']
  #allocation2 [shape = 'f32[178,4]{1,0:T(8,128)}', space=vmem, size = 0x17000, scoped, tag = 'scratch operand']
  #allocation3 [shape = 'f32[178,8]{1,0:T(8,128)}', space=vmem, size = 0x17000, scoped, tag = 'scratch operand']
  %s0 = inlined_call_operand.vmem [shape: f32[32,2,8,8], index: 0, kind: input, shape index: {}]
  %s1 = inlined_call_operand.vmem [shape: f32[9,4,8], index: 1, kind: input, shape index: {}]
  %s2 = inlined_call_operand.vmem [shape: f32[1,8], index: 2, kind: input, shape index: {}]
  %s3 = inlined_call_operand.vmem [shape: f32[9,8,8], index: 3, kind: input, shape index: {}]
  %s4 = inlined_call_operand.vmem [shape: f32[1,8], index: 4, kind: input, shape index: {}]
  %s5 = inlined_call_operand.vmem [shape: f32[320,8], index: 5, kind: output, shape index: {}]
  %s6 = sld [smem:[#allocation0]]
  $region53: #{_lambda_.1} parent=0
    _
  %s8 = ssub.s32 1, %s6
  %s9 = scalar_select 0, %s8, %s6
  loop: start=0, step=1, limit=4
  $region2: #{_lambda_.1} parent=0 // loop_pre_header
    _
  $region3: #{_lambda_.1} parent=0 // loop_header
    %s11 = sphi 0, %s15
    %p12 = scmp.ge.s32.totalorder %s11, 4
    %s21 = sphi 0, %s23
    %s24 = sphi 0, %s21
    %s25 = sphi 0, %s24
    %s41 = sphi 0, %s25
    %s45 = sphi 0, %s45
    %s47 = sphi 0, %s45
    %s48 = sphi 0, %s47
    %s62 = sphi 0, %s48
    %s66 = sphi 0, %s66
    %s68 = sphi 0, %s66
    %s69 = sphi 0, %s68
    %s83 = sphi 0, %s69
    %s87 = sphi 0, %s87
    %s89 = sphi 0, %s87
    %s90 = sphi 0, %s89
    %s104 = sphi 0, %s90
    %s108 = sphi 0, %s108
    %s110 = sphi 0, %s108
    %s111 = sphi 0, %s110
    %s125 = sphi 0, %s111
    %s131 = sphi 0, %s133
    %s134 = sphi 0, %s131
    %s135 = sphi 0, %s134
    %s151 = sphi 0, %s135
  $region4: #{_lambda_.1} parent=0 // loop_header_branch
    %14 = sbr.rel (%p12) target = $region8
  $region5: #{_lambda_.1} parent=0 // loop_body
    %s16 = ssub.s32 %s11, 1
    %s17 = ssub.s32 %s11, 2
    %s18 = sadd.s32 %s11, 1
    %s19 = ssub.s32 %s11, %s18
    %p20 = scmp.eq.s32.totalorder %s19, 0
    %s22 = sadd.s32 %s21, 1
    %s23 = scalar_select %p20, %s21, %s22
    %p26 = pneg %p20
    %p27 = scmp.eq.s32.totalorder %s11, 1
    %p28 = por %p26, %p27
    %p29 = scmp.ne.s32.totalorder %s21, %s24
    %p30 = scmp.eq.s32.totalorder %s11, 0
    %p31 = por %p29, %p30
    %p32 = scmp.ne.s32.totalorder %s21, %s24
    %p33 = scmp.eq.s32.totalorder %s16, 1
    %p34 = por %p32, %p33
    %p35 = scmp.ne.s32.totalorder %s24, %s25
    %p36 = scmp.eq.s32.totalorder %s16, 0
    %p37 = por %p35, %p36
    %p38 = scmp.ne.s32.totalorder %s24, %s25
    %p39 = scmp.eq.s32.totalorder %s17, 1
    %p40 = por %p38, %p39
    %p42 = scmp.ne.s32.totalorder %s25, %s41
    %p43 = scmp.eq.s32.totalorder %s17, 0
    %p44 = por %p42, %p43
    %s46 = sadd.s32 %s45, 1
    %p49 = scmp.eq.s32.totalorder %s11, 1
    %p50 = scmp.ne.s32.totalorder %s45, %s47
    %p51 = scmp.eq.s32.totalorder %s11, 0
    %p52 = por %p50, %p51
    %p53 = scmp.ne.s32.totalorder %s45, %s47
    %p54 = scmp.eq.s32.totalorder %s16, 1
    %p55 = por %p53, %p54
    %p56 = scmp.ne.s32.totalorder %s47, %s48
    %p57 = scmp.eq.s32.totalorder %s16, 0
    %p58 = por %p56, %p57
    %p59 = scmp.ne.s32.totalorder %s47, %s48
    %p60 = scmp.eq.s32.totalorder %s17, 1
    %p61 = por %p59, %p60
    %p63 = scmp.ne.s32.totalorder %s48, %s62
    %p64 = scmp.eq.s32.totalorder %s17, 0
    %p65 = por %p63, %p64
    %s67 = sadd.s32 %s66, 1
    %p70 = scmp.eq.s32.totalorder %s11, 1
    %p71 = scmp.ne.s32.totalorder %s66, %s68
    %p72 = scmp.eq.s32.totalorder %s11, 0
    %p73 = por %p71, %p72
    %p74 = scmp.ne.s32.totalorder %s66, %s68
    %p75 = scmp.eq.s32.totalorder %s16, 1
    %p76 = por %p74, %p75
    %p77 = scmp.ne.s32.totalorder %s68, %s69
    %p78 = scmp.eq.s32.totalorder %s16, 0
    %p79 = por %p77, %p78
    %p80 = scmp.ne.s32.totalorder %s68, %s69
    %p81 = scmp.eq.s32.totalorder %s17, 1
    %p82 = por %p80, %p81
    %p84 = scmp.ne.s32.totalorder %s69, %s83
    %p85 = scmp.eq.s32.totalorder %s17, 0
    %p86 = por %p84, %p85
    %s88 = sadd.s32 %s87, 1
    %p91 = scmp.eq.s32.totalorder %s11, 1
    %p92 = scmp.ne.s32.totalorder %s87, %s89
    %p93 = scmp.eq.s32.totalorder %s11, 0
    %p94 = por %p92, %p93
    %p95 = scmp.ne.s32.totalorder %s87, %s89
    %p96 = scmp.eq.s32.totalorder %s16, 1
    %p97 = por %p95, %p96
    %p98 = scmp.ne.s32.totalorder %s89, %s90
    %p99 = scmp.eq.s32.totalorder %s16, 0
    %p100 = por %p98, %p99
    %p101 = scmp.ne.s32.totalorder %s89, %s90
    %p102 = scmp.eq.s32.totalorder %s17, 1
    %p103 = por %p101, %p102
    %p105 = scmp.ne.s32.totalorder %s90, %s104
    %p106 = scmp.eq.s32.totalorder %s17, 0
    %p107 = por %p105, %p106
    %s109 = sadd.s32 %s108, 1
    %p112 = scmp.eq.s32.totalorder %s11, 1
    %p113 = scmp.ne.s32.totalorder %s108, %s110
    %p114 = scmp.eq.s32.totalorder %s11, 0
    %p115 = por %p113, %p114
    %p116 = scmp.ne.s32.totalorder %s108, %s110
    %p117 = scmp.eq.s32.totalorder %s16, 1
    %p118 = por %p116, %p117
    %p119 = scmp.ne.s32.totalorder %s110, %s111
    %p120 = scmp.eq.s32.totalorder %s16, 0
    %p121 = por %p119, %p120
    %p122 = scmp.ne.s32.totalorder %s110, %s111
    %p123 = scmp.eq.s32.totalorder %s17, 1
    %p124 = por %p122, %p123
    %p126 = scmp.ne.s32.totalorder %s111, %s125
    %p127 = scmp.eq.s32.totalorder %s17, 0
    %p128 = por %p126, %p127
    %s129 = ssub.s32 %s11, %s18
    %p130 = scmp.eq.s32.totalorder %s129, 0
    %s132 = sadd.s32 %s131, 1
    %s133 = scalar_select %p130, %s131, %s132
    %p136 = pneg %p130
    %p137 = scmp.eq.s32.totalorder %s11, 1
    %p138 = por %p136, %p137
    %p139 = scmp.ne.s32.totalorder %s131, %s134
    %p140 = scmp.eq.s32.totalorder %s11, 0
    %p141 = por %p139, %p140
    %p142 = scmp.ne.s32.totalorder %s131, %s134
    %p143 = scmp.eq.s32.totalorder %s16, 1
    %p144 = por %p142, %p143
    %p145 = scmp.ne.s32.totalorder %s134, %s135
    %p146 = scmp.eq.s32.totalorder %s16, 0
    %p147 = por %p145, %p146
    %p148 = scmp.ne.s32.totalorder %s134, %s135
    %p149 = scmp.eq.s32.totalorder %s17, 1
    %p150 = por %p148, %p149
    %p152 = scmp.ne.s32.totalorder %s135, %s151
    %p153 = scmp.eq.s32.totalorder %s17, 0
    %p154 = por %p152, %p153
    %p155 = scmp.le.s32.totalorder 1, %s11
    %p156 = scmp.lt.s32.totalorder %s11, 3
    %p157 = pnand %p155, %p156
    %p158 = pneg %p157
    // Predicated region
    $region9: #{_lambda_.1} parent=5 // pred_check
      _
    $region10: #{_lambda_.1} parent=5 // pred_check_branch
      %160 = sbr.rel (%p157) target = $region12
    $region11: #{_lambda_.1} parent=5 // pred_region
      %s161 = ssub.s32 %s11, 1
      // Predicated region
      $region13: #{_lambda_.1} parent=11 // pred_check
        %p162 = pneg %p58
      $region14: #{_lambda_.1} parent=11 // pred_check_branch
        %164 = sbr.rel (%p162) target = $region16
      $region15: #{_lambda_.1} parent=11 // pred_region
        _
      $region16: #{_lambda_.1} parent=11 // pred_fallthru
        _
      // Predicated region
      $region17: #{_lambda_.1} parent=11 // pred_check
        %p165 = pneg %p79
      $region18: #{_lambda_.1} parent=11 // pred_check_branch
        %167 = sbr.rel (%p165) target = $region20
      $region19: #{_lambda_.1} parent=11 // pred_region
        _
      $region20: #{_lambda_.1} parent=11 // pred_fallthru
        _
      // Predicated region
      $region21: #{_lambda_.1} parent=11 // pred_check
        %p168 = pneg %p100
      $region22: #{_lambda_.1} parent=11 // pred_check_branch
        %170 = sbr.rel (%p168) target = $region24
      $region23: #{_lambda_.1} parent=11 // pred_region
        _
      $region24: #{_lambda_.1} parent=11 // pred_fallthru
        _
      // Predicated region
      $region25: #{_lambda_.1} parent=11 // pred_check
        %p171 = pneg %p121
      $region26: #{_lambda_.1} parent=11 // pred_check_branch
        %173 = sbr.rel (%p171) target = $region28
      $region27: #{_lambda_.1} parent=11 // pred_region
        _
      $region28: #{_lambda_.1} parent=11 // pred_fallthru
        _
    $region12: #{_lambda_.1} parent=5 // pred_fallthru
      _
    %p174 = scmp.lt.s32.totalorder %s11, 2
    // Predicated region
    $region29: #{_lambda_.1} parent=5 // pred_check
      %p175 = pneg %p174
    $region30: #{_lambda_.1} parent=5 // pred_check_branch
      %177 = sbr.rel (%p175) target = $region32
    $region31: #{_lambda_.1} parent=5 // pred_region
      // Predicated region
      $region33: #{_lambda_.1} parent=31 // pred_check
        %p178 = pneg %p31
      $region34: #{_lambda_.1} parent=31 // pred_check_branch
        %180 = sbr.rel (%p178) target = $region36
      $region35: #{_lambda_.1} parent=31 // pred_region
        %s181 = smul.u32 16, %s11
        %p182 = scmp.lt.s32.totalorder %s181, 31
        %s183 = scalar_select %p182, %s181, 31
        %s184 = smul.addr %s183, 2
        %s185 = smul.addr %s184, 8
        %s186 = scalar_lea.vmem %s0, %s185
        %s187 = smul.u32 16, %s11
      $region36: #{_lambda_.1} parent=31 // pred_fallthru
        _
    $region32: #{_lambda_.1} parent=5 // pred_fallthru
      _
    %p188 = scmp.le.s32.totalorder 1, %s11
    %p189 = scmp.lt.s32.totalorder %s11, 3
    %p190 = pnand %p188, %p189
    %p191 = pneg %p190
    // Predicated region
    $region37: #{_lambda_.1} parent=5 // pred_check
      _
    $region38: #{_lambda_.1} parent=5 // pred_check_branch
      %193 = sbr.rel (%p190) target = $region40
    $region39: #{_lambda_.1} parent=5 // pred_region
      %s194 = ssub.s32 %s11, 1
      %s195 = smul.u32 16, %s16
      %p196 = scmp.lt.s32.totalorder %s195, 31
      %s197 = scalar_select %p196, %s195, 31
      %s198 = smul.addr %s197, 2
      %s199 = smul.addr %s198, 8
      %s200 = scalar_lea.vmem %s0, %s199
      %p201 = pneg %p37
      %p202 = pneg %p34
      %p203 = pneg %p58
      %p204 = pneg %p55
      %p205 = pneg %p79
      %p206 = pneg %p76
      %p207 = pneg %p100
      %p208 = pneg %p97
      %p209 = pneg %p121
      %p210 = pneg %p118
      %p211 = pneg %p147
      %p212 = pneg %p144
      %s213 = smul.u32 20, %s16
      %p214 = scmp.lt.s32.totalorder %s213, 39
      %s215 = scalar_select %p214, %s213, 39
      %s216 = smul.addr %s215, 8
      %s217 = scalar_lea.vmem %s5, %s216
      %s218 = smul.u32 16, %s16
      %p219 = scmp.lt.s32.totalorder %s218, 31
      %s220 = scalar_select %p219, %s218, 31
      %s221 = smul.addr %s220, 2
      %s222 = smul.addr %s221, 8
      %s223 = scalar_lea.vmem %s0, %s222
      %s224 = smul.u32 16, %s16
      %s225 = smul.u32 20, %s16
      %p226 = scmp.lt.s32.totalorder %s225, 39
      %s227 = scalar_select %p226, %s225, 39
      %s228 = smul.addr %s227, 8
      %s229 = scalar_lea.vmem %s5, %s228
      %s230 = smul.u32 20, %s16
      %vm231 = vcmask 31744
      %232 = vst.msk [vmem:[#allocation2] sm:$0xff] %vm231, 0.0
      %vm233 = vcmask 24576
      %234 = vst.msk [vmem:[#allocation2 + $0x8] sm:$0x1] %vm233, 0.0
      %vm235 = vcmask 64512
      %236 = vst.msk [vmem:[#allocation3] sm:$0xff] %vm235, 0.0
      %vm237 = vcmask 57344
      %238 = vst.msk [vmem:[#allocation3 + $0x8] sm:$0x1] %vm237, 0.0
      %239 = vst.msk [vmem:[#allocation3 + $0xa9] sm:$0xff] %vm235, 0.0
      %240 = vst.msk [vmem:[#allocation3 + $0xb1] sm:$0x1] %vm237, 0.0
      %241 = vst.msk [vmem:[#allocation2 + $0x49] sm:$0xff] %vm231, 0.0
      %242 = vst.msk [vmem:[#allocation2 + $0x51] sm:$0xff] %vm231, 0.0
      %243 = vst.msk [vmem:[#allocation2 + $0x99] sm:$0xff] %vm231, 0.0
      %244 = vst.msk [vmem:[#allocation2 + $0xa1] sm:$0xff] %vm231, 0.0
      %245 = vst.msk [vmem:[#allocation2 + $0xa9] sm:$0xff] %vm231, 0.0
      %246 = vst.msk [vmem:[#allocation2 + $0xb1] sm:$0x1] %vm233, 0.0
      %v247 = vld [vmem:[%s223] sm:$0xff]
      %v248 = vld [vmem:[%s223 + $0x8] sm:$0xff]
      %v249 = vld [vmem:[%s223 + $0x10] sm:$0xff]
      %v250 = vld [vmem:[%s223 + $0x18] sm:$0xff]
      %v251 = vld [vmem:[%s223 + $0x20] sm:$0xff]
      %v252 = vld [vmem:[%s223 + $0x28] sm:$0xff]
      %v253 = vld [vmem:[%s223 + $0x30] sm:$0xff]
      %v254 = vld [vmem:[%s223 + $0x38] sm:$0xff]
      %v255 = vld [vmem:[%s223 + $0x40] sm:$0xff]
      %v256 = vld [vmem:[%s223 + $0x48] sm:$0xff]
      %v257 = vld [vmem:[%s223 + $0x50] sm:$0xff]
      %v258 = vld [vmem:[%s223 + $0x58] sm:$0xff]
      %v259 = vld [vmem:[%s223 + $0x60] sm:$0xff]
      %v260 = vld [vmem:[%s223 + $0x68] sm:$0xff]
      %v261 = vld [vmem:[%s223 + $0x70] sm:$0xff]
      %v262 = vld [vmem:[%s223 + $0x78] sm:$0xff]
      %v263 = vld [vmem:[%s223 + $0x80] sm:$0xff]
      %v264 = vld [vmem:[%s223 + $0x88] sm:$0xff]
      %v265 = vld [vmem:[%s223 + $0x90] sm:$0xff]
      %v266 = vld [vmem:[%s223 + $0x98] sm:$0xff]
      %v267 = vld [vmem:[%s223 + $0xa0] sm:$0xff]
      %v268 = vld [vmem:[%s223 + $0xa8] sm:$0xff]
      %v269 = vld [vmem:[%s223 + $0xb0] sm:$0xff]
      %v270 = vld [vmem:[%s223 + $0xb8] sm:$0xff]
      %v271 = vld [vmem:[%s223 + $0xc0] sm:$0xff]
      %v272 = vld [vmem:[%s223 + $0xc8] sm:$0xff]
      %v273 = vld [vmem:[%s223 + $0xd0] sm:$0xff]
      %v274 = vld [vmem:[%s223 + $0xd8] sm:$0xff]
      %v275 = vld [vmem:[%s223 + $0xe0] sm:$0xff]
      %v276 = vld [vmem:[%s223 + $0xe8] sm:$0xff]
      %v277 = vld [vmem:[%s223 + $0xf0] sm:$0xff]
      %v278 = vld [vmem:[%s223 + $0xf8] sm:$0xff]
      %v279 = vmax.f32 %v247, %v248
      %v280 = vmax.f32 %v249, %v250
      %v281 = vmax.f32 %v251, %v252
      %v282 = vmax.f32 %v253, %v254
      %v283 = vmax.f32 %v255, %v256
      %v284 = vmax.f32 %v257, %v258
      %v285 = vmax.f32 %v259, %v260
      %v286 = vmax.f32 %v261, %v262
      %v287 = vmax.f32 %v263, %v264
      %v288 = vmax.f32 %v265, %v266
      %v289 = vmax.f32 %v267, %v268
      %v290 = vmax.f32 %v269, %v270
      %v291 = vmax.f32 %v271, %v272
      %v292 = vmax.f32 %v273, %v274
      %v293 = vmax.f32 %v275, %v276
      %v294 = vmax.f32 %v277, %v278
      %311 = vrot.lane.b32.xlu0 %v279, 124
      %v312 = vpop.permute.xlu0 %311
      %313 = vrot.lane.b32.xlu0 %v280, 124
      %v314 = vpop.permute.xlu0 %313
      %315 = vrot.lane.b32.xlu0 %v281, 124
      %v316 = vpop.permute.xlu0 %315
      %317 = vrot.lane.b32.xlu0 %v282, 124
      %v318 = vpop.permute.xlu0 %317
      %319 = vrot.lane.b32.xlu0 %v283, 124
      %v320 = vpop.permute.xlu0 %319
      %321 = vrot.lane.b32.xlu0 %v284, 124
      %v322 = vpop.permute.xlu0 %321
      %323 = vrot.lane.b32.xlu0 %v285, 124
      %v324 = vpop.permute.xlu0 %323
      %325 = vrot.lane.b32.xlu0 %v286, 124
      %v326 = vpop.permute.xlu0 %325
      %327 = vrot.lane.b32.xlu0 %v287, 124
      %v328 = vpop.permute.xlu0 %327
      %329 = vrot.lane.b32.xlu0 %v288, 124
      %v330 = vpop.permute.xlu0 %329
      %331 = vrot.lane.b32.xlu0 %v289, 124
      %v332 = vpop.permute.xlu0 %331
      %333 = vrot.lane.b32.xlu0 %v290, 124
      %v334 = vpop.permute.xlu0 %333
      %335 = vrot.lane.b32.xlu0 %v291, 124
      %v336 = vpop.permute.xlu0 %335
      %337 = vrot.lane.b32.xlu0 %v292, 124
      %v338 = vpop.permute.xlu0 %337
      %339 = vrot.lane.b32.xlu0 %v293, 124
      %v340 = vpop.permute.xlu0 %339
      %341 = vrot.lane.b32.xlu0 %v294, 124
      %v342 = vpop.permute.xlu0 %341
      %v359 = vmax.f32 %v279, %v312
      %v360 = vmax.f32 %v280, %v314
      %v361 = vmax.f32 %v281, %v316
      %v362 = vmax.f32 %v282, %v318
      %v363 = vmax.f32 %v283, %v320
      %v364 = vmax.f32 %v284, %v322
      %v365 = vmax.f32 %v285, %v324
      %v366 = vmax.f32 %v286, %v326
      %v367 = vmax.f32 %v287, %v328
      %v368 = vmax.f32 %v288, %v330
      %v369 = vmax.f32 %v289, %v332
      %v370 = vmax.f32 %v290, %v334
      %v371 = vmax.f32 %v291, %v336
      %v372 = vmax.f32 %v292, %v338
      %v373 = vmax.f32 %v293, %v340
      %v374 = vmax.f32 %v294, %v342
      %375 = vst.msk [vmem:[#allocation2 + $0x9] sm:$0xff] %vm231, %v359
      %376 = vst.msk [vmem:[#allocation2 + $0x11] sm:$0xff] %vm231, %v360
      %377 = vst.msk [vmem:[#allocation2 + $0x19] sm:$0xff] %vm231, %v361
      %378 = vst.msk [vmem:[#allocation2 + $0x21] sm:$0xff] %vm231, %v362
      %379 = vst.msk [vmem:[#allocation2 + $0x29] sm:$0xff] %vm231, %v363
      %380 = vst.msk [vmem:[#allocation2 + $0x31] sm:$0xff] %vm231, %v364
      %381 = vst.msk [vmem:[#allocation2 + $0x39] sm:$0xff] %vm231, %v365
      %382 = vst.msk [vmem:[#allocation2 + $0x41] sm:$0xff] %vm231, %v366
      %383 = vst.msk [vmem:[#allocation2 + $0x59] sm:$0xff] %vm231, %v367
      %384 = vst.msk [vmem:[#allocation2 + $0x61] sm:$0xff] %vm231, %v368
      %385 = vst.msk [vmem:[#allocation2 + $0x69] sm:$0xff] %vm231, %v369
      %386 = vst.msk [vmem:[#allocation2 + $0x71] sm:$0xff] %vm231, %v370
      %387 = vst.msk [vmem:[#allocation2 + $0x79] sm:$0xff] %vm231, %v371
      %388 = vst.msk [vmem:[#allocation2 + $0x81] sm:$0xff] %vm231, %v372
      %389 = vst.msk [vmem:[#allocation2 + $0x89] sm:$0xff] %vm231, %v373
      %390 = vst.msk [vmem:[#allocation2 + $0x91] sm:$0xff] %vm231, %v374
      %v391 = vlaneseq
      %v392 = vshrl.u32 %v391, 7
      %v393 = vadd.s32 %v392, 8
      %v394 = vadd.s32 %v392, 16
      %v395 = vadd.s32 %v392, 24
      %v396 = vadd.s32 %v392, 32
      %v397 = vadd.s32 %v392, 40
      %v398 = vadd.s32 %v392, 48
      %v399 = vadd.s32 %v392, 56
      %v400 = vadd.s32 %v392, 64
      %v401 = vadd.s32 %v392, 72
      %v402 = vadd.s32 %v392, 80
      %v403 = vadd.s32 %v392, 88
      %v404 = vadd.s32 %v392, 96
      %v405 = vadd.s32 %v392, 104
      %v406 = vadd.s32 %v392, 112
      %v407 = vadd.s32 %v392, 120
      %v408 = vadd.s32 %v392, 128
      %v409 = vadd.s32 %v392, 136
      %v410 = vadd.s32 %v392, 144
      %v411 = vadd.s32 %v392, 152
      %v412 = vand.u32 %v392, 7
      %v413 = vand.u32 %v393, 7
      %v414 = vand.u32 %v394, 7
      %v415 = vand.u32 %v395, 7
      %v416 = vand.u32 %v396, 7
      %v417 = vand.u32 %v397, 7
      %v418 = vand.u32 %v398, 7
      %v419 = vand.u32 %v399, 7
      %v420 = vand.u32 %v400, 7
      %v421 = vand.u32 %v401, 7
      %v422 = vand.u32 %v402, 7
      %v423 = vand.u32 %v403, 7
      %v424 = vand.u32 %v404, 7
      %v425 = vand.u32 %v405, 7
      %v426 = vand.u32 %v406, 7
      %v427 = vand.u32 %v407, 7
      %v428 = vand.u32 %v408, 7
      %v429 = vand.u32 %v409, 7
      %v430 = vand.u32 %v410, 7
      %v431 = vand.u32 %v411, 7
      %vm432 = vcmp.ge.s32.totalorder %v412, 1
      %vm433 = vcmp.ge.s32.totalorder %v413, 1
      %vm434 = vcmp.ge.s32.totalorder %v414, 1
      %vm435 = vcmp.ge.s32.totalorder %v415, 1
      %vm436 = vcmp.ge.s32.totalorder %v416, 1
      %vm437 = vcmp.ge.s32.totalorder %v417, 1
      %vm438 = vcmp.ge.s32.totalorder %v418, 1
      %vm439 = vcmp.ge.s32.totalorder %v419, 1
      %vm440 = vcmp.ge.s32.totalorder %v420, 1
      %vm441 = vcmp.ge.s32.totalorder %v421, 1
      %vm442 = vcmp.ge.s32.totalorder %v422, 1
      %vm443 = vcmp.ge.s32.totalorder %v423, 1
      %vm444 = vcmp.ge.s32.totalorder %v424, 1
      %vm445 = vcmp.ge.s32.totalorder %v425, 1
      %vm446 = vcmp.ge.s32.totalorder %v426, 1
      %vm447 = vcmp.ge.s32.totalorder %v427, 1
      %vm448 = vcmp.ge.s32.totalorder %v428, 1
      %vm449 = vcmp.ge.s32.totalorder %v429, 1
      %vm450 = vcmp.ge.s32.totalorder %v430, 1
      %vm451 = vcmp.ge.s32.totalorder %v431, 1
      %v452 = vsel %vm432, 1, 0
      %v453 = vsel %vm433, 1, 0
      %v454 = vsel %vm434, 1, 0
      %v455 = vsel %vm435, 1, 0
      %v456 = vsel %vm436, 1, 0
      %v457 = vsel %vm437, 1, 0
      %v458 = vsel %vm438, 1, 0
      %v459 = vsel %vm439, 1, 0
      %v460 = vsel %vm440, 1, 0
      %v461 = vsel %vm441, 1, 0
      %v462 = vsel %vm442, 1, 0
      %v463 = vsel %vm443, 1, 0
      %v464 = vsel %vm444, 1, 0
      %v465 = vsel %vm445, 1, 0
      %v466 = vsel %vm446, 1, 0
      %v467 = vsel %vm447, 1, 0
      %v468 = vsel %vm448, 1, 0
      %v469 = vsel %vm449, 1, 0
      %v470 = vsel %vm450, 1, 0
      %v471 = vsel %vm451, 1, 0
      %v472 = vcvt.s32.f32 %v452
      %v473 = vcvt.s32.f32 %v453
      %v474 = vcvt.s32.f32 %v454
      %v475 = vcvt.s32.f32 %v455
      %v476 = vcvt.s32.f32 %v456
      %v477 = vcvt.s32.f32 %v457
      %v478 = vcvt.s32.f32 %v458
      %v479 = vcvt.s32.f32 %v459
      %v480 = vcvt.s32.f32 %v460
      %v481 = vcvt.s32.f32 %v461
      %v482 = vcvt.s32.f32 %v462
      %v483 = vcvt.s32.f32 %v463
      %v484 = vcvt.s32.f32 %v464
      %v485 = vcvt.s32.f32 %v465
      %v486 = vcvt.s32.f32 %v466
      %v487 = vcvt.s32.f32 %v467
      %v488 = vcvt.s32.f32 %v468
      %v489 = vcvt.s32.f32 %v469
      %v490 = vcvt.s32.f32 %v470
      %v491 = vcvt.s32.f32 %v471
      %vm492 = vcmp.le.s32.totalorder %v412, 6
      %vm493 = vcmp.le.s32.totalorder %v413, 6
      %vm494 = vcmp.le.s32.totalorder %v414, 6
      %vm495 = vcmp.le.s32.totalorder %v415, 6
      %vm496 = vcmp.le.s32.totalorder %v416, 6
      %vm497 = vcmp.le.s32.totalorder %v417, 6
      %vm498 = vcmp.le.s32.totalorder %v418, 6
      %vm499 = vcmp.le.s32.totalorder %v419, 6
      %vm500 = vcmp.le.s32.totalorder %v420, 6
      %vm501 = vcmp.le.s32.totalorder %v421, 6
      %vm502 = vcmp.le.s32.totalorder %v422, 6
      %vm503 = vcmp.le.s32.totalorder %v423, 6
      %vm504 = vcmp.le.s32.totalorder %v424, 6
      %vm505 = vcmp.le.s32.totalorder %v425, 6
      %vm506 = vcmp.le.s32.totalorder %v426, 6
      %vm507 = vcmp.le.s32.totalorder %v427, 6
      %vm508 = vcmp.le.s32.totalorder %v428, 6
      %vm509 = vcmp.le.s32.totalorder %v429, 6
      %vm510 = vcmp.le.s32.totalorder %v430, 6
      %vm511 = vcmp.le.s32.totalorder %v431, 6
      %v512 = vsel %vm492, 1, 0
      %v513 = vsel %vm493, 1, 0
      %v514 = vsel %vm494, 1, 0
      %v515 = vsel %vm495, 1, 0
      %v516 = vsel %vm496, 1, 0
      %v517 = vsel %vm497, 1, 0
      %v518 = vsel %vm498, 1, 0
      %v519 = vsel %vm499, 1, 0
      %v520 = vsel %vm500, 1, 0
      %v521 = vsel %vm501, 1, 0
      %v522 = vsel %vm502, 1, 0
      %v523 = vsel %vm503, 1, 0
      %v524 = vsel %vm504, 1, 0
      %v525 = vsel %vm505, 1, 0
      %v526 = vsel %vm506, 1, 0
      %v527 = vsel %vm507, 1, 0
      %v528 = vsel %vm508, 1, 0
      %v529 = vsel %vm509, 1, 0
      %v530 = vsel %vm510, 1, 0
      %v531 = vsel %vm511, 1, 0
      %v532 = vcvt.s32.f32 %v512
      %v533 = vcvt.s32.f32 %v513
      %v534 = vcvt.s32.f32 %v514
      %v535 = vcvt.s32.f32 %v515
      %v536 = vcvt.s32.f32 %v516
      %v537 = vcvt.s32.f32 %v517
      %v538 = vcvt.s32.f32 %v518
      %v539 = vcvt.s32.f32 %v519
      %v540 = vcvt.s32.f32 %v520
      %v541 = vcvt.s32.f32 %v521
      %v542 = vcvt.s32.f32 %v522
      %v543 = vcvt.s32.f32 %v523
      %v544 = vcvt.s32.f32 %v524
      %v545 = vcvt.s32.f32 %v525
      %v546 = vcvt.s32.f32 %v526
      %v547 = vcvt.s32.f32 %v527
      %v548 = vcvt.s32.f32 %v528
      %v549 = vcvt.s32.f32 %v529
      %v550 = vcvt.s32.f32 %v530
      %v551 = vcvt.s32.f32 %v531
      %vm552 = vcmp.ge.s32.totalorder %v392, 0
      %vm553 = vcmp.ge.s32.totalorder %v393, 0
      %vm554 = vcmp.ge.s32.totalorder %v394, 0
      %vm555 = vcmp.ge.s32.totalorder %v395, 0
      %vm556 = vcmp.ge.s32.totalorder %v396, 0
      %vm557 = vcmp.ge.s32.totalorder %v397, 0
      %vm558 = vcmp.ge.s32.totalorder %v398, 0
      %vm559 = vcmp.ge.s32.totalorder %v399, 0
      %vm560 = vcmp.ge.s32.totalorder %v400, 0
      %vm561 = vcmp.ge.s32.totalorder %v401, 0
      %vm562 = vcmp.ge.s32.totalorder %v402, 0
      %vm563 = vcmp.ge.s32.totalorder %v403, 0
      %vm564 = vcmp.ge.s32.totalorder %v404, 0
      %vm565 = vcmp.ge.s32.totalorder %v405, 0
      %vm566 = vcmp.ge.s32.totalorder %v406, 0
      %vm567 = vcmp.ge.s32.totalorder %v407, 0
      %vm568 = vcmp.ge.s32.totalorder %v408, 0
      %vm569 = vcmp.ge.s32.totalorder %v409, 0
      %vm570 = vcmp.ge.s32.totalorder %v410, 0
      %vm571 = vcmp.ge.s32.totalorder %v411, 0
      %vm572 = vcmp.lt.s32.totalorder %v392, 64
      %vm573 = vcmp.lt.s32.totalorder %v393, 64
      %vm574 = vcmp.lt.s32.totalorder %v394, 64
      %vm575 = vcmp.lt.s32.totalorder %v395, 64
      %vm576 = vcmp.lt.s32.totalorder %v396, 64
      %vm577 = vcmp.lt.s32.totalorder %v397, 64
      %vm578 = vcmp.lt.s32.totalorder %v398, 64
      %vm579 = vcmp.lt.s32.totalorder %v399, 64
      %vm580 = vcmp.lt.s32.totalorder %v400, 64
      %vm581 = vcmp.lt.s32.totalorder %v401, 64
      %vm582 = vcmp.lt.s32.totalorder %v402, 64
      %vm583 = vcmp.lt.s32.totalorder %v403, 64
      %vm584 = vcmp.lt.s32.totalorder %v404, 64
      %vm585 = vcmp.lt.s32.totalorder %v405, 64
      %vm586 = vcmp.lt.s32.totalorder %v406, 64
      %vm587 = vcmp.lt.s32.totalorder %v407, 64
      %vm588 = vcmp.lt.s32.totalorder %v408, 64
      %vm589 = vcmp.lt.s32.totalorder %v409, 64
      %vm590 = vcmp.lt.s32.totalorder %v410, 64
      %vm591 = vcmp.lt.s32.totalorder %v411, 64
      %vm592 = vmand %vm552, %vm572
      %vm593 = vmand %vm553, %vm573
      %vm594 = vmand %vm554, %vm574
      %vm595 = vmand %vm555, %vm575
      %vm596 = vmand %vm556, %vm576
      %vm597 = vmand %vm557, %vm577
      %vm598 = vmand %vm558, %vm578
      %vm599 = vmand %vm559, %vm579
      %vm600 = vmand %vm560, %vm580
      %vm601 = vmand %vm561, %vm581
      %vm602 = vmand %vm562, %vm582
      %vm603 = vmand %vm563, %vm583
      %vm604 = vmand %vm564, %vm584
      %vm605 = vmand %vm565, %vm585
      %vm606 = vmand %vm566, %vm586
      %vm607 = vmand %vm567, %vm587
      %vm608 = vmand %vm568, %vm588
      %vm609 = vmand %vm569, %vm589
      %vm610 = vmand %vm570, %vm590
      %vm611 = vmand %vm571, %vm591
      %vm612 = vcmp.ge.s32.totalorder %v392, 80
      %vm613 = vcmp.ge.s32.totalorder %v393, 80
      %vm614 = vcmp.ge.s32.totalorder %v394, 80
      %vm615 = vcmp.ge.s32.totalorder %v395, 80
      %vm616 = vcmp.ge.s32.totalorder %v396, 80
      %vm617 = vcmp.ge.s32.totalorder %v397, 80
      %vm618 = vcmp.ge.s32.totalorder %v398, 80
      %vm619 = vcmp.ge.s32.totalorder %v399, 80
      %vm620 = vcmp.ge.s32.totalorder %v400, 80
      %vm621 = vcmp.ge.s32.totalorder %v401, 80
      %vm622 = vcmp.ge.s32.totalorder %v402, 80
      %vm623 = vcmp.ge.s32.totalorder %v403, 80
      %vm624 = vcmp.ge.s32.totalorder %v404, 80
      %vm625 = vcmp.ge.s32.totalorder %v405, 80
      %vm626 = vcmp.ge.s32.totalorder %v406, 80
      %vm627 = vcmp.ge.s32.totalorder %v407, 80
      %vm628 = vcmp.ge.s32.totalorder %v408, 80
      %vm629 = vcmp.ge.s32.totalorder %v409, 80
      %vm630 = vcmp.ge.s32.totalorder %v410, 80
      %vm631 = vcmp.ge.s32.totalorder %v411, 80
      %vm632 = vcmp.lt.s32.totalorder %v392, 144
      %vm633 = vcmp.lt.s32.totalorder %v393, 144
      %vm634 = vcmp.lt.s32.totalorder %v394, 144
      %vm635 = vcmp.lt.s32.totalorder %v395, 144
      %vm636 = vcmp.lt.s32.totalorder %v396, 144
      %vm637 = vcmp.lt.s32.totalorder %v397, 144
      %vm638 = vcmp.lt.s32.totalorder %v398, 144
      %vm639 = vcmp.lt.s32.totalorder %v399, 144
      %vm640 = vcmp.lt.s32.totalorder %v400, 144
      %vm641 = vcmp.lt.s32.totalorder %v401, 144
      %vm642 = vcmp.lt.s32.totalorder %v402, 144
      %vm643 = vcmp.lt.s32.totalorder %v403, 144
      %vm644 = vcmp.lt.s32.totalorder %v404, 144
      %vm645 = vcmp.lt.s32.totalorder %v405, 144
      %vm646 = vcmp.lt.s32.totalorder %v406, 144
      %vm647 = vcmp.lt.s32.totalorder %v407, 144
      %vm648 = vcmp.lt.s32.totalorder %v408, 144
      %vm649 = vcmp.lt.s32.totalorder %v409, 144
      %vm650 = vcmp.lt.s32.totalorder %v410, 144
      %vm651 = vcmp.lt.s32.totalorder %v411, 144
      %vm652 = vmand %vm612, %vm632
      %vm653 = vmand %vm613, %vm633
      %vm654 = vmand %vm614, %vm634
      %vm655 = vmand %vm615, %vm635
      %vm656 = vmand %vm616, %vm636
      %vm657 = vmand %vm617, %vm637
      %vm658 = vmand %vm618, %vm638
      %vm659 = vmand %vm619, %vm639
      %vm660 = vmand %vm620, %vm640
      %vm661 = vmand %vm621, %vm641
      %vm662 = vmand %vm622, %vm642
      %vm663 = vmand %vm623, %vm643
      %vm664 = vmand %vm624, %vm644
      %vm665 = vmand %vm625, %vm645
      %vm666 = vmand %vm626, %vm646
      %vm667 = vmand %vm627, %vm647
      %vm668 = vmand %vm628, %vm648
      %vm669 = vmand %vm629, %vm649
      %vm670 = vmand %vm630, %vm650
      %vm671 = vmand %vm631, %vm651
      %vm672 = vmor %vm592, %vm652
      %vm673 = vmor %vm593, %vm653
      %vm674 = vmor %vm594, %vm654
      %vm675 = vmor %vm595, %vm655
      %vm676 = vmor %vm596, %vm656
      %vm677 = vmor %vm597, %vm657
      %vm678 = vmor %vm598, %vm658
      %vm679 = vmor %vm599, %vm659
      %vm680 = vmor %vm600, %vm660
      %vm681 = vmor %vm601, %vm661
      %vm682 = vmor %vm602, %vm662
      %vm683 = vmor %vm603, %vm663
      %vm684 = vmor %vm604, %vm664
      %vm685 = vmor %vm605, %vm665
      %vm686 = vmor %vm606, %vm666
      %vm687 = vmor %vm607, %vm667
      %vm688 = vmor %vm608, %vm668
      %vm689 = vmor %vm609, %vm669
      %vm690 = vmor %vm610, %vm670
      %vm691 = vmor %vm611, %vm671
      %v692 = vld [vmem:[%s1] sm:$0xf]
      %v693 = vld [vmem:[%s1 + $0x4] sm:$0xf]
      %v694 = vld [vmem:[%s1 + $0x8] sm:$0xf]
      %v695 = vld [vmem:[%s1 + $0xc] sm:$0xf]
      %v696 = vld [vmem:[%s1 + $0x10] sm:$0xf]
      %v697 = vld [vmem:[%s1 + $0x14] sm:$0xf]
      %v698 = vld [vmem:[%s1 + $0x18] sm:$0xf]
      %v699 = vld [vmem:[%s1 + $0x1c] sm:$0xf]
      %v700 = vld [vmem:[%s1 + $0x20] sm:$0xf]
      %v701 = vld [vmem:[#allocation2 + $0x1] sm:$0xff]
      %v702 = vld [vmem:[#allocation2 + $0x9] sm:$0xff]
      %v703 = vld [vmem:[#allocation2 + $0x11] sm:$0xff]
      %v704 = vld [vmem:[#allocation2 + $0x19] sm:$0xff]
      %v705 = vld [vmem:[#allocation2 + $0x21] sm:$0xff]
      %v706 = vld [vmem:[#allocation2 + $0x29] sm:$0xff]
      %v707 = vld [vmem:[#allocation2 + $0x31] sm:$0xff]
      %v708 = vld [vmem:[#allocation2 + $0x39] sm:$0xff]
      %v709 = vld [vmem:[#allocation2 + $0x41] sm:$0xff]
      %v710 = vld [vmem:[#allocation2 + $0x49] sm:$0xff]
      %v711 = vld [vmem:[#allocation2 + $0x51] sm:$0xff]
      %v712 = vld [vmem:[#allocation2 + $0x59] sm:$0xff]
      %v713 = vld [vmem:[#allocation2 + $0x61] sm:$0xff]
      %v714 = vld [vmem:[#allocation2 + $0x69] sm:$0xff]
      %v715 = vld [vmem:[#allocation2 + $0x71] sm:$0xff]
      %v716 = vld [vmem:[#allocation2 + $0x79] sm:$0xff]
      %v717 = vld [vmem:[#allocation2 + $0x81] sm:$0xff]
      %v718 = vld [vmem:[#allocation2 + $0x89] sm:$0xff]
      %v719 = vld [vmem:[#allocation2 + $0x91] sm:$0xff]
      %v720 = vld [vmem:[#allocation2 + $0x99] sm:$0xff]
      %v721 = vld [vmem:[#allocation2 + $0xa1] sm:$0xff]
      %v723 = vsel %vm231, %v702, 0
      %v726 = vsel %vm231, %v703, 0
      %v729 = vsel %vm231, %v704, 0
      %v732 = vsel %vm231, %v705, 0
      %v735 = vsel %vm231, %v706, 0
      %v738 = vsel %vm231, %v707, 0
      %v741 = vsel %vm231, %v708, 0
      %v744 = vsel %vm231, %v709, 0
      %v747 = vsel %vm231, %v710, 0
      %v750 = vsel %vm231, %v711, 0
      %v753 = vsel %vm231, %v712, 0
      %v756 = vsel %vm231, %v713, 0
      %v759 = vsel %vm231, %v714, 0
      %v762 = vsel %vm231, %v715, 0
      %v765 = vsel %vm231, %v716, 0
      %v768 = vsel %vm231, %v717, 0
      %v771 = vsel %vm231, %v718, 0
      %v774 = vsel %vm231, %v719, 0
      %v777 = vsel %vm231, %v720, 0
      %v780 = vsel %vm231, %v721, 0
      %vm782 = vcmask 1043456
      %v784 = vsel %vm782, %v696, 0
      %786 = vmatpush.msra.mxu0 0.0
      %787 = vmatpush.msra.mxu0 0.0
      %788 = vmatpush.msra.mxu0 0.0
      %789 = vmatpush.msra.mxu0 0.0
      %790 = vmatpush.msra.mxu0 0.0
      %791 = vmatpush.msra.mxu0 0.0
      %792 = vmatpush.msra.mxu0 0.0
      %793 = vmatpush.msra.mxu0 0.0
      %794 = vmatpush.msra.mxu0 0.0
      %795 = vmatpush.msra.mxu0 0.0
      %796 = vmatpush.msra.mxu0 0.0
      %797 = vmatpush.msra.mxu0 0.0
      %798 = vmatpush.msra.mxu0 0.0
      %799 = vmatpush.msra.mxu0 0.0
      %800 = vmatpush.msra.mxu0 0.0
      %801 = vmatpush.msra.mxu0 %v784
      %802 = vmatmul.f32.gmra.mxu0 %v723
      %v803 = vpop.f32.mrf.mxu0
      %v804 = vadd.f32 0.0, %v803
      %805 = vmatmul.f32.gmra.mxu0 %v726
      %v806 = vpop.f32.mrf.mxu0
      %v807 = vadd.f32 0.0, %v806
      %808 = vmatmul.f32.gmra.mxu0 %v729
      %v809 = vpop.f32.mrf.mxu0
      %v810 = vadd.f32 0.0, %v809
      %811 = vmatmul.f32.gmra.mxu0 %v732
      %v812 = vpop.f32.mrf.mxu0
      %v813 = vadd.f32 0.0, %v812
      %814 = vmatmul.f32.gmra.mxu0 %v735
      %v815 = vpop.f32.mrf.mxu0
      %v816 = vadd.f32 0.0, %v815
      %817 = vmatmul.f32.gmra.mxu0 %v738
      %v818 = vpop.f32.mrf.mxu0
      %v819 = vadd.f32 0.0, %v818
      %820 = vmatmul.f32.gmra.mxu0 %v741
      %v821 = vpop.f32.mrf.mxu0
      %v822 = vadd.f32 0.0, %v821
      %823 = vmatmul.f32.gmra.mxu0 %v744
      %v824 = vpop.f32.mrf.mxu0
      %v825 = vadd.f32 0.0, %v824
      %826 = vmatmul.f32.gmra.mxu0 %v747
      %v827 = vpop.f32.mrf.mxu0
      %v828 = vadd.f32 0.0, %v827
      %829 = vmatmul.f32.gmra.mxu0 %v750
      %v830 = vpop.f32.mrf.mxu0
      %v831 = vadd.f32 0.0, %v830
      %832 = vmatmul.f32.gmra.mxu0 %v753
      %v833 = vpop.f32.mrf.mxu0
      %v834 = vadd.f32 0.0, %v833
      %835 = vmatmul.f32.gmra.mxu0 %v756
      %v836 = vpop.f32.mrf.mxu0
      %v837 = vadd.f32 0.0, %v836
      %838 = vmatmul.f32.gmra.mxu0 %v759
      %v839 = vpop.f32.mrf.mxu0
      %v840 = vadd.f32 0.0, %v839
      %841 = vmatmul.f32.gmra.mxu0 %v762
      %v842 = vpop.f32.mrf.mxu0
      %v843 = vadd.f32 0.0, %v842
      %844 = vmatmul.f32.gmra.mxu0 %v765
      %v845 = vpop.f32.mrf.mxu0
      %v846 = vadd.f32 0.0, %v845
      %847 = vmatmul.f32.gmra.mxu0 %v768
      %v848 = vpop.f32.mrf.mxu0
      %v849 = vadd.f32 0.0, %v848
      %850 = vmatmul.f32.gmra.mxu0 %v771
      %v851 = vpop.f32.mrf.mxu0
      %v852 = vadd.f32 0.0, %v851
      %853 = vmatmul.f32.gmra.mxu0 %v774
      %v854 = vpop.f32.mrf.mxu0
      %v855 = vadd.f32 0.0, %v854
      %856 = vmatmul.f32.gmra.mxu0 %v777
      %v857 = vpop.f32.mrf.mxu0
      %v858 = vadd.f32 0.0, %v857
      %859 = vmatmul.f32.gmra.mxu0 %v780
      %v860 = vpop.f32.mrf.mxu0
      %v861 = vadd.f32 0.0, %v860
      %862 = vdwg.mxu0
      %v864 = vsel %vm231, %v701, 0
      %v867 = vsel %vm782, %v693, 0
      %869 = vmatpush.msra.mxu0 0.0
      %870 = vmatpush.msra.mxu0 0.0
      %871 = vmatpush.msra.mxu0 0.0
      %872 = vmatpush.msra.mxu0 0.0
      %873 = vmatpush.msra.mxu0 0.0
      %874 = vmatpush.msra.mxu0 0.0
      %875 = vmatpush.msra.mxu0 0.0
      %876 = vmatpush.msra.mxu0 0.0
      %877 = vmatpush.msra.mxu0 0.0
      %878 = vmatpush.msra.mxu0 0.0
      %879 = vmatpush.msra.mxu0 0.0
      %880 = vmatpush.msra.mxu0 0.0
      %881 = vmatpush.msra.mxu0 0.0
      %882 = vmatpush.msra.mxu0 0.0
      %883 = vmatpush.msra.mxu0 0.0
      %884 = vmatpush.msra.mxu0 %v867
      %885 = vmatmul.f32.gmra.mxu0 %v864
      %v886 = vpop.f32.mrf.mxu0
      %v887 = vadd.f32 %v804, %v886
      %888 = vmatmul.f32.gmra.mxu0 %v723
      %v889 = vpop.f32.mrf.mxu0
      %v890 = vadd.f32 %v807, %v889
      %891 = vmatmul.f32.gmra.mxu0 %v726
      %v892 = vpop.f32.mrf.mxu0
      %v893 = vadd.f32 %v810, %v892
      %894 = vmatmul.f32.gmra.mxu0 %v729
      %v895 = vpop.f32.mrf.mxu0
      %v896 = vadd.f32 %v813, %v895
      %897 = vmatmul.f32.gmra.mxu0 %v732
      %v898 = vpop.f32.mrf.mxu0
      %v899 = vadd.f32 %v816, %v898
      %900 = vmatmul.f32.gmra.mxu0 %v735
      %v901 = vpop.f32.mrf.mxu0
      %v902 = vadd.f32 %v819, %v901
      %903 = vmatmul.f32.gmra.mxu0 %v738
      %v904 = vpop.f32.mrf.mxu0
      %v905 = vadd.f32 %v822, %v904
      %906 = vmatmul.f32.gmra.mxu0 %v741
      %v907 = vpop.f32.mrf.mxu0
      %v908 = vadd.f32 %v825, %v907
      %909 = vmatmul.f32.gmra.mxu0 %v744
      %v910 = vpop.f32.mrf.mxu0
      %v911 = vadd.f32 %v828, %v910
      %912 = vmatmul.f32.gmra.mxu0 %v747
      %v913 = vpop.f32.mrf.mxu0
      %v914 = vadd.f32 %v831, %v913
      %915 = vmatmul.f32.gmra.mxu0 %v750
      %v916 = vpop.f32.mrf.mxu0
      %v917 = vadd.f32 %v834, %v916
      %918 = vmatmul.f32.gmra.mxu0 %v753
      %v919 = vpop.f32.mrf.mxu0
      %v920 = vadd.f32 %v837, %v919
      %921 = vmatmul.f32.gmra.mxu0 %v756
      %v922 = vpop.f32.mrf.mxu0
      %v923 = vadd.f32 %v840, %v922
      %924 = vmatmul.f32.gmra.mxu0 %v759
      %v925 = vpop.f32.mrf.mxu0
      %v926 = vadd.f32 %v843, %v925
      %927 = vmatmul.f32.gmra.mxu0 %v762
      %v928 = vpop.f32.mrf.mxu0
      %v929 = vadd.f32 %v846, %v928
      %930 = vmatmul.f32.gmra.mxu0 %v765
      %v931 = vpop.f32.mrf.mxu0
      %v932 = vadd.f32 %v849, %v931
      %933 = vmatmul.f32.gmra.mxu0 %v768
      %v934 = vpop.f32.mrf.mxu0
      %v935 = vadd.f32 %v852, %v934
      %936 = vmatmul.f32.gmra.mxu0 %v771
      %v937 = vpop.f32.mrf.mxu0
      %v938 = vadd.f32 %v855, %v937
      %939 = vmatmul.f32.gmra.mxu0 %v774
      %v940 = vpop.f32.mrf.mxu0
      %v941 = vadd.f32 %v858, %v940
      %942 = vmatmul.f32.gmra.mxu0 %v777
      %v943 = vpop.f32.mrf.mxu0
      %v944 = vadd.f32 %v861, %v943
      %945 = vdwg.mxu0
      %v946 = vld [vmem:[#allocation2 + $0x11] sm:$0xff]
      %v947 = vld [vmem:[#allocation2 + $0x19] sm:$0xff]
      %v948 = vld [vmem:[#allocation2 + $0x21] sm:$0xff]
      %v949 = vld [vmem:[#allocation2 + $0x29] sm:$0xff]
      %v950 = vld [vmem:[#allocation2 + $0x31] sm:$0xff]
      %v951 = vld [vmem:[#allocation2 + $0x39] sm:$0xff]
      %v952 = vld [vmem:[#allocation2 + $0x41] sm:$0xff]
      %v953 = vld [vmem:[#allocation2 + $0x49] sm:$0xff]
      %v954 = vld [vmem:[#allocation2 + $0x51] sm:$0xff]
      %v955 = vld [vmem:[#allocation2 + $0x59] sm:$0xff]
      %v956 = vld [vmem:[#allocation2 + $0x61] sm:$0xff]
      %v957 = vld [vmem:[#allocation2 + $0x69] sm:$0xff]
      %v958 = vld [vmem:[#allocation2 + $0x71] sm:$0xff]
      %v959 = vld [vmem:[#allocation2 + $0x79] sm:$0xff]
      %v960 = vld [vmem:[#allocation2 + $0x81] sm:$0xff]
      %v961 = vld [vmem:[#allocation2 + $0x89] sm:$0xff]
      %v962 = vld [vmem:[#allocation2 + $0x91] sm:$0xff]
      %v963 = vld [vmem:[#allocation2 + $0x99] sm:$0xff]
      %v964 = vld [vmem:[#allocation2 + $0xa1] sm:$0xff]
      %v965 = vld [vmem:[#allocation2 + $0xa9] sm:$0xff]
      %v967 = vsel %vm231, %v946, 0
      %v970 = vsel %vm231, %v947, 0
      %v973 = vsel %vm231, %v948, 0
      %v976 = vsel %vm231, %v949, 0
      %v979 = vsel %vm231, %v950, 0
      %v982 = vsel %vm231, %v951, 0
      %v985 = vsel %vm231, %v952, 0
      %v988 = vsel %vm231, %v953, 0
      %v991 = vsel %vm231, %v954, 0
      %v994 = vsel %vm231, %v955, 0
      %v997 = vsel %vm231, %v956, 0
      %v1000 = vsel %vm231, %v957, 0
      %v1003 = vsel %vm231, %v958, 0
      %v1006 = vsel %vm231, %v959, 0
      %v1009 = vsel %vm231, %v960, 0
      %v1012 = vsel %vm231, %v961, 0
      %v1015 = vsel %vm231, %v962, 0
      %v1018 = vsel %vm231, %v963, 0
      %v1021 = vsel %vm231, %v964, 0
      %v1024 = vsel %vm231, %v965, 0
      %v1027 = vsel %vm782, %v699, 0
      %1029 = vmatpush.msra.mxu0 0.0
      %1030 = vmatpush.msra.mxu0 0.0
      %1031 = vmatpush.msra.mxu0 0.0
      %1032 = vmatpush.msra.mxu0 0.0
      %1033 = vmatpush.msra.mxu0 0.0
      %1034 = vmatpush.msra.mxu0 0.0
      %1035 = vmatpush.msra.mxu0 0.0
      %1036 = vmatpush.msra.mxu0 0.0
      %1037 = vmatpush.msra.mxu0 0.0
      %1038 = vmatpush.msra.mxu0 0.0
      %1039 = vmatpush.msra.mxu0 0.0
      %1040 = vmatpush.msra.mxu0 0.0
      %1041 = vmatpush.msra.mxu0 0.0
      %1042 = vmatpush.msra.mxu0 0.0
      %1043 = vmatpush.msra.mxu0 0.0
      %1044 = vmatpush.msra.mxu0 %v1027
      %1045 = vmatmul.f32.gmra.mxu0 %v967
      %v1046 = vpop.f32.mrf.mxu0
      %v1047 = vadd.f32 0.0, %v1046
      %1048 = vmatmul.f32.gmra.mxu0 %v970
      %v1049 = vpop.f32.mrf.mxu0
      %v1050 = vadd.f32 0.0, %v1049
      %1051 = vmatmul.f32.gmra.mxu0 %v973
      %v1052 = vpop.f32.mrf.mxu0
      %v1053 = vadd.f32 0.0, %v1052
      %1054 = vmatmul.f32.gmra.mxu0 %v976
      %v1055 = vpop.f32.mrf.mxu0
      %v1056 = vadd.f32 0.0, %v1055
      %1057 = vmatmul.f32.gmra.mxu0 %v979
      %v1058 = vpop.f32.mrf.mxu0
      %v1059 = vadd.f32 0.0, %v1058
      %1060 = vmatmul.f32.gmra.mxu0 %v982
      %v1061 = vpop.f32.mrf.mxu0
      %v1062 = vadd.f32 0.0, %v1061
      %1063 = vmatmul.f32.gmra.mxu0 %v985
      %v1064 = vpop.f32.mrf.mxu0
      %v1065 = vadd.f32 0.0, %v1064
      %1066 = vmatmul.f32.gmra.mxu0 %v988
      %v1067 = vpop.f32.mrf.mxu0
      %v1068 = vadd.f32 0.0, %v1067
      %1069 = vmatmul.f32.gmra.mxu0 %v991
      %v1070 = vpop.f32.mrf.mxu0
      %v1071 = vadd.f32 0.0, %v1070
      %1072 = vmatmul.f32.gmra.mxu0 %v994
      %v1073 = vpop.f32.mrf.mxu0
      %v1074 = vadd.f32 0.0, %v1073
      %1075 = vmatmul.f32.gmra.mxu0 %v997
      %v1076 = vpop.f32.mrf.mxu0
      %v1077 = vadd.f32 0.0, %v1076
      %1078 = vmatmul.f32.gmra.mxu0 %v1000
      %v1079 = vpop.f32.mrf.mxu0
      %v1080 = vadd.f32 0.0, %v1079
      %1081 = vmatmul.f32.gmra.mxu0 %v1003
      %v1082 = vpop.f32.mrf.mxu0
      %v1083 = vadd.f32 0.0, %v1082
      %1084 = vmatmul.f32.gmra.mxu0 %v1006
      %v1085 = vpop.f32.mrf.mxu0
      %v1086 = vadd.f32 0.0, %v1085
      %1087 = vmatmul.f32.gmra.mxu0 %v1009
      %v1088 = vpop.f32.mrf.mxu0
      %v1089 = vadd.f32 0.0, %v1088
      %1090 = vmatmul.f32.gmra.mxu0 %v1012
      %v1091 = vpop.f32.mrf.mxu0
      %v1092 = vadd.f32 0.0, %v1091
      %1093 = vmatmul.f32.gmra.mxu0 %v1015
      %v1094 = vpop.f32.mrf.mxu0
      %v1095 = vadd.f32 0.0, %v1094
      %1096 = vmatmul.f32.gmra.mxu0 %v1018
      %v1097 = vpop.f32.mrf.mxu0
      %v1098 = vadd.f32 0.0, %v1097
      %1099 = vmatmul.f32.gmra.mxu0 %v1021
      %v1100 = vpop.f32.mrf.mxu0
      %v1101 = vadd.f32 0.0, %v1100
      %1102 = vmatmul.f32.gmra.mxu0 %v1024
      %v1103 = vpop.f32.mrf.mxu0
      %v1104 = vadd.f32 0.0, %v1103
      %1105 = vdwg.mxu0
      %v1106 = vadd.f32 %v887, %v1047
      %v1107 = vadd.f32 %v890, %v1050
      %v1108 = vadd.f32 %v893, %v1053
      %v1109 = vadd.f32 %v896, %v1056
      %v1110 = vadd.f32 %v899, %v1059
      %v1111 = vadd.f32 %v902, %v1062
      %v1112 = vadd.f32 %v905, %v1065
      %v1113 = vadd.f32 %v908, %v1068
      %v1114 = vadd.f32 %v911, %v1071
      %v1115 = vadd.f32 %v914, %v1074
      %v1116 = vadd.f32 %v917, %v1077
      %v1117 = vadd.f32 %v920, %v1080
      %v1118 = vadd.f32 %v923, %v1083
      %v1119 = vadd.f32 %v926, %v1086
      %v1120 = vadd.f32 %v929, %v1089
      %v1121 = vadd.f32 %v932, %v1092
      %v1122 = vadd.f32 %v935, %v1095
      %v1123 = vadd.f32 %v938, %v1098
      %v1124 = vadd.f32 %v941, %v1101
      %v1125 = vadd.f32 %v944, %v1104
      %v1126 = vld [vmem:[#allocation2] sm:$0xff]
      %v1127 = vld [vmem:[#allocation2 + $0x8] sm:$0xff]
      %v1128 = vld [vmem:[#allocation2 + $0x10] sm:$0xff]
      %v1129 = vld [vmem:[#allocation2 + $0x18] sm:$0xff]
      %v1130 = vld [vmem:[#allocation2 + $0x20] sm:$0xff]
      %v1131 = vld [vmem:[#allocation2 + $0x28] sm:$0xff]
      %v1132 = vld [vmem:[#allocation2 + $0x30] sm:$0xff]
      %v1133 = vld [vmem:[#allocation2 + $0x38] sm:$0xff]
      %v1134 = vld [vmem:[#allocation2 + $0x40] sm:$0xff]
      %v1135 = vld [vmem:[#allocation2 + $0x48] sm:$0xff]
      %v1136 = vld [vmem:[#allocation2 + $0x50] sm:$0xff]
      %v1137 = vld [vmem:[#allocation2 + $0x58] sm:$0xff]
      %v1138 = vld [vmem:[#allocation2 + $0x60] sm:$0xff]
      %v1139 = vld [vmem:[#allocation2 + $0x68] sm:$0xff]
      %v1140 = vld [vmem:[#allocation2 + $0x70] sm:$0xff]
      %v1141 = vld [vmem:[#allocation2 + $0x78] sm:$0xff]
      %v1142 = vld [vmem:[#allocation2 + $0x80] sm:$0xff]
      %v1143 = vld [vmem:[#allocation2 + $0x88] sm:$0xff]
      %v1144 = vld [vmem:[#allocation2 + $0x90] sm:$0xff]
      %v1145 = vld [vmem:[#allocation2 + $0x98] sm:$0xff]
      %v1146 = vld [vmem:[#allocation2 + $0xa0] sm:$0xff]
      %v1148 = vsel %vm231, %v1127, 0
      %v1151 = vsel %vm231, %v1128, 0
      %v1154 = vsel %vm231, %v1129, 0
      %v1157 = vsel %vm231, %v1130, 0
      %v1160 = vsel %vm231, %v1131, 0
      %v1163 = vsel %vm231, %v1132, 0
      %v1166 = vsel %vm231, %v1133, 0
      %v1169 = vsel %vm231, %v1134, 0
      %v1172 = vsel %vm231, %v1135, 0
      %v1175 = vsel %vm231, %v1136, 0
      %v1178 = vsel %vm231, %v1137, 0
      %v1181 = vsel %vm231, %v1138, 0
      %v1184 = vsel %vm231, %v1139, 0
      %v1187 = vsel %vm231, %v1140, 0
      %v1190 = vsel %vm231, %v1141, 0
      %v1193 = vsel %vm231, %v1142, 0
      %v1196 = vsel %vm231, %v1143, 0
      %v1199 = vsel %vm231, %v1144, 0
      %v1202 = vsel %vm231, %v1145, 0
      %v1205 = vsel %vm231, %v1146, 0
      %v1208 = vsel %vm782, %v695, 0
      %1210 = vmatpush.msra.mxu0 0.0
      %1211 = vmatpush.msra.mxu0 0.0
      %1212 = vmatpush.msra.mxu0 0.0
      %1213 = vmatpush.msra.mxu0 0.0
      %1214 = vmatpush.msra.mxu0 0.0
      %1215 = vmatpush.msra.mxu0 0.0
      %1216 = vmatpush.msra.mxu0 0.0
      %1217 = vmatpush.msra.mxu0 0.0
      %1218 = vmatpush.msra.mxu0 0.0
      %1219 = vmatpush.msra.mxu0 0.0
      %1220 = vmatpush.msra.mxu0 0.0
      %1221 = vmatpush.msra.mxu0 0.0
      %1222 = vmatpush.msra.mxu0 0.0
      %1223 = vmatpush.msra.mxu0 0.0
      %1224 = vmatpush.msra.mxu0 0.0
      %1225 = vmatpush.msra.mxu0 %v1208
      %1226 = vmatmul.f32.gmra.mxu0 %v1148
      %v1227 = vpop.f32.mrf.mxu0
      %v1228 = vadd.f32 0.0, %v1227
      %1229 = vmatmul.f32.gmra.mxu0 %v1151
      %v1230 = vpop.f32.mrf.mxu0
      %v1231 = vadd.f32 0.0, %v1230
      %1232 = vmatmul.f32.gmra.mxu0 %v1154
      %v1233 = vpop.f32.mrf.mxu0
      %v1234 = vadd.f32 0.0, %v1233
      %1235 = vmatmul.f32.gmra.mxu0 %v1157
      %v1236 = vpop.f32.mrf.mxu0
      %v1237 = vadd.f32 0.0, %v1236
      %1238 = vmatmul.f32.gmra.mxu0 %v1160
      %v1239 = vpop.f32.mrf.mxu0
      %v1240 = vadd.f32 0.0, %v1239
      %1241 = vmatmul.f32.gmra.mxu0 %v1163
      %v1242 = vpop.f32.mrf.mxu0
      %v1243 = vadd.f32 0.0, %v1242
      %1244 = vmatmul.f32.gmra.mxu0 %v1166
      %v1245 = vpop.f32.mrf.mxu0
      %v1246 = vadd.f32 0.0, %v1245
      %1247 = vmatmul.f32.gmra.mxu0 %v1169
      %v1248 = vpop.f32.mrf.mxu0
      %v1249 = vadd.f32 0.0, %v1248
      %1250 = vmatmul.f32.gmra.mxu0 %v1172
      %v1251 = vpop.f32.mrf.mxu0
      %v1252 = vadd.f32 0.0, %v1251
      %1253 = vmatmul.f32.gmra.mxu0 %v1175
      %v1254 = vpop.f32.mrf.mxu0
      %v1255 = vadd.f32 0.0, %v1254
      %1256 = vmatmul.f32.gmra.mxu0 %v1178
      %v1257 = vpop.f32.mrf.mxu0
      %v1258 = vadd.f32 0.0, %v1257
      %1259 = vmatmul.f32.gmra.mxu0 %v1181
      %v1260 = vpop.f32.mrf.mxu0
      %v1261 = vadd.f32 0.0, %v1260
      %1262 = vmatmul.f32.gmra.mxu0 %v1184
      %v1263 = vpop.f32.mrf.mxu0
      %v1264 = vadd.f32 0.0, %v1263
      %1265 = vmatmul.f32.gmra.mxu0 %v1187
      %v1266 = vpop.f32.mrf.mxu0
      %v1267 = vadd.f32 0.0, %v1266
      %1268 = vmatmul.f32.gmra.mxu0 %v1190
      %v1269 = vpop.f32.mrf.mxu0
      %v1270 = vadd.f32 0.0, %v1269
      %1271 = vmatmul.f32.gmra.mxu0 %v1193
      %v1272 = vpop.f32.mrf.mxu0
      %v1273 = vadd.f32 0.0, %v1272
      %1274 = vmatmul.f32.gmra.mxu0 %v1196
      %v1275 = vpop.f32.mrf.mxu0
      %v1276 = vadd.f32 0.0, %v1275
      %1277 = vmatmul.f32.gmra.mxu0 %v1199
      %v1278 = vpop.f32.mrf.mxu0
      %v1279 = vadd.f32 0.0, %v1278
      %1280 = vmatmul.f32.gmra.mxu0 %v1202
      %v1281 = vpop.f32.mrf.mxu0
      %v1282 = vadd.f32 0.0, %v1281
      %1283 = vmatmul.f32.gmra.mxu0 %v1205
      %v1284 = vpop.f32.mrf.mxu0
      %v1285 = vadd.f32 0.0, %v1284
      %1286 = vdwg.mxu0
      %v1288 = vsel %vm231, %v1126, 0
      %v1291 = vsel %vm782, %v692, 0
      %1293 = vmatpush.msra.mxu0 0.0
      %1294 = vmatpush.msra.mxu0 0.0
      %1295 = vmatpush.msra.mxu0 0.0
      %1296 = vmatpush.msra.mxu0 0.0
      %1297 = vmatpush.msra.mxu0 0.0
      %1298 = vmatpush.msra.mxu0 0.0
      %1299 = vmatpush.msra.mxu0 0.0
      %1300 = vmatpush.msra.mxu0 0.0
      %1301 = vmatpush.msra.mxu0 0.0
      %1302 = vmatpush.msra.mxu0 0.0
      %1303 = vmatpush.msra.mxu0 0.0
      %1304 = vmatpush.msra.mxu0 0.0
      %1305 = vmatpush.msra.mxu0 0.0
      %1306 = vmatpush.msra.mxu0 0.0
      %1307 = vmatpush.msra.mxu0 0.0
      %1308 = vmatpush.msra.mxu0 %v1291
      %1309 = vmatmul.f32.gmra.mxu0 %v1288
      %v1310 = vpop.f32.mrf.mxu0
      %v1311 = vadd.f32 %v1228, %v1310
      %1312 = vmatmul.f32.gmra.mxu0 %v1148
      %v1313 = vpop.f32.mrf.mxu0
      %v1314 = vadd.f32 %v1231, %v1313
      %1315 = vmatmul.f32.gmra.mxu0 %v1151
      %v1316 = vpop.f32.mrf.mxu0
      %v1317 = vadd.f32 %v1234, %v1316
      %1318 = vmatmul.f32.gmra.mxu0 %v1154
      %v1319 = vpop.f32.mrf.mxu0
      %v1320 = vadd.f32 %v1237, %v1319
      %1321 = vmatmul.f32.gmra.mxu0 %v1157
      %v1322 = vpop.f32.mrf.mxu0
      %v1323 = vadd.f32 %v1240, %v1322
      %1324 = vmatmul.f32.gmra.mxu0 %v1160
      %v1325 = vpop.f32.mrf.mxu0
      %v1326 = vadd.f32 %v1243, %v1325
      %1327 = vmatmul.f32.gmra.mxu0 %v1163
      %v1328 = vpop.f32.mrf.mxu0
      %v1329 = vadd.f32 %v1246, %v1328
      %1330 = vmatmul.f32.gmra.mxu0 %v1166
      %v1331 = vpop.f32.mrf.mxu0
      %v1332 = vadd.f32 %v1249, %v1331
      %1333 = vmatmul.f32.gmra.mxu0 %v1169
      %v1334 = vpop.f32.mrf.mxu0
      %v1335 = vadd.f32 %v1252, %v1334
      %1336 = vmatmul.f32.gmra.mxu0 %v1172
      %v1337 = vpop.f32.mrf.mxu0
      %v1338 = vadd.f32 %v1255, %v1337
      %1339 = vmatmul.f32.gmra.mxu0 %v1175
      %v1340 = vpop.f32.mrf.mxu0
      %v1341 = vadd.f32 %v1258, %v1340
      %1342 = vmatmul.f32.gmra.mxu0 %v1178
      %v1343 = vpop.f32.mrf.mxu0
      %v1344 = vadd.f32 %v1261, %v1343
      %1345 = vmatmul.f32.gmra.mxu0 %v1181
      %v1346 = vpop.f32.mrf.mxu0
      %v1347 = vadd.f32 %v1264, %v1346
      %1348 = vmatmul.f32.gmra.mxu0 %v1184
      %v1349 = vpop.f32.mrf.mxu0
      %v1350 = vadd.f32 %v1267, %v1349
      %1351 = vmatmul.f32.gmra.mxu0 %v1187
      %v1352 = vpop.f32.mrf.mxu0
      %v1353 = vadd.f32 %v1270, %v1352
      %1354 = vmatmul.f32.gmra.mxu0 %v1190
      %v1355 = vpop.f32.mrf.mxu0
      %v1356 = vadd.f32 %v1273, %v1355
      %1357 = vmatmul.f32.gmra.mxu0 %v1193
      %v1358 = vpop.f32.mrf.mxu0
      %v1359 = vadd.f32 %v1276, %v1358
      %1360 = vmatmul.f32.gmra.mxu0 %v1196
      %v1361 = vpop.f32.mrf.mxu0
      %v1362 = vadd.f32 %v1279, %v1361
      %1363 = vmatmul.f32.gmra.mxu0 %v1199
      %v1364 = vpop.f32.mrf.mxu0
      %v1365 = vadd.f32 %v1282, %v1364
      %1366 = vmatmul.f32.gmra.mxu0 %v1202
      %v1367 = vpop.f32.mrf.mxu0
      %v1368 = vadd.f32 %v1285, %v1367
      %1369 = vdwg.mxu0
      %v1370 = vld [vmem:[#allocation2 + $0x10] sm:$0xff]
      %v1371 = vld [vmem:[#allocation2 + $0x18] sm:$0xff]
      %v1372 = vld [vmem:[#allocation2 + $0x20] sm:$0xff]
      %v1373 = vld [vmem:[#allocation2 + $0x28] sm:$0xff]
      %v1374 = vld [vmem:[#allocation2 + $0x30] sm:$0xff]
      %v1375 = vld [vmem:[#allocation2 + $0x38] sm:$0xff]
      %v1376 = vld [vmem:[#allocation2 + $0x40] sm:$0xff]
      %v1377 = vld [vmem:[#allocation2 + $0x48] sm:$0xff]
      %v1378 = vld [vmem:[#allocation2 + $0x50] sm:$0xff]
      %v1379 = vld [vmem:[#allocation2 + $0x58] sm:$0xff]
      %v1380 = vld [vmem:[#allocation2 + $0x60] sm:$0xff]
      %v1381 = vld [vmem:[#allocation2 + $0x68] sm:$0xff]
      %v1382 = vld [vmem:[#allocation2 + $0x70] sm:$0xff]
      %v1383 = vld [vmem:[#allocation2 + $0x78] sm:$0xff]
      %v1384 = vld [vmem:[#allocation2 + $0x80] sm:$0xff]
      %v1385 = vld [vmem:[#allocation2 + $0x88] sm:$0xff]
      %v1386 = vld [vmem:[#allocation2 + $0x90] sm:$0xff]
      %v1387 = vld [vmem:[#allocation2 + $0x98] sm:$0xff]
      %v1388 = vld [vmem:[#allocation2 + $0xa0] sm:$0xff]
      %v1389 = vld [vmem:[#allocation2 + $0xa8] sm:$0xff]
      %v1391 = vsel %vm231, %v1370, 0
      %v1394 = vsel %vm231, %v1371, 0
      %v1397 = vsel %vm231, %v1372, 0
      %v1400 = vsel %vm231, %v1373, 0
      %v1403 = vsel %vm231, %v1374, 0
      %v1406 = vsel %vm231, %v1375, 0
      %v1409 = vsel %vm231, %v1376, 0
      %v1412 = vsel %vm231, %v1377, 0
      %v1415 = vsel %vm231, %v1378, 0
      %v1418 = vsel %vm231, %v1379, 0
      %v1421 = vsel %vm231, %v1380, 0
      %v1424 = vsel %vm231, %v1381, 0
      %v1427 = vsel %vm231, %v1382, 0
      %v1430 = vsel %vm231, %v1383, 0
      %v1433 = vsel %vm231, %v1384, 0
      %v1436 = vsel %vm231, %v1385, 0
      %v1439 = vsel %vm231, %v1386, 0
      %v1442 = vsel %vm231, %v1387, 0
      %v1445 = vsel %vm231, %v1388, 0
      %v1448 = vsel %vm231, %v1389, 0
      %v1451 = vsel %vm782, %v698, 0
      %1453 = vmatpush.msra.mxu0 0.0
      %1454 = vmatpush.msra.mxu0 0.0
      %1455 = vmatpush.msra.mxu0 0.0
      %1456 = vmatpush.msra.mxu0 0.0
      %1457 = vmatpush.msra.mxu0 0.0
      %1458 = vmatpush.msra.mxu0 0.0
      %1459 = vmatpush.msra.mxu0 0.0
      %1460 = vmatpush.msra.mxu0 0.0
      %1461 = vmatpush.msra.mxu0 0.0
      %1462 = vmatpush.msra.mxu0 0.0
      %1463 = vmatpush.msra.mxu0 0.0
      %1464 = vmatpush.msra.mxu0 0.0
      %1465 = vmatpush.msra.mxu0 0.0
      %1466 = vmatpush.msra.mxu0 0.0
      %1467 = vmatpush.msra.mxu0 0.0
      %1468 = vmatpush.msra.mxu0 %v1451
      %1469 = vmatmul.f32.gmra.mxu0 %v1391
      %v1470 = vpop.f32.mrf.mxu0
      %v1471 = vadd.f32 0.0, %v1470
      %1472 = vmatmul.f32.gmra.mxu0 %v1394
      %v1473 = vpop.f32.mrf.mxu0
      %v1474 = vadd.f32 0.0, %v1473
      %1475 = vmatmul.f32.gmra.mxu0 %v1397
      %v1476 = vpop.f32.mrf.mxu0
      %v1477 = vadd.f32 0.0, %v1476
      %1478 = vmatmul.f32.gmra.mxu0 %v1400
      %v1479 = vpop.f32.mrf.mxu0
      %v1480 = vadd.f32 0.0, %v1479
      %1481 = vmatmul.f32.gmra.mxu0 %v1403
      %v1482 = vpop.f32.mrf.mxu0
      %v1483 = vadd.f32 0.0, %v1482
      %1484 = vmatmul.f32.gmra.mxu0 %v1406
      %v1485 = vpop.f32.mrf.mxu0
      %v1486 = vadd.f32 0.0, %v1485
      %1487 = vmatmul.f32.gmra.mxu0 %v1409
      %v1488 = vpop.f32.mrf.mxu0
      %v1489 = vadd.f32 0.0, %v1488
      %1490 = vmatmul.f32.gmra.mxu0 %v1412
      %v1491 = vpop.f32.mrf.mxu0
      %v1492 = vadd.f32 0.0, %v1491
      %1493 = vmatmul.f32.gmra.mxu0 %v1415
      %v1494 = vpop.f32.mrf.mxu0
      %v1495 = vadd.f32 0.0, %v1494
      %1496 = vmatmul.f32.gmra.mxu0 %v1418
      %v1497 = vpop.f32.mrf.mxu0
      %v1498 = vadd.f32 0.0, %v1497
      %1499 = vmatmul.f32.gmra.mxu0 %v1421
      %v1500 = vpop.f32.mrf.mxu0
      %v1501 = vadd.f32 0.0, %v1500
      %1502 = vmatmul.f32.gmra.mxu0 %v1424
      %v1503 = vpop.f32.mrf.mxu0
      %v1504 = vadd.f32 0.0, %v1503
      %1505 = vmatmul.f32.gmra.mxu0 %v1427
      %v1506 = vpop.f32.mrf.mxu0
      %v1507 = vadd.f32 0.0, %v1506
      %1508 = vmatmul.f32.gmra.mxu0 %v1430
      %v1509 = vpop.f32.mrf.mxu0
      %v1510 = vadd.f32 0.0, %v1509
      %1511 = vmatmul.f32.gmra.mxu0 %v1433
      %v1512 = vpop.f32.mrf.mxu0
      %v1513 = vadd.f32 0.0, %v1512
      %1514 = vmatmul.f32.gmra.mxu0 %v1436
      %v1515 = vpop.f32.mrf.mxu0
      %v1516 = vadd.f32 0.0, %v1515
      %1517 = vmatmul.f32.gmra.mxu0 %v1439
      %v1518 = vpop.f32.mrf.mxu0
      %v1519 = vadd.f32 0.0, %v1518
      %1520 = vmatmul.f32.gmra.mxu0 %v1442
      %v1521 = vpop.f32.mrf.mxu0
      %v1522 = vadd.f32 0.0, %v1521
      %1523 = vmatmul.f32.gmra.mxu0 %v1445
      %v1524 = vpop.f32.mrf.mxu0
      %v1525 = vadd.f32 0.0, %v1524
      %1526 = vmatmul.f32.gmra.mxu0 %v1448
      %v1527 = vpop.f32.mrf.mxu0
      %v1528 = vadd.f32 0.0, %v1527
      %1529 = vdwg.mxu0
      %v1530 = vadd.f32 %v1311, %v1471
      %v1531 = vadd.f32 %v1314, %v1474
      %v1532 = vadd.f32 %v1317, %v1477
      %v1533 = vadd.f32 %v1320, %v1480
      %v1534 = vadd.f32 %v1323, %v1483
      %v1535 = vadd.f32 %v1326, %v1486
      %v1536 = vadd.f32 %v1329, %v1489
      %v1537 = vadd.f32 %v1332, %v1492
      %v1538 = vadd.f32 %v1335, %v1495
      %v1539 = vadd.f32 %v1338, %v1498
      %v1540 = vadd.f32 %v1341, %v1501
      %v1541 = vadd.f32 %v1344, %v1504
      %v1542 = vadd.f32 %v1347, %v1507
      %v1543 = vadd.f32 %v1350, %v1510
      %v1544 = vadd.f32 %v1353, %v1513
      %v1545 = vadd.f32 %v1356, %v1516
      %v1546 = vadd.f32 %v1359, %v1519
      %v1547 = vadd.f32 %v1362, %v1522
      %v1548 = vadd.f32 %v1365, %v1525
      %v1549 = vadd.f32 %v1368, %v1528
      %v1550 = vmul.f32 %v472, %v1530
      %v1551 = vmul.f32 %v473, %v1531
      %v1552 = vmul.f32 %v474, %v1532
      %v1553 = vmul.f32 %v475, %v1533
      %v1554 = vmul.f32 %v476, %v1534
      %v1555 = vmul.f32 %v477, %v1535
      %v1556 = vmul.f32 %v478, %v1536
      %v1557 = vmul.f32 %v479, %v1537
      %v1558 = vmul.f32 %v480, %v1538
      %v1559 = vmul.f32 %v481, %v1539
      %v1560 = vmul.f32 %v482, %v1540
      %v1561 = vmul.f32 %v483, %v1541
      %v1562 = vmul.f32 %v484, %v1542
      %v1563 = vmul.f32 %v485, %v1543
      %v1564 = vmul.f32 %v486, %v1544
      %v1565 = vmul.f32 %v487, %v1545
      %v1566 = vmul.f32 %v488, %v1546
      %v1567 = vmul.f32 %v489, %v1547
      %v1568 = vmul.f32 %v490, %v1548
      %v1569 = vmul.f32 %v491, %v1549
      %v1570 = vadd.f32 %v1106, %v1550
      %v1571 = vadd.f32 %v1107, %v1551
      %v1572 = vadd.f32 %v1108, %v1552
      %v1573 = vadd.f32 %v1109, %v1553
      %v1574 = vadd.f32 %v1110, %v1554
      %v1575 = vadd.f32 %v1111, %v1555
      %v1576 = vadd.f32 %v1112, %v1556
      %v1577 = vadd.f32 %v1113, %v1557
      %v1578 = vadd.f32 %v1114, %v1558
      %v1579 = vadd.f32 %v1115, %v1559
      %v1580 = vadd.f32 %v1116, %v1560
      %v1581 = vadd.f32 %v1117, %v1561
      %v1582 = vadd.f32 %v1118, %v1562
      %v1583 = vadd.f32 %v1119, %v1563
      %v1584 = vadd.f32 %v1120, %v1564
      %v1585 = vadd.f32 %v1121, %v1565
      %v1586 = vadd.f32 %v1122, %v1566
      %v1587 = vadd.f32 %v1123, %v1567
      %v1588 = vadd.f32 %v1124, %v1568
      %v1589 = vadd.f32 %v1125, %v1569
      %v1590 = vld [vmem:[#allocation2 + $0x2] sm:$0xff]
      %v1591 = vld [vmem:[#allocation2 + $0xa] sm:$0xff]
      %v1592 = vld [vmem:[#allocation2 + $0x12] sm:$0xff]
      %v1593 = vld [vmem:[#allocation2 + $0x1a] sm:$0xff]
      %v1594 = vld [vmem:[#allocation2 + $0x22] sm:$0xff]
      %v1595 = vld [vmem:[#allocation2 + $0x2a] sm:$0xff]
      %v1596 = vld [vmem:[#allocation2 + $0x32] sm:$0xff]
      %v1597 = vld [vmem:[#allocation2 + $0x3a] sm:$0xff]
      %v1598 = vld [vmem:[#allocation2 + $0x42] sm:$0xff]
      %v1599 = vld [vmem:[#allocation2 + $0x4a] sm:$0xff]
      %v1600 = vld [vmem:[#allocation2 + $0x52] sm:$0xff]
      %v1601 = vld [vmem:[#allocation2 + $0x5a] sm:$0xff]
      %v1602 = vld [vmem:[#allocation2 + $0x62] sm:$0xff]
      %v1603 = vld [vmem:[#allocation2 + $0x6a] sm:$0xff]
      %v1604 = vld [vmem:[#allocation2 + $0x72] sm:$0xff]
      %v1605 = vld [vmem:[#allocation2 + $0x7a] sm:$0xff]
      %v1606 = vld [vmem:[#allocation2 + $0x82] sm:$0xff]
      %v1607 = vld [vmem:[#allocation2 + $0x8a] sm:$0xff]
      %v1608 = vld [vmem:[#allocation2 + $0x92] sm:$0xff]
      %v1609 = vld [vmem:[#allocation2 + $0x9a] sm:$0xff]
      %v1610 = vld [vmem:[#allocation2 + $0xa2] sm:$0xff]
      %v1612 = vsel %vm231, %v1591, 0
      %v1615 = vsel %vm231, %v1592, 0
      %v1618 = vsel %vm231, %v1593, 0
      %v1621 = vsel %vm231, %v1594, 0
      %v1624 = vsel %vm231, %v1595, 0
      %v1627 = vsel %vm231, %v1596, 0
      %v1630 = vsel %vm231, %v1597, 0
      %v1633 = vsel %vm231, %v1598, 0
      %v1636 = vsel %vm231, %v1599, 0
      %v1639 = vsel %vm231, %v1600, 0
      %v1642 = vsel %vm231, %v1601, 0
      %v1645 = vsel %vm231, %v1602, 0
      %v1648 = vsel %vm231, %v1603, 0
      %v1651 = vsel %vm231, %v1604, 0
      %v1654 = vsel %vm231, %v1605, 0
      %v1657 = vsel %vm231, %v1606, 0
      %v1660 = vsel %vm231, %v1607, 0
      %v1663 = vsel %vm231, %v1608, 0
      %v1666 = vsel %vm231, %v1609, 0
      %v1669 = vsel %vm231, %v1610, 0
      %v1672 = vsel %vm782, %v697, 0
      %1674 = vmatpush.msra.mxu0 0.0
      %1675 = vmatpush.msra.mxu0 0.0
      %1676 = vmatpush.msra.mxu0 0.0
      %1677 = vmatpush.msra.mxu0 0.0
      %1678 = vmatpush.msra.mxu0 0.0
      %1679 = vmatpush.msra.mxu0 0.0
      %1680 = vmatpush.msra.mxu0 0.0
      %1681 = vmatpush.msra.mxu0 0.0
      %1682 = vmatpush.msra.mxu0 0.0
      %1683 = vmatpush.msra.mxu0 0.0
      %1684 = vmatpush.msra.mxu0 0.0
      %1685 = vmatpush.msra.mxu0 0.0
      %1686 = vmatpush.msra.mxu0 0.0
      %1687 = vmatpush.msra.mxu0 0.0
      %1688 = vmatpush.msra.mxu0 0.0
      %1689 = vmatpush.msra.mxu0 %v1672
      %1690 = vmatmul.f32.gmra.mxu0 %v1612
      %v1691 = vpop.f32.mrf.mxu0
      %v1692 = vadd.f32 0.0, %v1691
      %1693 = vmatmul.f32.gmra.mxu0 %v1615
      %v1694 = vpop.f32.mrf.mxu0
      %v1695 = vadd.f32 0.0, %v1694
      %1696 = vmatmul.f32.gmra.mxu0 %v1618
      %v1697 = vpop.f32.mrf.mxu0
      %v1698 = vadd.f32 0.0, %v1697
      %1699 = vmatmul.f32.gmra.mxu0 %v1621
      %v1700 = vpop.f32.mrf.mxu0
      %v1701 = vadd.f32 0.0, %v1700
      %1702 = vmatmul.f32.gmra.mxu0 %v1624
      %v1703 = vpop.f32.mrf.mxu0
      %v1704 = vadd.f32 0.0, %v1703
      %1705 = vmatmul.f32.gmra.mxu0 %v1627
      %v1706 = vpop.f32.mrf.mxu0
      %v1707 = vadd.f32 0.0, %v1706
      %1708 = vmatmul.f32.gmra.mxu0 %v1630
      %v1709 = vpop.f32.mrf.mxu0
      %v1710 = vadd.f32 0.0, %v1709
      %1711 = vmatmul.f32.gmra.mxu0 %v1633
      %v1712 = vpop.f32.mrf.mxu0
      %v1713 = vadd.f32 0.0, %v1712
      %1714 = vmatmul.f32.gmra.mxu0 %v1636
      %v1715 = vpop.f32.mrf.mxu0
      %v1716 = vadd.f32 0.0, %v1715
      %1717 = vmatmul.f32.gmra.mxu0 %v1639
      %v1718 = vpop.f32.mrf.mxu0
      %v1719 = vadd.f32 0.0, %v1718
      %1720 = vmatmul.f32.gmra.mxu0 %v1642
      %v1721 = vpop.f32.mrf.mxu0
      %v1722 = vadd.f32 0.0, %v1721
      %1723 = vmatmul.f32.gmra.mxu0 %v1645
      %v1724 = vpop.f32.mrf.mxu0
      %v1725 = vadd.f32 0.0, %v1724
      %1726 = vmatmul.f32.gmra.mxu0 %v1648
      %v1727 = vpop.f32.mrf.mxu0
      %v1728 = vadd.f32 0.0, %v1727
      %1729 = vmatmul.f32.gmra.mxu0 %v1651
      %v1730 = vpop.f32.mrf.mxu0
      %v1731 = vadd.f32 0.0, %v1730
      %1732 = vmatmul.f32.gmra.mxu0 %v1654
      %v1733 = vpop.f32.mrf.mxu0
      %v1734 = vadd.f32 0.0, %v1733
      %1735 = vmatmul.f32.gmra.mxu0 %v1657
      %v1736 = vpop.f32.mrf.mxu0
      %v1737 = vadd.f32 0.0, %v1736
      %1738 = vmatmul.f32.gmra.mxu0 %v1660
      %v1739 = vpop.f32.mrf.mxu0
      %v1740 = vadd.f32 0.0, %v1739
      %1741 = vmatmul.f32.gmra.mxu0 %v1663
      %v1742 = vpop.f32.mrf.mxu0
      %v1743 = vadd.f32 0.0, %v1742
      %1744 = vmatmul.f32.gmra.mxu0 %v1666
      %v1745 = vpop.f32.mrf.mxu0
      %v1746 = vadd.f32 0.0, %v1745
      %1747 = vmatmul.f32.gmra.mxu0 %v1669
      %v1748 = vpop.f32.mrf.mxu0
      %v1749 = vadd.f32 0.0, %v1748
      %1750 = vdwg.mxu0
      %v1752 = vsel %vm231, %v1590, 0
      %v1755 = vsel %vm782, %v694, 0
      %1757 = vmatpush.msra.mxu0 0.0
      %1758 = vmatpush.msra.mxu0 0.0
      %1759 = vmatpush.msra.mxu0 0.0
      %1760 = vmatpush.msra.mxu0 0.0
      %1761 = vmatpush.msra.mxu0 0.0
      %1762 = vmatpush.msra.mxu0 0.0
      %1763 = vmatpush.msra.mxu0 0.0
      %1764 = vmatpush.msra.mxu0 0.0
      %1765 = vmatpush.msra.mxu0 0.0
      %1766 = vmatpush.msra.mxu0 0.0
      %1767 = vmatpush.msra.mxu0 0.0
      %1768 = vmatpush.msra.mxu0 0.0
      %1769 = vmatpush.msra.mxu0 0.0
      %1770 = vmatpush.msra.mxu0 0.0
      %1771 = vmatpush.msra.mxu0 0.0
      %1772 = vmatpush.msra.mxu0 %v1755
      %1773 = vmatmul.f32.gmra.mxu0 %v1752
      %v1774 = vpop.f32.mrf.mxu0
      %v1775 = vadd.f32 %v1692, %v1774
      %1776 = vmatmul.f32.gmra.mxu0 %v1612
      %v1777 = vpop.f32.mrf.mxu0
      %v1778 = vadd.f32 %v1695, %v1777
      %1779 = vmatmul.f32.gmra.mxu0 %v1615
      %v1780 = vpop.f32.mrf.mxu0
      %v1781 = vadd.f32 %v1698, %v1780
      %1782 = vmatmul.f32.gmra.mxu0 %v1618
      %v1783 = vpop.f32.mrf.mxu0
      %v1784 = vadd.f32 %v1701, %v1783
      %1785 = vmatmul.f32.gmra.mxu0 %v1621
      %v1786 = vpop.f32.mrf.mxu0
      %v1787 = vadd.f32 %v1704, %v1786
      %1788 = vmatmul.f32.gmra.mxu0 %v1624
      %v1789 = vpop.f32.mrf.mxu0
      %v1790 = vadd.f32 %v1707, %v1789
      %1791 = vmatmul.f32.gmra.mxu0 %v1627
      %v1792 = vpop.f32.mrf.mxu0
      %v1793 = vadd.f32 %v1710, %v1792
      %1794 = vmatmul.f32.gmra.mxu0 %v1630
      %v1795 = vpop.f32.mrf.mxu0
      %v1796 = vadd.f32 %v1713, %v1795
      %1797 = vmatmul.f32.gmra.mxu0 %v1633
      %v1798 = vpop.f32.mrf.mxu0
      %v1799 = vadd.f32 %v1716, %v1798
      %1800 = vmatmul.f32.gmra.mxu0 %v1636
      %v1801 = vpop.f32.mrf.mxu0
      %v1802 = vadd.f32 %v1719, %v1801
      %1803 = vmatmul.f32.gmra.mxu0 %v1639
      %v1804 = vpop.f32.mrf.mxu0
      %v1805 = vadd.f32 %v1722, %v1804
      %1806 = vmatmul.f32.gmra.mxu0 %v1642
      %v1807 = vpop.f32.mrf.mxu0
      %v1808 = vadd.f32 %v1725, %v1807
      %1809 = vmatmul.f32.gmra.mxu0 %v1645
      %v1810 = vpop.f32.mrf.mxu0
      %v1811 = vadd.f32 %v1728, %v1810
      %1812 = vmatmul.f32.gmra.mxu0 %v1648
      %v1813 = vpop.f32.mrf.mxu0
      %v1814 = vadd.f32 %v1731, %v1813
      %1815 = vmatmul.f32.gmra.mxu0 %v1651
      %v1816 = vpop.f32.mrf.mxu0
      %v1817 = vadd.f32 %v1734, %v1816
      %1818 = vmatmul.f32.gmra.mxu0 %v1654
      %v1819 = vpop.f32.mrf.mxu0
      %v1820 = vadd.f32 %v1737, %v1819
      %1821 = vmatmul.f32.gmra.mxu0 %v1657
      %v1822 = vpop.f32.mrf.mxu0
      %v1823 = vadd.f32 %v1740, %v1822
      %1824 = vmatmul.f32.gmra.mxu0 %v1660
      %v1825 = vpop.f32.mrf.mxu0
      %v1826 = vadd.f32 %v1743, %v1825
      %1827 = vmatmul.f32.gmra.mxu0 %v1663
      %v1828 = vpop.f32.mrf.mxu0
      %v1829 = vadd.f32 %v1746, %v1828
      %1830 = vmatmul.f32.gmra.mxu0 %v1666
      %v1831 = vpop.f32.mrf.mxu0
      %v1832 = vadd.f32 %v1749, %v1831
      %1833 = vdwg.mxu0
      %v1834 = vld [vmem:[#allocation2 + $0x12] sm:$0xff]
      %v1835 = vld [vmem:[#allocation2 + $0x1a] sm:$0xff]
      %v1836 = vld [vmem:[#allocation2 + $0x22] sm:$0xff]
      %v1837 = vld [vmem:[#allocation2 + $0x2a] sm:$0xff]
      %v1838 = vld [vmem:[#allocation2 + $0x32] sm:$0xff]
      %v1839 = vld [vmem:[#allocation2 + $0x3a] sm:$0xff]
      %v1840 = vld [vmem:[#allocation2 + $0x42] sm:$0xff]
      %v1841 = vld [vmem:[#allocation2 + $0x4a] sm:$0xff]
      %v1842 = vld [vmem:[#allocation2 + $0x52] sm:$0xff]
      %v1843 = vld [vmem:[#allocation2 + $0x5a] sm:$0xff]
      %v1844 = vld [vmem:[#allocation2 + $0x62] sm:$0xff]
      %v1845 = vld [vmem:[#allocation2 + $0x6a] sm:$0xff]
      %v1846 = vld [vmem:[#allocation2 + $0x72] sm:$0xff]
      %v1847 = vld [vmem:[#allocation2 + $0x7a] sm:$0xff]
      %v1848 = vld [vmem:[#allocation2 + $0x82] sm:$0xff]
      %v1849 = vld [vmem:[#allocation2 + $0x8a] sm:$0xff]
      %v1850 = vld [vmem:[#allocation2 + $0x92] sm:$0xff]
      %v1851 = vld [vmem:[#allocation2 + $0x9a] sm:$0xff]
      %v1852 = vld [vmem:[#allocation2 + $0xa2] sm:$0xff]
      %v1853 = vld [vmem:[#allocation2 + $0xaa] sm:$0xff]
      %v1855 = vsel %vm231, %v1834, 0
      %v1858 = vsel %vm231, %v1835, 0
      %v1861 = vsel %vm231, %v1836, 0
      %v1864 = vsel %vm231, %v1837, 0
      %v1867 = vsel %vm231, %v1838, 0
      %v1870 = vsel %vm231, %v1839, 0
      %v1873 = vsel %vm231, %v1840, 0
      %v1876 = vsel %vm231, %v1841, 0
      %v1879 = vsel %vm231, %v1842, 0
      %v1882 = vsel %vm231, %v1843, 0
      %v1885 = vsel %vm231, %v1844, 0
      %v1888 = vsel %vm231, %v1845, 0
      %v1891 = vsel %vm231, %v1846, 0
      %v1894 = vsel %vm231, %v1847, 0
      %v1897 = vsel %vm231, %v1848, 0
      %v1900 = vsel %vm231, %v1849, 0
      %v1903 = vsel %vm231, %v1850, 0
      %v1906 = vsel %vm231, %v1851, 0
      %v1909 = vsel %vm231, %v1852, 0
      %v1912 = vsel %vm231, %v1853, 0
      %v1915 = vsel %vm782, %v700, 0
      %1917 = vmatpush.msra.mxu0 0.0
      %1918 = vmatpush.msra.mxu0 0.0
      %1919 = vmatpush.msra.mxu0 0.0
      %1920 = vmatpush.msra.mxu0 0.0
      %1921 = vmatpush.msra.mxu0 0.0
      %1922 = vmatpush.msra.mxu0 0.0
      %1923 = vmatpush.msra.mxu0 0.0
      %1924 = vmatpush.msra.mxu0 0.0
      %1925 = vmatpush.msra.mxu0 0.0
      %1926 = vmatpush.msra.mxu0 0.0
      %1927 = vmatpush.msra.mxu0 0.0
      %1928 = vmatpush.msra.mxu0 0.0
      %1929 = vmatpush.msra.mxu0 0.0
      %1930 = vmatpush.msra.mxu0 0.0
      %1931 = vmatpush.msra.mxu0 0.0
      %1932 = vmatpush.msra.mxu0 %v1915
      %1933 = vmatmul.f32.gmra.mxu0 %v1855
      %v1934 = vpop.f32.mrf.mxu0
      %v1935 = vadd.f32 0.0, %v1934
      %1936 = vmatmul.f32.gmra.mxu0 %v1858
      %v1937 = vpop.f32.mrf.mxu0
      %v1938 = vadd.f32 0.0, %v1937
      %1939 = vmatmul.f32.gmra.mxu0 %v1861
      %v1940 = vpop.f32.mrf.mxu0
      %v1941 = vadd.f32 0.0, %v1940
      %1942 = vmatmul.f32.gmra.mxu0 %v1864
      %v1943 = vpop.f32.mrf.mxu0
      %v1944 = vadd.f32 0.0, %v1943
      %1945 = vmatmul.f32.gmra.mxu0 %v1867
      %v1946 = vpop.f32.mrf.mxu0
      %v1947 = vadd.f32 0.0, %v1946
      %1948 = vmatmul.f32.gmra.mxu0 %v1870
      %v1949 = vpop.f32.mrf.mxu0
      %v1950 = vadd.f32 0.0, %v1949
      %1951 = vmatmul.f32.gmra.mxu0 %v1873
      %v1952 = vpop.f32.mrf.mxu0
      %v1953 = vadd.f32 0.0, %v1952
      %1954 = vmatmul.f32.gmra.mxu0 %v1876
      %v1955 = vpop.f32.mrf.mxu0
      %v1956 = vadd.f32 0.0, %v1955
      %1957 = vmatmul.f32.gmra.mxu0 %v1879
      %v1958 = vpop.f32.mrf.mxu0
      %v1959 = vadd.f32 0.0, %v1958
      %1960 = vmatmul.f32.gmra.mxu0 %v1882
      %v1961 = vpop.f32.mrf.mxu0
      %v1962 = vadd.f32 0.0, %v1961
      %1963 = vmatmul.f32.gmra.mxu0 %v1885
      %v1964 = vpop.f32.mrf.mxu0
      %v1965 = vadd.f32 0.0, %v1964
      %1966 = vmatmul.f32.gmra.mxu0 %v1888
      %v1967 = vpop.f32.mrf.mxu0
      %v1968 = vadd.f32 0.0, %v1967
      %1969 = vmatmul.f32.gmra.mxu0 %v1891
      %v1970 = vpop.f32.mrf.mxu0
      %v1971 = vadd.f32 0.0, %v1970
      %1972 = vmatmul.f32.gmra.mxu0 %v1894
      %v1973 = vpop.f32.mrf.mxu0
      %v1974 = vadd.f32 0.0, %v1973
      %1975 = vmatmul.f32.gmra.mxu0 %v1897
      %v1976 = vpop.f32.mrf.mxu0
      %v1977 = vadd.f32 0.0, %v1976
      %1978 = vmatmul.f32.gmra.mxu0 %v1900
      %v1979 = vpop.f32.mrf.mxu0
      %v1980 = vadd.f32 0.0, %v1979
      %1981 = vmatmul.f32.gmra.mxu0 %v1903
      %v1982 = vpop.f32.mrf.mxu0
      %v1983 = vadd.f32 0.0, %v1982
      %1984 = vmatmul.f32.gmra.mxu0 %v1906
      %v1985 = vpop.f32.mrf.mxu0
      %v1986 = vadd.f32 0.0, %v1985
      %1987 = vmatmul.f32.gmra.mxu0 %v1909
      %v1988 = vpop.f32.mrf.mxu0
      %v1989 = vadd.f32 0.0, %v1988
      %1990 = vmatmul.f32.gmra.mxu0 %v1912
      %v1991 = vpop.f32.mrf.mxu0
      %v1992 = vadd.f32 0.0, %v1991
      %1993 = vdwg.mxu0
      %v1994 = vadd.f32 %v1775, %v1935
      %v1995 = vadd.f32 %v1778, %v1938
      %v1996 = vadd.f32 %v1781, %v1941
      %v1997 = vadd.f32 %v1784, %v1944
      %v1998 = vadd.f32 %v1787, %v1947
      %v1999 = vadd.f32 %v1790, %v1950
      %v2000 = vadd.f32 %v1793, %v1953
      %v2001 = vadd.f32 %v1796, %v1956
      %v2002 = vadd.f32 %v1799, %v1959
      %v2003 = vadd.f32 %v1802, %v1962
      %v2004 = vadd.f32 %v1805, %v1965
      %v2005 = vadd.f32 %v1808, %v1968
      %v2006 = vadd.f32 %v1811, %v1971
      %v2007 = vadd.f32 %v1814, %v1974
      %v2008 = vadd.f32 %v1817, %v1977
      %v2009 = vadd.f32 %v1820, %v1980
      %v2010 = vadd.f32 %v1823, %v1983
      %v2011 = vadd.f32 %v1826, %v1986
      %v2012 = vadd.f32 %v1829, %v1989
      %v2013 = vadd.f32 %v1832, %v1992
      %v2014 = vmul.f32 %v532, %v1994
      %v2015 = vmul.f32 %v533, %v1995
      %v2016 = vmul.f32 %v534, %v1996
      %v2017 = vmul.f32 %v535, %v1997
      %v2018 = vmul.f32 %v536, %v1998
      %v2019 = vmul.f32 %v537, %v1999
      %v2020 = vmul.f32 %v538, %v2000
      %v2021 = vmul.f32 %v539, %v2001
      %v2022 = vmul.f32 %v540, %v2002
      %v2023 = vmul.f32 %v541, %v2003
      %v2024 = vmul.f32 %v542, %v2004
      %v2025 = vmul.f32 %v543, %v2005
      %v2026 = vmul.f32 %v544, %v2006
      %v2027 = vmul.f32 %v545, %v2007
      %v2028 = vmul.f32 %v546, %v2008
      %v2029 = vmul.f32 %v547, %v2009
      %v2030 = vmul.f32 %v548, %v2010
      %v2031 = vmul.f32 %v549, %v2011
      %v2032 = vmul.f32 %v550, %v2012
      %v2033 = vmul.f32 %v551, %v2013
      %v2034 = vadd.f32 %v1570, %v2014
      %v2035 = vadd.f32 %v1571, %v2015
      %v2036 = vadd.f32 %v1572, %v2016
      %v2037 = vadd.f32 %v1573, %v2017
      %v2038 = vadd.f32 %v1574, %v2018
      %v2039 = vadd.f32 %v1575, %v2019
      %v2040 = vadd.f32 %v1576, %v2020
      %v2041 = vadd.f32 %v1577, %v2021
      %v2042 = vadd.f32 %v1578, %v2022
      %v2043 = vadd.f32 %v1579, %v2023
      %v2044 = vadd.f32 %v1580, %v2024
      %v2045 = vadd.f32 %v1581, %v2025
      %v2046 = vadd.f32 %v1582, %v2026
      %v2047 = vadd.f32 %v1583, %v2027
      %v2048 = vadd.f32 %v1584, %v2028
      %v2049 = vadd.f32 %v1585, %v2029
      %v2050 = vadd.f32 %v1586, %v2030
      %v2051 = vadd.f32 %v1587, %v2031
      %v2052 = vadd.f32 %v1588, %v2032
      %v2053 = vadd.f32 %v1589, %v2033
      %v2054 = vld [vmem:[%s2] sm:$0x1]
      %v2056 = vperm.slane %v2054, 0
      %v2058 = vadd.f32 %v2034, %v2056
      %v2059 = vadd.f32 %v2035, %v2056
      %v2060 = vadd.f32 %v2036, %v2056
      %v2061 = vadd.f32 %v2037, %v2056
      %v2062 = vadd.f32 %v2038, %v2056
      %v2063 = vadd.f32 %v2039, %v2056
      %v2064 = vadd.f32 %v2040, %v2056
      %v2065 = vadd.f32 %v2041, %v2056
      %v2066 = vadd.f32 %v2042, %v2056
      %v2067 = vadd.f32 %v2043, %v2056
      %v2068 = vadd.f32 %v2044, %v2056
      %v2069 = vadd.f32 %v2045, %v2056
      %v2070 = vadd.f32 %v2046, %v2056
      %v2071 = vadd.f32 %v2047, %v2056
      %v2072 = vadd.f32 %v2048, %v2056
      %v2073 = vadd.f32 %v2049, %v2056
      %v2074 = vadd.f32 %v2050, %v2056
      %v2075 = vadd.f32 %v2051, %v2056
      %v2076 = vadd.f32 %v2052, %v2056
      %v2077 = vadd.f32 %v2053, %v2056
      %v2078 = vmax.f32 %v2058, 0.0
      %v2079 = vmax.f32 %v2059, 0.0
      %v2080 = vmax.f32 %v2060, 0.0
      %v2081 = vmax.f32 %v2061, 0.0
      %v2082 = vmax.f32 %v2062, 0.0
      %v2083 = vmax.f32 %v2063, 0.0
      %v2084 = vmax.f32 %v2064, 0.0
      %v2085 = vmax.f32 %v2065, 0.0
      %v2086 = vmax.f32 %v2066, 0.0
      %v2087 = vmax.f32 %v2067, 0.0
      %v2088 = vmax.f32 %v2068, 0.0
      %v2089 = vmax.f32 %v2069, 0.0
      %v2090 = vmax.f32 %v2070, 0.0
      %v2091 = vmax.f32 %v2071, 0.0
      %v2092 = vmax.f32 %v2072, 0.0
      %v2093 = vmax.f32 %v2073, 0.0
      %v2094 = vmax.f32 %v2074, 0.0
      %v2095 = vmax.f32 %v2075, 0.0
      %v2096 = vmax.f32 %v2076, 0.0
      %v2097 = vmax.f32 %v2077, 0.0
      %v2098 = vsel %vm672, 1, 0
      %v2099 = vsel %vm673, 1, 0
      %v2100 = vsel %vm674, 1, 0
      %v2101 = vsel %vm675, 1, 0
      %v2102 = vsel %vm676, 1, 0
      %v2103 = vsel %vm677, 1, 0
      %v2104 = vsel %vm678, 1, 0
      %v2105 = vsel %vm679, 1, 0
      %v2106 = vsel %vm680, 1, 0
      %v2107 = vsel %vm681, 1, 0
      %v2108 = vsel %vm682, 1, 0
      %v2109 = vsel %vm683, 1, 0
      %v2110 = vsel %vm684, 1, 0
      %v2111 = vsel %vm685, 1, 0
      %v2112 = vsel %vm686, 1, 0
      %v2113 = vsel %vm687, 1, 0
      %v2114 = vsel %vm688, 1, 0
      %v2115 = vsel %vm689, 1, 0
      %v2116 = vsel %vm690, 1, 0
      %v2117 = vsel %vm691, 1, 0
      %vm2118 = vcmp.eq.s32.totalorder %v2098, 1
      %vm2119 = vcmp.eq.s32.totalorder %v2099, 1
      %vm2120 = vcmp.eq.s32.totalorder %v2100, 1
      %vm2121 = vcmp.eq.s32.totalorder %v2101, 1
      %vm2122 = vcmp.eq.s32.totalorder %v2102, 1
      %vm2123 = vcmp.eq.s32.totalorder %v2103, 1
      %vm2124 = vcmp.eq.s32.totalorder %v2104, 1
      %vm2125 = vcmp.eq.s32.totalorder %v2105, 1
      %vm2126 = vcmp.eq.s32.totalorder %v2106, 1
      %vm2127 = vcmp.eq.s32.totalorder %v2107, 1
      %vm2128 = vcmp.eq.s32.totalorder %v2108, 1
      %vm2129 = vcmp.eq.s32.totalorder %v2109, 1
      %vm2130 = vcmp.eq.s32.totalorder %v2110, 1
      %vm2131 = vcmp.eq.s32.totalorder %v2111, 1
      %vm2132 = vcmp.eq.s32.totalorder %v2112, 1
      %vm2133 = vcmp.eq.s32.totalorder %v2113, 1
      %vm2134 = vcmp.eq.s32.totalorder %v2114, 1
      %vm2135 = vcmp.eq.s32.totalorder %v2115, 1
      %vm2136 = vcmp.eq.s32.totalorder %v2116, 1
      %vm2137 = vcmp.eq.s32.totalorder %v2117, 1
      %v2138 = vsel %vm2118, %v2078, 0.0
      %v2139 = vsel %vm2119, %v2079, 0.0
      %v2140 = vsel %vm2120, %v2080, 0.0
      %v2141 = vsel %vm2121, %v2081, 0.0
      %v2142 = vsel %vm2122, %v2082, 0.0
      %v2143 = vsel %vm2123, %v2083, 0.0
      %v2144 = vsel %vm2124, %v2084, 0.0
      %v2145 = vsel %vm2125, %v2085, 0.0
      %v2146 = vsel %vm2126, %v2086, 0.0
      %v2147 = vsel %vm2127, %v2087, 0.0
      %v2148 = vsel %vm2128, %v2088, 0.0
      %v2149 = vsel %vm2129, %v2089, 0.0
      %v2150 = vsel %vm2130, %v2090, 0.0
      %v2151 = vsel %vm2131, %v2091, 0.0
      %v2152 = vsel %vm2132, %v2092, 0.0
      %v2153 = vsel %vm2133, %v2093, 0.0
      %v2154 = vsel %vm2134, %v2094, 0.0
      %v2155 = vsel %vm2135, %v2095, 0.0
      %v2156 = vsel %vm2136, %v2096, 0.0
      %v2157 = vsel %vm2137, %v2097, 0.0
      %2158 = vst.msk [vmem:[#allocation3 + $0x9] sm:$0xff] %vm235, %v2138
      %2159 = vst.msk [vmem:[#allocation3 + $0x11] sm:$0xff] %vm235, %v2139
      %2160 = vst.msk [vmem:[#allocation3 + $0x19] sm:$0xff] %vm235, %v2140
      %2161 = vst.msk [vmem:[#allocation3 + $0x21] sm:$0xff] %vm235, %v2141
      %2162 = vst.msk [vmem:[#allocation3 + $0x29] sm:$0xff] %vm235, %v2142
      %2163 = vst.msk [vmem:[#allocation3 + $0x31] sm:$0xff] %vm235, %v2143
      %2164 = vst.msk [vmem:[#allocation3 + $0x39] sm:$0xff] %vm235, %v2144
      %2165 = vst.msk [vmem:[#allocation3 + $0x41] sm:$0xff] %vm235, %v2145
      %2166 = vst.msk [vmem:[#allocation3 + $0x49] sm:$0xff] %vm235, %v2146
      %2167 = vst.msk [vmem:[#allocation3 + $0x51] sm:$0xff] %vm235, %v2147
      %2168 = vst.msk [vmem:[#allocation3 + $0x59] sm:$0xff] %vm235, %v2148
      %2169 = vst.msk [vmem:[#allocation3 + $0x61] sm:$0xff] %vm235, %v2149
      %2170 = vst.msk [vmem:[#allocation3 + $0x69] sm:$0xff] %vm235, %v2150
      %2171 = vst.msk [vmem:[#allocation3 + $0x71] sm:$0xff] %vm235, %v2151
      %2172 = vst.msk [vmem:[#allocation3 + $0x79] sm:$0xff] %vm235, %v2152
      %2173 = vst.msk [vmem:[#allocation3 + $0x81] sm:$0xff] %vm235, %v2153
      %2174 = vst.msk [vmem:[#allocation3 + $0x89] sm:$0xff] %vm235, %v2154
      %2175 = vst.msk [vmem:[#allocation3 + $0x91] sm:$0xff] %vm235, %v2155
      %2176 = vst.msk [vmem:[#allocation3 + $0x99] sm:$0xff] %vm235, %v2156
      %2177 = vst.msk [vmem:[#allocation3 + $0xa1] sm:$0xff] %vm235, %v2157
      %v2178 = vld [vmem:[%s3] sm:$0xff]
      %v2179 = vld [vmem:[%s3 + $0x8] sm:$0xff]
      %v2180 = vld [vmem:[%s3 + $0x10] sm:$0xff]
      %v2181 = vld [vmem:[%s3 + $0x18] sm:$0xff]
      %v2182 = vld [vmem:[%s3 + $0x20] sm:$0xff]
      %v2183 = vld [vmem:[%s3 + $0x28] sm:$0xff]
      %v2184 = vld [vmem:[%s3 + $0x30] sm:$0xff]
      %v2185 = vld [vmem:[%s3 + $0x38] sm:$0xff]
      %v2186 = vld [vmem:[%s3 + $0x40] sm:$0xff]
      %v2187 = vld [vmem:[#allocation3 + $0x1] sm:$0xff]
      %v2188 = vld [vmem:[#allocation3 + $0x9] sm:$0xff]
      %v2189 = vld [vmem:[#allocation3 + $0x11] sm:$0xff]
      %v2190 = vld [vmem:[#allocation3 + $0x19] sm:$0xff]
      %v2191 = vld [vmem:[#allocation3 + $0x21] sm:$0xff]
      %v2192 = vld [vmem:[#allocation3 + $0x29] sm:$0xff]
      %v2193 = vld [vmem:[#allocation3 + $0x31] sm:$0xff]
      %v2194 = vld [vmem:[#allocation3 + $0x39] sm:$0xff]
      %v2195 = vld [vmem:[#allocation3 + $0x41] sm:$0xff]
      %v2196 = vld [vmem:[#allocation3 + $0x49] sm:$0xff]
      %v2197 = vld [vmem:[#allocation3 + $0x51] sm:$0xff]
      %v2198 = vld [vmem:[#allocation3 + $0x59] sm:$0xff]
      %v2199 = vld [vmem:[#allocation3 + $0x61] sm:$0xff]
      %v2200 = vld [vmem:[#allocation3 + $0x69] sm:$0xff]
      %v2201 = vld [vmem:[#allocation3 + $0x71] sm:$0xff]
      %v2202 = vld [vmem:[#allocation3 + $0x79] sm:$0xff]
      %v2203 = vld [vmem:[#allocation3 + $0x81] sm:$0xff]
      %v2204 = vld [vmem:[#allocation3 + $0x89] sm:$0xff]
      %v2205 = vld [vmem:[#allocation3 + $0x91] sm:$0xff]
      %v2206 = vld [vmem:[#allocation3 + $0x99] sm:$0xff]
      %v2207 = vld [vmem:[#allocation3 + $0xa1] sm:$0xff]
      %v2209 = vsel %vm235, %v2188, 0
      %v2212 = vsel %vm235, %v2189, 0
      %v2215 = vsel %vm235, %v2190, 0
      %v2218 = vsel %vm235, %v2191, 0
      %v2221 = vsel %vm235, %v2192, 0
      %v2224 = vsel %vm235, %v2193, 0
      %v2227 = vsel %vm235, %v2194, 0
      %v2230 = vsel %vm235, %v2195, 0
      %v2233 = vsel %vm235, %v2196, 0
      %v2236 = vsel %vm235, %v2197, 0
      %v2239 = vsel %vm235, %v2198, 0
      %v2242 = vsel %vm235, %v2199, 0
      %v2245 = vsel %vm235, %v2200, 0
      %v2248 = vsel %vm235, %v2201, 0
      %v2251 = vsel %vm235, %v2202, 0
      %v2254 = vsel %vm235, %v2203, 0
      %v2257 = vsel %vm235, %v2204, 0
      %v2260 = vsel %vm235, %v2205, 0
      %v2263 = vsel %vm235, %v2206, 0
      %v2266 = vsel %vm235, %v2207, 0
      %2268 = vmatpush.msra.mxu0 0.0
      %2269 = vmatpush.msra.mxu0 0.0
      %2270 = vmatpush.msra.mxu0 0.0
      %2271 = vmatpush.msra.mxu0 0.0
      %2272 = vmatpush.msra.mxu0 0.0
      %2273 = vmatpush.msra.mxu0 0.0
      %2274 = vmatpush.msra.mxu0 0.0
      %2275 = vmatpush.msra.mxu0 0.0
      %2276 = vmatpush.msra.mxu0 0.0
      %2277 = vmatpush.msra.mxu0 0.0
      %2278 = vmatpush.msra.mxu0 0.0
      %2279 = vmatpush.msra.mxu0 0.0
      %2280 = vmatpush.msra.mxu0 0.0
      %2281 = vmatpush.msra.mxu0 0.0
      %2282 = vmatpush.msra.mxu0 0.0
      %2283 = vmatpush.msra.mxu0 %v2182
      %2284 = vmatmul.f32.gmra.mxu0 %v2209
      %v2285 = vpop.f32.mrf.mxu0
      %v2286 = vadd.f32 0.0, %v2285
      %2287 = vmatmul.f32.gmra.mxu0 %v2212
      %v2288 = vpop.f32.mrf.mxu0
      %v2289 = vadd.f32 0.0, %v2288
      %2290 = vmatmul.f32.gmra.mxu0 %v2215
      %v2291 = vpop.f32.mrf.mxu0
      %v2292 = vadd.f32 0.0, %v2291
      %2293 = vmatmul.f32.gmra.mxu0 %v2218
      %v2294 = vpop.f32.mrf.mxu0
      %v2295 = vadd.f32 0.0, %v2294
      %2296 = vmatmul.f32.gmra.mxu0 %v2221
      %v2297 = vpop.f32.mrf.mxu0
      %v2298 = vadd.f32 0.0, %v2297
      %2299 = vmatmul.f32.gmra.mxu0 %v2224
      %v2300 = vpop.f32.mrf.mxu0
      %v2301 = vadd.f32 0.0, %v2300
      %2302 = vmatmul.f32.gmra.mxu0 %v2227
      %v2303 = vpop.f32.mrf.mxu0
      %v2304 = vadd.f32 0.0, %v2303
      %2305 = vmatmul.f32.gmra.mxu0 %v2230
      %v2306 = vpop.f32.mrf.mxu0
      %v2307 = vadd.f32 0.0, %v2306
      %2308 = vmatmul.f32.gmra.mxu0 %v2233
      %v2309 = vpop.f32.mrf.mxu0
      %v2310 = vadd.f32 0.0, %v2309
      %2311 = vmatmul.f32.gmra.mxu0 %v2236
      %v2312 = vpop.f32.mrf.mxu0
      %v2313 = vadd.f32 0.0, %v2312
      %2314 = vmatmul.f32.gmra.mxu0 %v2239
      %v2315 = vpop.f32.mrf.mxu0
      %v2316 = vadd.f32 0.0, %v2315
      %2317 = vmatmul.f32.gmra.mxu0 %v2242
      %v2318 = vpop.f32.mrf.mxu0
      %v2319 = vadd.f32 0.0, %v2318
      %2320 = vmatmul.f32.gmra.mxu0 %v2245
      %v2321 = vpop.f32.mrf.mxu0
      %v2322 = vadd.f32 0.0, %v2321
      %2323 = vmatmul.f32.gmra.mxu0 %v2248
      %v2324 = vpop.f32.mrf.mxu0
      %v2325 = vadd.f32 0.0, %v2324
      %2326 = vmatmul.f32.gmra.mxu0 %v2251
      %v2327 = vpop.f32.mrf.mxu0
      %v2328 = vadd.f32 0.0, %v2327
      %2329 = vmatmul.f32.gmra.mxu0 %v2254
      %v2330 = vpop.f32.mrf.mxu0
      %v2331 = vadd.f32 0.0, %v2330
      %2332 = vmatmul.f32.gmra.mxu0 %v2257
      %v2333 = vpop.f32.mrf.mxu0
      %v2334 = vadd.f32 0.0, %v2333
      %2335 = vmatmul.f32.gmra.mxu0 %v2260
      %v2336 = vpop.f32.mrf.mxu0
      %v2337 = vadd.f32 0.0, %v2336
      %2338 = vmatmul.f32.gmra.mxu0 %v2263
      %v2339 = vpop.f32.mrf.mxu0
      %v2340 = vadd.f32 0.0, %v2339
      %2341 = vmatmul.f32.gmra.mxu0 %v2266
      %v2342 = vpop.f32.mrf.mxu0
      %v2343 = vadd.f32 0.0, %v2342
      %2344 = vdwg.mxu0
      %v2346 = vsel %vm235, %v2187, 0
      %2348 = vmatpush.msra.mxu0 0.0
      %2349 = vmatpush.msra.mxu0 0.0
      %2350 = vmatpush.msra.mxu0 0.0
      %2351 = vmatpush.msra.mxu0 0.0
      %2352 = vmatpush.msra.mxu0 0.0
      %2353 = vmatpush.msra.mxu0 0.0
      %2354 = vmatpush.msra.mxu0 0.0
      %2355 = vmatpush.msra.mxu0 0.0
      %2356 = vmatpush.msra.mxu0 0.0
      %2357 = vmatpush.msra.mxu0 0.0
      %2358 = vmatpush.msra.mxu0 0.0
      %2359 = vmatpush.msra.mxu0 0.0
      %2360 = vmatpush.msra.mxu0 0.0
      %2361 = vmatpush.msra.mxu0 0.0
      %2362 = vmatpush.msra.mxu0 0.0
      %2363 = vmatpush.msra.mxu0 %v2179
      %2364 = vmatmul.f32.gmra.mxu0 %v2346
      %v2365 = vpop.f32.mrf.mxu0
      %v2366 = vadd.f32 %v2286, %v2365
      %2367 = vmatmul.f32.gmra.mxu0 %v2209
      %v2368 = vpop.f32.mrf.mxu0
      %v2369 = vadd.f32 %v2289, %v2368
      %2370 = vmatmul.f32.gmra.mxu0 %v2212
      %v2371 = vpop.f32.mrf.mxu0
      %v2372 = vadd.f32 %v2292, %v2371
      %2373 = vmatmul.f32.gmra.mxu0 %v2215
      %v2374 = vpop.f32.mrf.mxu0
      %v2375 = vadd.f32 %v2295, %v2374
      %2376 = vmatmul.f32.gmra.mxu0 %v2218
      %v2377 = vpop.f32.mrf.mxu0
      %v2378 = vadd.f32 %v2298, %v2377
      %2379 = vmatmul.f32.gmra.mxu0 %v2221
      %v2380 = vpop.f32.mrf.mxu0
      %v2381 = vadd.f32 %v2301, %v2380
      %2382 = vmatmul.f32.gmra.mxu0 %v2224
      %v2383 = vpop.f32.mrf.mxu0
      %v2384 = vadd.f32 %v2304, %v2383
      %2385 = vmatmul.f32.gmra.mxu0 %v2227
      %v2386 = vpop.f32.mrf.mxu0
      %v2387 = vadd.f32 %v2307, %v2386
      %2388 = vmatmul.f32.gmra.mxu0 %v2230
      %v2389 = vpop.f32.mrf.mxu0
      %v2390 = vadd.f32 %v2310, %v2389
      %2391 = vmatmul.f32.gmra.mxu0 %v2233
      %v2392 = vpop.f32.mrf.mxu0
      %v2393 = vadd.f32 %v2313, %v2392
      %2394 = vmatmul.f32.gmra.mxu0 %v2236
      %v2395 = vpop.f32.mrf.mxu0
      %v2396 = vadd.f32 %v2316, %v2395
      %2397 = vmatmul.f32.gmra.mxu0 %v2239
      %v2398 = vpop.f32.mrf.mxu0
      %v2399 = vadd.f32 %v2319, %v2398
      %2400 = vmatmul.f32.gmra.mxu0 %v2242
      %v2401 = vpop.f32.mrf.mxu0
      %v2402 = vadd.f32 %v2322, %v2401
      %2403 = vmatmul.f32.gmra.mxu0 %v2245
      %v2404 = vpop.f32.mrf.mxu0
      %v2405 = vadd.f32 %v2325, %v2404
      %2406 = vmatmul.f32.gmra.mxu0 %v2248
      %v2407 = vpop.f32.mrf.mxu0
      %v2408 = vadd.f32 %v2328, %v2407
      %2409 = vmatmul.f32.gmra.mxu0 %v2251
      %v2410 = vpop.f32.mrf.mxu0
      %v2411 = vadd.f32 %v2331, %v2410
      %2412 = vmatmul.f32.gmra.mxu0 %v2254
      %v2413 = vpop.f32.mrf.mxu0
      %v2414 = vadd.f32 %v2334, %v2413
      %2415 = vmatmul.f32.gmra.mxu0 %v2257
      %v2416 = vpop.f32.mrf.mxu0
      %v2417 = vadd.f32 %v2337, %v2416
      %2418 = vmatmul.f32.gmra.mxu0 %v2260
      %v2419 = vpop.f32.mrf.mxu0
      %v2420 = vadd.f32 %v2340, %v2419
      %2421 = vmatmul.f32.gmra.mxu0 %v2263
      %v2422 = vpop.f32.mrf.mxu0
      %v2423 = vadd.f32 %v2343, %v2422
      %2424 = vdwg.mxu0
      %v2425 = vld [vmem:[#allocation3 + $0x11] sm:$0xff]
      %v2426 = vld [vmem:[#allocation3 + $0x19] sm:$0xff]
      %v2427 = vld [vmem:[#allocation3 + $0x21] sm:$0xff]
      %v2428 = vld [vmem:[#allocation3 + $0x29] sm:$0xff]
      %v2429 = vld [vmem:[#allocation3 + $0x31] sm:$0xff]
      %v2430 = vld [vmem:[#allocation3 + $0x39] sm:$0xff]
      %v2431 = vld [vmem:[#allocation3 + $0x41] sm:$0xff]
      %v2432 = vld [vmem:[#allocation3 + $0x49] sm:$0xff]
      %v2433 = vld [vmem:[#allocation3 + $0x51] sm:$0xff]
      %v2434 = vld [vmem:[#allocation3 + $0x59] sm:$0xff]
      %v2435 = vld [vmem:[#allocation3 + $0x61] sm:$0xff]
      %v2436 = vld [vmem:[#allocation3 + $0x69] sm:$0xff]
      %v2437 = vld [vmem:[#allocation3 + $0x71] sm:$0xff]
      %v2438 = vld [vmem:[#allocation3 + $0x79] sm:$0xff]
      %v2439 = vld [vmem:[#allocation3 + $0x81] sm:$0xff]
      %v2440 = vld [vmem:[#allocation3 + $0x89] sm:$0xff]
      %v2441 = vld [vmem:[#allocation3 + $0x91] sm:$0xff]
      %v2442 = vld [vmem:[#allocation3 + $0x99] sm:$0xff]
      %v2443 = vld [vmem:[#allocation3 + $0xa1] sm:$0xff]
      %v2444 = vld [vmem:[#allocation3 + $0xa9] sm:$0xff]
      %v2446 = vsel %vm235, %v2425, 0
      %v2449 = vsel %vm235, %v2426, 0
      %v2452 = vsel %vm235, %v2427, 0
      %v2455 = vsel %vm235, %v2428, 0
      %v2458 = vsel %vm235, %v2429, 0
      %v2461 = vsel %vm235, %v2430, 0
      %v2464 = vsel %vm235, %v2431, 0
      %v2467 = vsel %vm235, %v2432, 0
      %v2470 = vsel %vm235, %v2433, 0
      %v2473 = vsel %vm235, %v2434, 0
      %v2476 = vsel %vm235, %v2435, 0
      %v2479 = vsel %vm235, %v2436, 0
      %v2482 = vsel %vm235, %v2437, 0
      %v2485 = vsel %vm235, %v2438, 0
      %v2488 = vsel %vm235, %v2439, 0
      %v2491 = vsel %vm235, %v2440, 0
      %v2494 = vsel %vm235, %v2441, 0
      %v2497 = vsel %vm235, %v2442, 0
      %v2500 = vsel %vm235, %v2443, 0
      %v2503 = vsel %vm235, %v2444, 0
      %2505 = vmatpush.msra.mxu0 0.0
      %2506 = vmatpush.msra.mxu0 0.0
      %2507 = vmatpush.msra.mxu0 0.0
      %2508 = vmatpush.msra.mxu0 0.0
      %2509 = vmatpush.msra.mxu0 0.0
      %2510 = vmatpush.msra.mxu0 0.0
      %2511 = vmatpush.msra.mxu0 0.0
      %2512 = vmatpush.msra.mxu0 0.0
      %2513 = vmatpush.msra.mxu0 0.0
      %2514 = vmatpush.msra.mxu0 0.0
      %2515 = vmatpush.msra.mxu0 0.0
      %2516 = vmatpush.msra.mxu0 0.0
      %2517 = vmatpush.msra.mxu0 0.0
      %2518 = vmatpush.msra.mxu0 0.0
      %2519 = vmatpush.msra.mxu0 0.0
      %2520 = vmatpush.msra.mxu0 %v2185
      %2521 = vmatmul.f32.gmra.mxu0 %v2446
      %v2522 = vpop.f32.mrf.mxu0
      %v2523 = vadd.f32 0.0, %v2522
      %2524 = vmatmul.f32.gmra.mxu0 %v2449
      %v2525 = vpop.f32.mrf.mxu0
      %v2526 = vadd.f32 0.0, %v2525
      %2527 = vmatmul.f32.gmra.mxu0 %v2452
      %v2528 = vpop.f32.mrf.mxu0
      %v2529 = vadd.f32 0.0, %v2528
      %2530 = vmatmul.f32.gmra.mxu0 %v2455
      %v2531 = vpop.f32.mrf.mxu0
      %v2532 = vadd.f32 0.0, %v2531
      %2533 = vmatmul.f32.gmra.mxu0 %v2458
      %v2534 = vpop.f32.mrf.mxu0
      %v2535 = vadd.f32 0.0, %v2534
      %2536 = vmatmul.f32.gmra.mxu0 %v2461
      %v2537 = vpop.f32.mrf.mxu0
      %v2538 = vadd.f32 0.0, %v2537
      %2539 = vmatmul.f32.gmra.mxu0 %v2464
      %v2540 = vpop.f32.mrf.mxu0
      %v2541 = vadd.f32 0.0, %v2540
      %2542 = vmatmul.f32.gmra.mxu0 %v2467
      %v2543 = vpop.f32.mrf.mxu0
      %v2544 = vadd.f32 0.0, %v2543
      %2545 = vmatmul.f32.gmra.mxu0 %v2470
      %v2546 = vpop.f32.mrf.mxu0
      %v2547 = vadd.f32 0.0, %v2546
      %2548 = vmatmul.f32.gmra.mxu0 %v2473
      %v2549 = vpop.f32.mrf.mxu0
      %v2550 = vadd.f32 0.0, %v2549
      %2551 = vmatmul.f32.gmra.mxu0 %v2476
      %v2552 = vpop.f32.mrf.mxu0
      %v2553 = vadd.f32 0.0, %v2552
      %2554 = vmatmul.f32.gmra.mxu0 %v2479
      %v2555 = vpop.f32.mrf.mxu0
      %v2556 = vadd.f32 0.0, %v2555
      %2557 = vmatmul.f32.gmra.mxu0 %v2482
      %v2558 = vpop.f32.mrf.mxu0
      %v2559 = vadd.f32 0.0, %v2558
      %2560 = vmatmul.f32.gmra.mxu0 %v2485
      %v2561 = vpop.f32.mrf.mxu0
      %v2562 = vadd.f32 0.0, %v2561
      %2563 = vmatmul.f32.gmra.mxu0 %v2488
      %v2564 = vpop.f32.mrf.mxu0
      %v2565 = vadd.f32 0.0, %v2564
      %2566 = vmatmul.f32.gmra.mxu0 %v2491
      %v2567 = vpop.f32.mrf.mxu0
      %v2568 = vadd.f32 0.0, %v2567
      %2569 = vmatmul.f32.gmra.mxu0 %v2494
      %v2570 = vpop.f32.mrf.mxu0
      %v2571 = vadd.f32 0.0, %v2570
      %2572 = vmatmul.f32.gmra.mxu0 %v2497
      %v2573 = vpop.f32.mrf.mxu0
      %v2574 = vadd.f32 0.0, %v2573
      %2575 = vmatmul.f32.gmra.mxu0 %v2500
      %v2576 = vpop.f32.mrf.mxu0
      %v2577 = vadd.f32 0.0, %v2576
      %2578 = vmatmul.f32.gmra.mxu0 %v2503
      %v2579 = vpop.f32.mrf.mxu0
      %v2580 = vadd.f32 0.0, %v2579
      %2581 = vdwg.mxu0
      %v2582 = vadd.f32 %v2366, %v2523
      %v2583 = vadd.f32 %v2369, %v2526
      %v2584 = vadd.f32 %v2372, %v2529
      %v2585 = vadd.f32 %v2375, %v2532
      %v2586 = vadd.f32 %v2378, %v2535
      %v2587 = vadd.f32 %v2381, %v2538
      %v2588 = vadd.f32 %v2384, %v2541
      %v2589 = vadd.f32 %v2387, %v2544
      %v2590 = vadd.f32 %v2390, %v2547
      %v2591 = vadd.f32 %v2393, %v2550
      %v2592 = vadd.f32 %v2396, %v2553
      %v2593 = vadd.f32 %v2399, %v2556
      %v2594 = vadd.f32 %v2402, %v2559
      %v2595 = vadd.f32 %v2405, %v2562
      %v2596 = vadd.f32 %v2408, %v2565
      %v2597 = vadd.f32 %v2411, %v2568
      %v2598 = vadd.f32 %v2414, %v2571
      %v2599 = vadd.f32 %v2417, %v2574
      %v2600 = vadd.f32 %v2420, %v2577
      %v2601 = vadd.f32 %v2423, %v2580
      %v2602 = vld [vmem:[#allocation3] sm:$0xff]
      %v2603 = vld [vmem:[#allocation3 + $0x8] sm:$0xff]
      %v2604 = vld [vmem:[#allocation3 + $0x10] sm:$0xff]
      %v2605 = vld [vmem:[#allocation3 + $0x18] sm:$0xff]
      %v2606 = vld [vmem:[#allocation3 + $0x20] sm:$0xff]
      %v2607 = vld [vmem:[#allocation3 + $0x28] sm:$0xff]
      %v2608 = vld [vmem:[#allocation3 + $0x30] sm:$0xff]
      %v2609 = vld [vmem:[#allocation3 + $0x38] sm:$0xff]
      %v2610 = vld [vmem:[#allocation3 + $0x40] sm:$0xff]
      %v2611 = vld [vmem:[#allocation3 + $0x48] sm:$0xff]
      %v2612 = vld [vmem:[#allocation3 + $0x50] sm:$0xff]
      %v2613 = vld [vmem:[#allocation3 + $0x58] sm:$0xff]
      %v2614 = vld [vmem:[#allocation3 + $0x60] sm:$0xff]
      %v2615 = vld [vmem:[#allocation3 + $0x68] sm:$0xff]
      %v2616 = vld [vmem:[#allocation3 + $0x70] sm:$0xff]
      %v2617 = vld [vmem:[#allocation3 + $0x78] sm:$0xff]
      %v2618 = vld [vmem:[#allocation3 + $0x80] sm:$0xff]
      %v2619 = vld [vmem:[#allocation3 + $0x88] sm:$0xff]
      %v2620 = vld [vmem:[#allocation3 + $0x90] sm:$0xff]
      %v2621 = vld [vmem:[#allocation3 + $0x98] sm:$0xff]
      %v2622 = vld [vmem:[#allocation3 + $0xa0] sm:$0xff]
      %v2624 = vsel %vm235, %v2603, 0
      %v2627 = vsel %vm235, %v2604, 0
      %v2630 = vsel %vm235, %v2605, 0
      %v2633 = vsel %vm235, %v2606, 0
      %v2636 = vsel %vm235, %v2607, 0
      %v2639 = vsel %vm235, %v2608, 0
      %v2642 = vsel %vm235, %v2609, 0
      %v2645 = vsel %vm235, %v2610, 0
      %v2648 = vsel %vm235, %v2611, 0
      %v2651 = vsel %vm235, %v2612, 0
      %v2654 = vsel %vm235, %v2613, 0
      %v2657 = vsel %vm235, %v2614, 0
      %v2660 = vsel %vm235, %v2615, 0
      %v2663 = vsel %vm235, %v2616, 0
      %v2666 = vsel %vm235, %v2617, 0
      %v2669 = vsel %vm235, %v2618, 0
      %v2672 = vsel %vm235, %v2619, 0
      %v2675 = vsel %vm235, %v2620, 0
      %v2678 = vsel %vm235, %v2621, 0
      %v2681 = vsel %vm235, %v2622, 0
      %2683 = vmatpush.msra.mxu0 0.0
      %2684 = vmatpush.msra.mxu0 0.0
      %2685 = vmatpush.msra.mxu0 0.0
      %2686 = vmatpush.msra.mxu0 0.0
      %2687 = vmatpush.msra.mxu0 0.0
      %2688 = vmatpush.msra.mxu0 0.0
      %2689 = vmatpush.msra.mxu0 0.0
      %2690 = vmatpush.msra.mxu0 0.0
      %2691 = vmatpush.msra.mxu0 0.0
      %2692 = vmatpush.msra.mxu0 0.0
      %2693 = vmatpush.msra.mxu0 0.0
      %2694 = vmatpush.msra.mxu0 0.0
      %2695 = vmatpush.msra.mxu0 0.0
      %2696 = vmatpush.msra.mxu0 0.0
      %2697 = vmatpush.msra.mxu0 0.0
      %2698 = vmatpush.msra.mxu0 %v2181
      %2699 = vmatmul.f32.gmra.mxu0 %v2624
      %v2700 = vpop.f32.mrf.mxu0
      %v2701 = vadd.f32 0.0, %v2700
      %2702 = vmatmul.f32.gmra.mxu0 %v2627
      %v2703 = vpop.f32.mrf.mxu0
      %v2704 = vadd.f32 0.0, %v2703
      %2705 = vmatmul.f32.gmra.mxu0 %v2630
      %v2706 = vpop.f32.mrf.mxu0
      %v2707 = vadd.f32 0.0, %v2706
      %2708 = vmatmul.f32.gmra.mxu0 %v2633
      %v2709 = vpop.f32.mrf.mxu0
      %v2710 = vadd.f32 0.0, %v2709
      %2711 = vmatmul.f32.gmra.mxu0 %v2636
      %v2712 = vpop.f32.mrf.mxu0
      %v2713 = vadd.f32 0.0, %v2712
      %2714 = vmatmul.f32.gmra.mxu0 %v2639
      %v2715 = vpop.f32.mrf.mxu0
      %v2716 = vadd.f32 0.0, %v2715
      %2717 = vmatmul.f32.gmra.mxu0 %v2642
      %v2718 = vpop.f32.mrf.mxu0
      %v2719 = vadd.f32 0.0, %v2718
      %2720 = vmatmul.f32.gmra.mxu0 %v2645
      %v2721 = vpop.f32.mrf.mxu0
      %v2722 = vadd.f32 0.0, %v2721
      %2723 = vmatmul.f32.gmra.mxu0 %v2648
      %v2724 = vpop.f32.mrf.mxu0
      %v2725 = vadd.f32 0.0, %v2724
      %2726 = vmatmul.f32.gmra.mxu0 %v2651
      %v2727 = vpop.f32.mrf.mxu0
      %v2728 = vadd.f32 0.0, %v2727
      %2729 = vmatmul.f32.gmra.mxu0 %v2654
      %v2730 = vpop.f32.mrf.mxu0
      %v2731 = vadd.f32 0.0, %v2730
      %2732 = vmatmul.f32.gmra.mxu0 %v2657
      %v2733 = vpop.f32.mrf.mxu0
      %v2734 = vadd.f32 0.0, %v2733
      %2735 = vmatmul.f32.gmra.mxu0 %v2660
      %v2736 = vpop.f32.mrf.mxu0
      %v2737 = vadd.f32 0.0, %v2736
      %2738 = vmatmul.f32.gmra.mxu0 %v2663
      %v2739 = vpop.f32.mrf.mxu0
      %v2740 = vadd.f32 0.0, %v2739
      %2741 = vmatmul.f32.gmra.mxu0 %v2666
      %v2742 = vpop.f32.mrf.mxu0
      %v2743 = vadd.f32 0.0, %v2742
      %2744 = vmatmul.f32.gmra.mxu0 %v2669
      %v2745 = vpop.f32.mrf.mxu0
      %v2746 = vadd.f32 0.0, %v2745
      %2747 = vmatmul.f32.gmra.mxu0 %v2672
      %v2748 = vpop.f32.mrf.mxu0
      %v2749 = vadd.f32 0.0, %v2748
      %2750 = vmatmul.f32.gmra.mxu0 %v2675
      %v2751 = vpop.f32.mrf.mxu0
      %v2752 = vadd.f32 0.0, %v2751
      %2753 = vmatmul.f32.gmra.mxu0 %v2678
      %v2754 = vpop.f32.mrf.mxu0
      %v2755 = vadd.f32 0.0, %v2754
      %2756 = vmatmul.f32.gmra.mxu0 %v2681
      %v2757 = vpop.f32.mrf.mxu0
      %v2758 = vadd.f32 0.0, %v2757
      %2759 = vdwg.mxu0
      %v2761 = vsel %vm235, %v2602, 0
      %2763 = vmatpush.msra.mxu0 0.0
      %2764 = vmatpush.msra.mxu0 0.0
      %2765 = vmatpush.msra.mxu0 0.0
      %2766 = vmatpush.msra.mxu0 0.0
      %2767 = vmatpush.msra.mxu0 0.0
      %2768 = vmatpush.msra.mxu0 0.0
      %2769 = vmatpush.msra.mxu0 0.0
      %2770 = vmatpush.msra.mxu0 0.0
      %2771 = vmatpush.msra.mxu0 0.0
      %2772 = vmatpush.msra.mxu0 0.0
      %2773 = vmatpush.msra.mxu0 0.0
      %2774 = vmatpush.msra.mxu0 0.0
      %2775 = vmatpush.msra.mxu0 0.0
      %2776 = vmatpush.msra.mxu0 0.0
      %2777 = vmatpush.msra.mxu0 0.0
      %2778 = vmatpush.msra.mxu0 %v2178
      %2779 = vmatmul.f32.gmra.mxu0 %v2761
      %v2780 = vpop.f32.mrf.mxu0
      %v2781 = vadd.f32 %v2701, %v2780
      %2782 = vmatmul.f32.gmra.mxu0 %v2624
      %v2783 = vpop.f32.mrf.mxu0
      %v2784 = vadd.f32 %v2704, %v2783
      %2785 = vmatmul.f32.gmra.mxu0 %v2627
      %v2786 = vpop.f32.mrf.mxu0
      %v2787 = vadd.f32 %v2707, %v2786
      %2788 = vmatmul.f32.gmra.mxu0 %v2630
      %v2789 = vpop.f32.mrf.mxu0
      %v2790 = vadd.f32 %v2710, %v2789
      %2791 = vmatmul.f32.gmra.mxu0 %v2633
      %v2792 = vpop.f32.mrf.mxu0
      %v2793 = vadd.f32 %v2713, %v2792
      %2794 = vmatmul.f32.gmra.mxu0 %v2636
      %v2795 = vpop.f32.mrf.mxu0
      %v2796 = vadd.f32 %v2716, %v2795
      %2797 = vmatmul.f32.gmra.mxu0 %v2639
      %v2798 = vpop.f32.mrf.mxu0
      %v2799 = vadd.f32 %v2719, %v2798
      %2800 = vmatmul.f32.gmra.mxu0 %v2642
      %v2801 = vpop.f32.mrf.mxu0
      %v2802 = vadd.f32 %v2722, %v2801
      %2803 = vmatmul.f32.gmra.mxu0 %v2645
      %v2804 = vpop.f32.mrf.mxu0
      %v2805 = vadd.f32 %v2725, %v2804
      %2806 = vmatmul.f32.gmra.mxu0 %v2648
      %v2807 = vpop.f32.mrf.mxu0
      %v2808 = vadd.f32 %v2728, %v2807
      %2809 = vmatmul.f32.gmra.mxu0 %v2651
      %v2810 = vpop.f32.mrf.mxu0
      %v2811 = vadd.f32 %v2731, %v2810
      %2812 = vmatmul.f32.gmra.mxu0 %v2654
      %v2813 = vpop.f32.mrf.mxu0
      %v2814 = vadd.f32 %v2734, %v2813
      %2815 = vmatmul.f32.gmra.mxu0 %v2657
      %v2816 = vpop.f32.mrf.mxu0
      %v2817 = vadd.f32 %v2737, %v2816
      %2818 = vmatmul.f32.gmra.mxu0 %v2660
      %v2819 = vpop.f32.mrf.mxu0
      %v2820 = vadd.f32 %v2740, %v2819
      %2821 = vmatmul.f32.gmra.mxu0 %v2663
      %v2822 = vpop.f32.mrf.mxu0
      %v2823 = vadd.f32 %v2743, %v2822
      %2824 = vmatmul.f32.gmra.mxu0 %v2666
      %v2825 = vpop.f32.mrf.mxu0
      %v2826 = vadd.f32 %v2746, %v2825
      %2827 = vmatmul.f32.gmra.mxu0 %v2669
      %v2828 = vpop.f32.mrf.mxu0
      %v2829 = vadd.f32 %v2749, %v2828
      %2830 = vmatmul.f32.gmra.mxu0 %v2672
      %v2831 = vpop.f32.mrf.mxu0
      %v2832 = vadd.f32 %v2752, %v2831
      %2833 = vmatmul.f32.gmra.mxu0 %v2675
      %v2834 = vpop.f32.mrf.mxu0
      %v2835 = vadd.f32 %v2755, %v2834
      %2836 = vmatmul.f32.gmra.mxu0 %v2678
      %v2837 = vpop.f32.mrf.mxu0
      %v2838 = vadd.f32 %v2758, %v2837
      %2839 = vdwg.mxu0
      %v2840 = vld [vmem:[#allocation3 + $0x10] sm:$0xff]
      %v2841 = vld [vmem:[#allocation3 + $0x18] sm:$0xff]
      %v2842 = vld [vmem:[#allocation3 + $0x20] sm:$0xff]
      %v2843 = vld [vmem:[#allocation3 + $0x28] sm:$0xff]
      %v2844 = vld [vmem:[#allocation3 + $0x30] sm:$0xff]
      %v2845 = vld [vmem:[#allocation3 + $0x38] sm:$0xff]
      %v2846 = vld [vmem:[#allocation3 + $0x40] sm:$0xff]
      %v2847 = vld [vmem:[#allocation3 + $0x48] sm:$0xff]
      %v2848 = vld [vmem:[#allocation3 + $0x50] sm:$0xff]
      %v2849 = vld [vmem:[#allocation3 + $0x58] sm:$0xff]
      %v2850 = vld [vmem:[#allocation3 + $0x60] sm:$0xff]
      %v2851 = vld [vmem:[#allocation3 + $0x68] sm:$0xff]
      %v2852 = vld [vmem:[#allocation3 + $0x70] sm:$0xff]
      %v2853 = vld [vmem:[#allocation3 + $0x78] sm:$0xff]
      %v2854 = vld [vmem:[#allocation3 + $0x80] sm:$0xff]
      %v2855 = vld [vmem:[#allocation3 + $0x88] sm:$0xff]
      %v2856 = vld [vmem:[#allocation3 + $0x90] sm:$0xff]
      %v2857 = vld [vmem:[#allocation3 + $0x98] sm:$0xff]
      %v2858 = vld [vmem:[#allocation3 + $0xa0] sm:$0xff]
      %v2859 = vld [vmem:[#allocation3 + $0xa8] sm:$0xff]
      %v2861 = vsel %vm235, %v2840, 0
      %v2864 = vsel %vm235, %v2841, 0
      %v2867 = vsel %vm235, %v2842, 0
      %v2870 = vsel %vm235, %v2843, 0
      %v2873 = vsel %vm235, %v2844, 0
      %v2876 = vsel %vm235, %v2845, 0
      %v2879 = vsel %vm235, %v2846, 0
      %v2882 = vsel %vm235, %v2847, 0
      %v2885 = vsel %vm235, %v2848, 0
      %v2888 = vsel %vm235, %v2849, 0
      %v2891 = vsel %vm235, %v2850, 0
      %v2894 = vsel %vm235, %v2851, 0
      %v2897 = vsel %vm235, %v2852, 0
      %v2900 = vsel %vm235, %v2853, 0
      %v2903 = vsel %vm235, %v2854, 0
      %v2906 = vsel %vm235, %v2855, 0
      %v2909 = vsel %vm235, %v2856, 0
      %v2912 = vsel %vm235, %v2857, 0
      %v2915 = vsel %vm235, %v2858, 0
      %v2918 = vsel %vm235, %v2859, 0
      %2920 = vmatpush.msra.mxu0 0.0
      %2921 = vmatpush.msra.mxu0 0.0
      %2922 = vmatpush.msra.mxu0 0.0
      %2923 = vmatpush.msra.mxu0 0.0
      %2924 = vmatpush.msra.mxu0 0.0
      %2925 = vmatpush.msra.mxu0 0.0
      %2926 = vmatpush.msra.mxu0 0.0
      %2927 = vmatpush.msra.mxu0 0.0
      %2928 = vmatpush.msra.mxu0 0.0
      %2929 = vmatpush.msra.mxu0 0.0
      %2930 = vmatpush.msra.mxu0 0.0
      %2931 = vmatpush.msra.mxu0 0.0
      %2932 = vmatpush.msra.mxu0 0.0
      %2933 = vmatpush.msra.mxu0 0.0
      %2934 = vmatpush.msra.mxu0 0.0
      %2935 = vmatpush.msra.mxu0 %v2184
      %2936 = vmatmul.f32.gmra.mxu0 %v2861
      %v2937 = vpop.f32.mrf.mxu0
      %v2938 = vadd.f32 0.0, %v2937
      %2939 = vmatmul.f32.gmra.mxu0 %v2864
      %v2940 = vpop.f32.mrf.mxu0
      %v2941 = vadd.f32 0.0, %v2940
      %2942 = vmatmul.f32.gmra.mxu0 %v2867
      %v2943 = vpop.f32.mrf.mxu0
      %v2944 = vadd.f32 0.0, %v2943
      %2945 = vmatmul.f32.gmra.mxu0 %v2870
      %v2946 = vpop.f32.mrf.mxu0
      %v2947 = vadd.f32 0.0, %v2946
      %2948 = vmatmul.f32.gmra.mxu0 %v2873
      %v2949 = vpop.f32.mrf.mxu0
      %v2950 = vadd.f32 0.0, %v2949
      %2951 = vmatmul.f32.gmra.mxu0 %v2876
      %v2952 = vpop.f32.mrf.mxu0
      %v2953 = vadd.f32 0.0, %v2952
      %2954 = vmatmul.f32.gmra.mxu0 %v2879
      %v2955 = vpop.f32.mrf.mxu0
      %v2956 = vadd.f32 0.0, %v2955
      %2957 = vmatmul.f32.gmra.mxu0 %v2882
      %v2958 = vpop.f32.mrf.mxu0
      %v2959 = vadd.f32 0.0, %v2958
      %2960 = vmatmul.f32.gmra.mxu0 %v2885
      %v2961 = vpop.f32.mrf.mxu0
      %v2962 = vadd.f32 0.0, %v2961
      %2963 = vmatmul.f32.gmra.mxu0 %v2888
      %v2964 = vpop.f32.mrf.mxu0
      %v2965 = vadd.f32 0.0, %v2964
      %2966 = vmatmul.f32.gmra.mxu0 %v2891
      %v2967 = vpop.f32.mrf.mxu0
      %v2968 = vadd.f32 0.0, %v2967
      %2969 = vmatmul.f32.gmra.mxu0 %v2894
      %v2970 = vpop.f32.mrf.mxu0
      %v2971 = vadd.f32 0.0, %v2970
      %2972 = vmatmul.f32.gmra.mxu0 %v2897
      %v2973 = vpop.f32.mrf.mxu0
      %v2974 = vadd.f32 0.0, %v2973
      %2975 = vmatmul.f32.gmra.mxu0 %v2900
      %v2976 = vpop.f32.mrf.mxu0
      %v2977 = vadd.f32 0.0, %v2976
      %2978 = vmatmul.f32.gmra.mxu0 %v2903
      %v2979 = vpop.f32.mrf.mxu0
      %v2980 = vadd.f32 0.0, %v2979
      %2981 = vmatmul.f32.gmra.mxu0 %v2906
      %v2982 = vpop.f32.mrf.mxu0
      %v2983 = vadd.f32 0.0, %v2982
      %2984 = vmatmul.f32.gmra.mxu0 %v2909
      %v2985 = vpop.f32.mrf.mxu0
      %v2986 = vadd.f32 0.0, %v2985
      %2987 = vmatmul.f32.gmra.mxu0 %v2912
      %v2988 = vpop.f32.mrf.mxu0
      %v2989 = vadd.f32 0.0, %v2988
      %2990 = vmatmul.f32.gmra.mxu0 %v2915
      %v2991 = vpop.f32.mrf.mxu0
      %v2992 = vadd.f32 0.0, %v2991
      %2993 = vmatmul.f32.gmra.mxu0 %v2918
      %v2994 = vpop.f32.mrf.mxu0
      %v2995 = vadd.f32 0.0, %v2994
      %2996 = vdwg.mxu0
      %v2997 = vadd.f32 %v2781, %v2938
      %v2998 = vadd.f32 %v2784, %v2941
      %v2999 = vadd.f32 %v2787, %v2944
      %v3000 = vadd.f32 %v2790, %v2947
      %v3001 = vadd.f32 %v2793, %v2950
      %v3002 = vadd.f32 %v2796, %v2953
      %v3003 = vadd.f32 %v2799, %v2956
      %v3004 = vadd.f32 %v2802, %v2959
      %v3005 = vadd.f32 %v2805, %v2962
      %v3006 = vadd.f32 %v2808, %v2965
      %v3007 = vadd.f32 %v2811, %v2968
      %v3008 = vadd.f32 %v2814, %v2971
      %v3009 = vadd.f32 %v2817, %v2974
      %v3010 = vadd.f32 %v2820, %v2977
      %v3011 = vadd.f32 %v2823, %v2980
      %v3012 = vadd.f32 %v2826, %v2983
      %v3013 = vadd.f32 %v2829, %v2986
      %v3014 = vadd.f32 %v2832, %v2989
      %v3015 = vadd.f32 %v2835, %v2992
      %v3016 = vadd.f32 %v2838, %v2995
      %v3017 = vmul.f32 %v472, %v2997
      %v3018 = vmul.f32 %v473, %v2998
      %v3019 = vmul.f32 %v474, %v2999
      %v3020 = vmul.f32 %v475, %v3000
      %v3021 = vmul.f32 %v476, %v3001
      %v3022 = vmul.f32 %v477, %v3002
      %v3023 = vmul.f32 %v478, %v3003
      %v3024 = vmul.f32 %v479, %v3004
      %v3025 = vmul.f32 %v480, %v3005
      %v3026 = vmul.f32 %v481, %v3006
      %v3027 = vmul.f32 %v482, %v3007
      %v3028 = vmul.f32 %v483, %v3008
      %v3029 = vmul.f32 %v484, %v3009
      %v3030 = vmul.f32 %v485, %v3010
      %v3031 = vmul.f32 %v486, %v3011
      %v3032 = vmul.f32 %v487, %v3012
      %v3033 = vmul.f32 %v488, %v3013
      %v3034 = vmul.f32 %v489, %v3014
      %v3035 = vmul.f32 %v490, %v3015
      %v3036 = vmul.f32 %v491, %v3016
      %v3037 = vadd.f32 %v2582, %v3017
      %v3038 = vadd.f32 %v2583, %v3018
      %v3039 = vadd.f32 %v2584, %v3019
      %v3040 = vadd.f32 %v2585, %v3020
      %v3041 = vadd.f32 %v2586, %v3021
      %v3042 = vadd.f32 %v2587, %v3022
      %v3043 = vadd.f32 %v2588, %v3023
      %v3044 = vadd.f32 %v2589, %v3024
      %v3045 = vadd.f32 %v2590, %v3025
      %v3046 = vadd.f32 %v2591, %v3026
      %v3047 = vadd.f32 %v2592, %v3027
      %v3048 = vadd.f32 %v2593, %v3028
      %v3049 = vadd.f32 %v2594, %v3029
      %v3050 = vadd.f32 %v2595, %v3030
      %v3051 = vadd.f32 %v2596, %v3031
      %v3052 = vadd.f32 %v2597, %v3032
      %v3053 = vadd.f32 %v2598, %v3033
      %v3054 = vadd.f32 %v2599, %v3034
      %v3055 = vadd.f32 %v2600, %v3035
      %v3056 = vadd.f32 %v2601, %v3036
      %v3057 = vld [vmem:[#allocation3 + $0x2] sm:$0xff]
      %v3058 = vld [vmem:[#allocation3 + $0xa] sm:$0xff]
      %v3059 = vld [vmem:[#allocation3 + $0x12] sm:$0xff]
      %v3060 = vld [vmem:[#allocation3 + $0x1a] sm:$0xff]
      %v3061 = vld [vmem:[#allocation3 + $0x22] sm:$0xff]
      %v3062 = vld [vmem:[#allocation3 + $0x2a] sm:$0xff]
      %v3063 = vld [vmem:[#allocation3 + $0x32] sm:$0xff]
      %v3064 = vld [vmem:[#allocation3 + $0x3a] sm:$0xff]
      %v3065 = vld [vmem:[#allocation3 + $0x42] sm:$0xff]
      %v3066 = vld [vmem:[#allocation3 + $0x4a] sm:$0xff]
      %v3067 = vld [vmem:[#allocation3 + $0x52] sm:$0xff]
      %v3068 = vld [vmem:[#allocation3 + $0x5a] sm:$0xff]
      %v3069 = vld [vmem:[#allocation3 + $0x62] sm:$0xff]
      %v3070 = vld [vmem:[#allocation3 + $0x6a] sm:$0xff]
      %v3071 = vld [vmem:[#allocation3 + $0x72] sm:$0xff]
      %v3072 = vld [vmem:[#allocation3 + $0x7a] sm:$0xff]
      %v3073 = vld [vmem:[#allocation3 + $0x82] sm:$0xff]
      %v3074 = vld [vmem:[#allocation3 + $0x8a] sm:$0xff]
      %v3075 = vld [vmem:[#allocation3 + $0x92] sm:$0xff]
      %v3076 = vld [vmem:[#allocation3 + $0x9a] sm:$0xff]
      %v3077 = vld [vmem:[#allocation3 + $0xa2] sm:$0xff]
      %v3079 = vsel %vm235, %v3058, 0
      %v3082 = vsel %vm235, %v3059, 0
      %v3085 = vsel %vm235, %v3060, 0
      %v3088 = vsel %vm235, %v3061, 0
      %v3091 = vsel %vm235, %v3062, 0
      %v3094 = vsel %vm235, %v3063, 0
      %v3097 = vsel %vm235, %v3064, 0
      %v3100 = vsel %vm235, %v3065, 0
      %v3103 = vsel %vm235, %v3066, 0
      %v3106 = vsel %vm235, %v3067, 0
      %v3109 = vsel %vm235, %v3068, 0
      %v3112 = vsel %vm235, %v3069, 0
      %v3115 = vsel %vm235, %v3070, 0
      %v3118 = vsel %vm235, %v3071, 0
      %v3121 = vsel %vm235, %v3072, 0
      %v3124 = vsel %vm235, %v3073, 0
      %v3127 = vsel %vm235, %v3074, 0
      %v3130 = vsel %vm235, %v3075, 0
      %v3133 = vsel %vm235, %v3076, 0
      %v3136 = vsel %vm235, %v3077, 0
      %3138 = vmatpush.msra.mxu0 0.0
      %3139 = vmatpush.msra.mxu0 0.0
      %3140 = vmatpush.msra.mxu0 0.0
      %3141 = vmatpush.msra.mxu0 0.0
      %3142 = vmatpush.msra.mxu0 0.0
      %3143 = vmatpush.msra.mxu0 0.0
      %3144 = vmatpush.msra.mxu0 0.0
      %3145 = vmatpush.msra.mxu0 0.0
      %3146 = vmatpush.msra.mxu0 0.0
      %3147 = vmatpush.msra.mxu0 0.0
      %3148 = vmatpush.msra.mxu0 0.0
      %3149 = vmatpush.msra.mxu0 0.0
      %3150 = vmatpush.msra.mxu0 0.0
      %3151 = vmatpush.msra.mxu0 0.0
      %3152 = vmatpush.msra.mxu0 0.0
      %3153 = vmatpush.msra.mxu0 %v2183
      %3154 = vmatmul.f32.gmra.mxu0 %v3079
      %v3155 = vpop.f32.mrf.mxu0
      %v3156 = vadd.f32 0.0, %v3155
      %3157 = vmatmul.f32.gmra.mxu0 %v3082
      %v3158 = vpop.f32.mrf.mxu0
      %v3159 = vadd.f32 0.0, %v3158
      %3160 = vmatmul.f32.gmra.mxu0 %v3085
      %v3161 = vpop.f32.mrf.mxu0
      %v3162 = vadd.f32 0.0, %v3161
      %3163 = vmatmul.f32.gmra.mxu0 %v3088
      %v3164 = vpop.f32.mrf.mxu0
      %v3165 = vadd.f32 0.0, %v3164
      %3166 = vmatmul.f32.gmra.mxu0 %v3091
      %v3167 = vpop.f32.mrf.mxu0
      %v3168 = vadd.f32 0.0, %v3167
      %3169 = vmatmul.f32.gmra.mxu0 %v3094
      %v3170 = vpop.f32.mrf.mxu0
      %v3171 = vadd.f32 0.0, %v3170
      %3172 = vmatmul.f32.gmra.mxu0 %v3097
      %v3173 = vpop.f32.mrf.mxu0
      %v3174 = vadd.f32 0.0, %v3173
      %3175 = vmatmul.f32.gmra.mxu0 %v3100
      %v3176 = vpop.f32.mrf.mxu0
      %v3177 = vadd.f32 0.0, %v3176
      %3178 = vmatmul.f32.gmra.mxu0 %v3103
      %v3179 = vpop.f32.mrf.mxu0
      %v3180 = vadd.f32 0.0, %v3179
      %3181 = vmatmul.f32.gmra.mxu0 %v3106
      %v3182 = vpop.f32.mrf.mxu0
      %v3183 = vadd.f32 0.0, %v3182
      %3184 = vmatmul.f32.gmra.mxu0 %v3109
      %v3185 = vpop.f32.mrf.mxu0
      %v3186 = vadd.f32 0.0, %v3185
      %3187 = vmatmul.f32.gmra.mxu0 %v3112
      %v3188 = vpop.f32.mrf.mxu0
      %v3189 = vadd.f32 0.0, %v3188
      %3190 = vmatmul.f32.gmra.mxu0 %v3115
      %v3191 = vpop.f32.mrf.mxu0
      %v3192 = vadd.f32 0.0, %v3191
      %3193 = vmatmul.f32.gmra.mxu0 %v3118
      %v3194 = vpop.f32.mrf.mxu0
      %v3195 = vadd.f32 0.0, %v3194
      %3196 = vmatmul.f32.gmra.mxu0 %v3121
      %v3197 = vpop.f32.mrf.mxu0
      %v3198 = vadd.f32 0.0, %v3197
      %3199 = vmatmul.f32.gmra.mxu0 %v3124
      %v3200 = vpop.f32.mrf.mxu0
      %v3201 = vadd.f32 0.0, %v3200
      %3202 = vmatmul.f32.gmra.mxu0 %v3127
      %v3203 = vpop.f32.mrf.mxu0
      %v3204 = vadd.f32 0.0, %v3203
      %3205 = vmatmul.f32.gmra.mxu0 %v3130
      %v3206 = vpop.f32.mrf.mxu0
      %v3207 = vadd.f32 0.0, %v3206
      %3208 = vmatmul.f32.gmra.mxu0 %v3133
      %v3209 = vpop.f32.mrf.mxu0
      %v3210 = vadd.f32 0.0, %v3209
      %3211 = vmatmul.f32.gmra.mxu0 %v3136
      %v3212 = vpop.f32.mrf.mxu0
      %v3213 = vadd.f32 0.0, %v3212
      %3214 = vdwg.mxu0
      %v3216 = vsel %vm235, %v3057, 0
      %3218 = vmatpush.msra.mxu0 0.0
      %3219 = vmatpush.msra.mxu0 0.0
      %3220 = vmatpush.msra.mxu0 0.0
      %3221 = vmatpush.msra.mxu0 0.0
      %3222 = vmatpush.msra.mxu0 0.0
      %3223 = vmatpush.msra.mxu0 0.0
      %3224 = vmatpush.msra.mxu0 0.0
      %3225 = vmatpush.msra.mxu0 0.0
      %3226 = vmatpush.msra.mxu0 0.0
      %3227 = vmatpush.msra.mxu0 0.0
      %3228 = vmatpush.msra.mxu0 0.0
      %3229 = vmatpush.msra.mxu0 0.0
      %3230 = vmatpush.msra.mxu0 0.0
      %3231 = vmatpush.msra.mxu0 0.0
      %3232 = vmatpush.msra.mxu0 0.0
      %3233 = vmatpush.msra.mxu0 %v2180
      %3234 = vmatmul.f32.gmra.mxu0 %v3216
      %v3235 = vpop.f32.mrf.mxu0
      %v3236 = vadd.f32 %v3156, %v3235
      %3237 = vmatmul.f32.gmra.mxu0 %v3079
      %v3238 = vpop.f32.mrf.mxu0
      %v3239 = vadd.f32 %v3159, %v3238
      %3240 = vmatmul.f32.gmra.mxu0 %v3082
      %v3241 = vpop.f32.mrf.mxu0
      %v3242 = vadd.f32 %v3162, %v3241
      %3243 = vmatmul.f32.gmra.mxu0 %v3085
      %v3244 = vpop.f32.mrf.mxu0
      %v3245 = vadd.f32 %v3165, %v3244
      %3246 = vmatmul.f32.gmra.mxu0 %v3088
      %v3247 = vpop.f32.mrf.mxu0
      %v3248 = vadd.f32 %v3168, %v3247
      %3249 = vmatmul.f32.gmra.mxu0 %v3091
      %v3250 = vpop.f32.mrf.mxu0
      %v3251 = vadd.f32 %v3171, %v3250
      %3252 = vmatmul.f32.gmra.mxu0 %v3094
      %v3253 = vpop.f32.mrf.mxu0
      %v3254 = vadd.f32 %v3174, %v3253
      %3255 = vmatmul.f32.gmra.mxu0 %v3097
      %v3256 = vpop.f32.mrf.mxu0
      %v3257 = vadd.f32 %v3177, %v3256
      %3258 = vmatmul.f32.gmra.mxu0 %v3100
      %v3259 = vpop.f32.mrf.mxu0
      %v3260 = vadd.f32 %v3180, %v3259
      %3261 = vmatmul.f32.gmra.mxu0 %v3103
      %v3262 = vpop.f32.mrf.mxu0
      %v3263 = vadd.f32 %v3183, %v3262
      %3264 = vmatmul.f32.gmra.mxu0 %v3106
      %v3265 = vpop.f32.mrf.mxu0
      %v3266 = vadd.f32 %v3186, %v3265
      %3267 = vmatmul.f32.gmra.mxu0 %v3109
      %v3268 = vpop.f32.mrf.mxu0
      %v3269 = vadd.f32 %v3189, %v3268
      %3270 = vmatmul.f32.gmra.mxu0 %v3112
      %v3271 = vpop.f32.mrf.mxu0
      %v3272 = vadd.f32 %v3192, %v3271
      %3273 = vmatmul.f32.gmra.mxu0 %v3115
      %v3274 = vpop.f32.mrf.mxu0
      %v3275 = vadd.f32 %v3195, %v3274
      %3276 = vmatmul.f32.gmra.mxu0 %v3118
      %v3277 = vpop.f32.mrf.mxu0
      %v3278 = vadd.f32 %v3198, %v3277
      %3279 = vmatmul.f32.gmra.mxu0 %v3121
      %v3280 = vpop.f32.mrf.mxu0
      %v3281 = vadd.f32 %v3201, %v3280
      %3282 = vmatmul.f32.gmra.mxu0 %v3124
      %v3283 = vpop.f32.mrf.mxu0
      %v3284 = vadd.f32 %v3204, %v3283
      %3285 = vmatmul.f32.gmra.mxu0 %v3127
      %v3286 = vpop.f32.mrf.mxu0
      %v3287 = vadd.f32 %v3207, %v3286
      %3288 = vmatmul.f32.gmra.mxu0 %v3130
      %v3289 = vpop.f32.mrf.mxu0
      %v3290 = vadd.f32 %v3210, %v3289
      %3291 = vmatmul.f32.gmra.mxu0 %v3133
      %v3292 = vpop.f32.mrf.mxu0
      %v3293 = vadd.f32 %v3213, %v3292
      %3294 = vdwg.mxu0
      %v3295 = vld [vmem:[#allocation3 + $0x12] sm:$0xff]
      %v3296 = vld [vmem:[#allocation3 + $0x1a] sm:$0xff]
      %v3297 = vld [vmem:[#allocation3 + $0x22] sm:$0xff]
      %v3298 = vld [vmem:[#allocation3 + $0x2a] sm:$0xff]
      %v3299 = vld [vmem:[#allocation3 + $0x32] sm:$0xff]
      %v3300 = vld [vmem:[#allocation3 + $0x3a] sm:$0xff]
      %v3301 = vld [vmem:[#allocation3 + $0x42] sm:$0xff]
      %v3302 = vld [vmem:[#allocation3 + $0x4a] sm:$0xff]
      %v3303 = vld [vmem:[#allocation3 + $0x52] sm:$0xff]
      %v3304 = vld [vmem:[#allocation3 + $0x5a] sm:$0xff]
      %v3305 = vld [vmem:[#allocation3 + $0x62] sm:$0xff]
      %v3306 = vld [vmem:[#allocation3 + $0x6a] sm:$0xff]
      %v3307 = vld [vmem:[#allocation3 + $0x72] sm:$0xff]
      %v3308 = vld [vmem:[#allocation3 + $0x7a] sm:$0xff]
      %v3309 = vld [vmem:[#allocation3 + $0x82] sm:$0xff]
      %v3310 = vld [vmem:[#allocation3 + $0x8a] sm:$0xff]
      %v3311 = vld [vmem:[#allocation3 + $0x92] sm:$0xff]
      %v3312 = vld [vmem:[#allocation3 + $0x9a] sm:$0xff]
      %v3313 = vld [vmem:[#allocation3 + $0xa2] sm:$0xff]
      %v3314 = vld [vmem:[#allocation3 + $0xaa] sm:$0xff]
      %v3316 = vsel %vm235, %v3295, 0
      %v3319 = vsel %vm235, %v3296, 0
      %v3322 = vsel %vm235, %v3297, 0
      %v3325 = vsel %vm235, %v3298, 0
      %v3328 = vsel %vm235, %v3299, 0
      %v3331 = vsel %vm235, %v3300, 0
      %v3334 = vsel %vm235, %v3301, 0
      %v3337 = vsel %vm235, %v3302, 0
      %v3340 = vsel %vm235, %v3303, 0
      %v3343 = vsel %vm235, %v3304, 0
      %v3346 = vsel %vm235, %v3305, 0
      %v3349 = vsel %vm235, %v3306, 0
      %v3352 = vsel %vm235, %v3307, 0
      %v3355 = vsel %vm235, %v3308, 0
      %v3358 = vsel %vm235, %v3309, 0
      %v3361 = vsel %vm235, %v3310, 0
      %v3364 = vsel %vm235, %v3311, 0
      %v3367 = vsel %vm235, %v3312, 0
      %v3370 = vsel %vm235, %v3313, 0
      %v3373 = vsel %vm235, %v3314, 0
      %3375 = vmatpush.msra.mxu0 0.0
      %3376 = vmatpush.msra.mxu0 0.0
      %3377 = vmatpush.msra.mxu0 0.0
      %3378 = vmatpush.msra.mxu0 0.0
      %3379 = vmatpush.msra.mxu0 0.0
      %3380 = vmatpush.msra.mxu0 0.0
      %3381 = vmatpush.msra.mxu0 0.0
      %3382 = vmatpush.msra.mxu0 0.0
      %3383 = vmatpush.msra.mxu0 0.0
      %3384 = vmatpush.msra.mxu0 0.0
      %3385 = vmatpush.msra.mxu0 0.0
      %3386 = vmatpush.msra.mxu0 0.0
      %3387 = vmatpush.msra.mxu0 0.0
      %3388 = vmatpush.msra.mxu0 0.0
      %3389 = vmatpush.msra.mxu0 0.0
      %3390 = vmatpush.msra.mxu0 %v2186
      %3391 = vmatmul.f32.gmra.mxu0 %v3316
      %v3392 = vpop.f32.mrf.mxu0
      %v3393 = vadd.f32 0.0, %v3392
      %3394 = vmatmul.f32.gmra.mxu0 %v3319
      %v3395 = vpop.f32.mrf.mxu0
      %v3396 = vadd.f32 0.0, %v3395
      %3397 = vmatmul.f32.gmra.mxu0 %v3322
      %v3398 = vpop.f32.mrf.mxu0
      %v3399 = vadd.f32 0.0, %v3398
      %3400 = vmatmul.f32.gmra.mxu0 %v3325
      %v3401 = vpop.f32.mrf.mxu0
      %v3402 = vadd.f32 0.0, %v3401
      %3403 = vmatmul.f32.gmra.mxu0 %v3328
      %v3404 = vpop.f32.mrf.mxu0
      %v3405 = vadd.f32 0.0, %v3404
      %3406 = vmatmul.f32.gmra.mxu0 %v3331
      %v3407 = vpop.f32.mrf.mxu0
      %v3408 = vadd.f32 0.0, %v3407
      %3409 = vmatmul.f32.gmra.mxu0 %v3334
      %v3410 = vpop.f32.mrf.mxu0
      %v3411 = vadd.f32 0.0, %v3410
      %3412 = vmatmul.f32.gmra.mxu0 %v3337
      %v3413 = vpop.f32.mrf.mxu0
      %v3414 = vadd.f32 0.0, %v3413
      %3415 = vmatmul.f32.gmra.mxu0 %v3340
      %v3416 = vpop.f32.mrf.mxu0
      %v3417 = vadd.f32 0.0, %v3416
      %3418 = vmatmul.f32.gmra.mxu0 %v3343
      %v3419 = vpop.f32.mrf.mxu0
      %v3420 = vadd.f32 0.0, %v3419
      %3421 = vmatmul.f32.gmra.mxu0 %v3346
      %v3422 = vpop.f32.mrf.mxu0
      %v3423 = vadd.f32 0.0, %v3422
      %3424 = vmatmul.f32.gmra.mxu0 %v3349
      %v3425 = vpop.f32.mrf.mxu0
      %v3426 = vadd.f32 0.0, %v3425
      %3427 = vmatmul.f32.gmra.mxu0 %v3352
      %v3428 = vpop.f32.mrf.mxu0
      %v3429 = vadd.f32 0.0, %v3428
      %3430 = vmatmul.f32.gmra.mxu0 %v3355
      %v3431 = vpop.f32.mrf.mxu0
      %v3432 = vadd.f32 0.0, %v3431
      %3433 = vmatmul.f32.gmra.mxu0 %v3358
      %v3434 = vpop.f32.mrf.mxu0
      %v3435 = vadd.f32 0.0, %v3434
      %3436 = vmatmul.f32.gmra.mxu0 %v3361
      %v3437 = vpop.f32.mrf.mxu0
      %v3438 = vadd.f32 0.0, %v3437
      %3439 = vmatmul.f32.gmra.mxu0 %v3364
      %v3440 = vpop.f32.mrf.mxu0
      %v3441 = vadd.f32 0.0, %v3440
      %3442 = vmatmul.f32.gmra.mxu0 %v3367
      %v3443 = vpop.f32.mrf.mxu0
      %v3444 = vadd.f32 0.0, %v3443
      %3445 = vmatmul.f32.gmra.mxu0 %v3370
      %v3446 = vpop.f32.mrf.mxu0
      %v3447 = vadd.f32 0.0, %v3446
      %3448 = vmatmul.f32.gmra.mxu0 %v3373
      %v3449 = vpop.f32.mrf.mxu0
      %v3450 = vadd.f32 0.0, %v3449
      %3451 = vdwg.mxu0
      %v3452 = vadd.f32 %v3236, %v3393
      %v3453 = vadd.f32 %v3239, %v3396
      %v3454 = vadd.f32 %v3242, %v3399
      %v3455 = vadd.f32 %v3245, %v3402
      %v3456 = vadd.f32 %v3248, %v3405
      %v3457 = vadd.f32 %v3251, %v3408
      %v3458 = vadd.f32 %v3254, %v3411
      %v3459 = vadd.f32 %v3257, %v3414
      %v3460 = vadd.f32 %v3260, %v3417
      %v3461 = vadd.f32 %v3263, %v3420
      %v3462 = vadd.f32 %v3266, %v3423
      %v3463 = vadd.f32 %v3269, %v3426
      %v3464 = vadd.f32 %v3272, %v3429
      %v3465 = vadd.f32 %v3275, %v3432
      %v3466 = vadd.f32 %v3278, %v3435
      %v3467 = vadd.f32 %v3281, %v3438
      %v3468 = vadd.f32 %v3284, %v3441
      %v3469 = vadd.f32 %v3287, %v3444
      %v3470 = vadd.f32 %v3290, %v3447
      %v3471 = vadd.f32 %v3293, %v3450
      %v3472 = vmul.f32 %v532, %v3452
      %v3473 = vmul.f32 %v533, %v3453
      %v3474 = vmul.f32 %v534, %v3454
      %v3475 = vmul.f32 %v535, %v3455
      %v3476 = vmul.f32 %v536, %v3456
      %v3477 = vmul.f32 %v537, %v3457
      %v3478 = vmul.f32 %v538, %v3458
      %v3479 = vmul.f32 %v539, %v3459
      %v3480 = vmul.f32 %v540, %v3460
      %v3481 = vmul.f32 %v541, %v3461
      %v3482 = vmul.f32 %v542, %v3462
      %v3483 = vmul.f32 %v543, %v3463
      %v3484 = vmul.f32 %v544, %v3464
      %v3485 = vmul.f32 %v545, %v3465
      %v3486 = vmul.f32 %v546, %v3466
      %v3487 = vmul.f32 %v547, %v3467
      %v3488 = vmul.f32 %v548, %v3468
      %v3489 = vmul.f32 %v549, %v3469
      %v3490 = vmul.f32 %v550, %v3470
      %v3491 = vmul.f32 %v551, %v3471
      %v3492 = vadd.f32 %v3037, %v3472
      %v3493 = vadd.f32 %v3038, %v3473
      %v3494 = vadd.f32 %v3039, %v3474
      %v3495 = vadd.f32 %v3040, %v3475
      %v3496 = vadd.f32 %v3041, %v3476
      %v3497 = vadd.f32 %v3042, %v3477
      %v3498 = vadd.f32 %v3043, %v3478
      %v3499 = vadd.f32 %v3044, %v3479
      %v3500 = vadd.f32 %v3045, %v3480
      %v3501 = vadd.f32 %v3046, %v3481
      %v3502 = vadd.f32 %v3047, %v3482
      %v3503 = vadd.f32 %v3048, %v3483
      %v3504 = vadd.f32 %v3049, %v3484
      %v3505 = vadd.f32 %v3050, %v3485
      %v3506 = vadd.f32 %v3051, %v3486
      %v3507 = vadd.f32 %v3052, %v3487
      %v3508 = vadd.f32 %v3053, %v3488
      %v3509 = vadd.f32 %v3054, %v3489
      %v3510 = vadd.f32 %v3055, %v3490
      %v3511 = vadd.f32 %v3056, %v3491
      %v3512 = vld [vmem:[%s4] sm:$0x1]
      %v3514 = vperm.slane %v3512, 0
      %v3516 = vadd.f32 %v3492, %v3514
      %v3517 = vadd.f32 %v3493, %v3514
      %v3518 = vadd.f32 %v3494, %v3514
      %v3519 = vadd.f32 %v3495, %v3514
      %v3520 = vadd.f32 %v3496, %v3514
      %v3521 = vadd.f32 %v3497, %v3514
      %v3522 = vadd.f32 %v3498, %v3514
      %v3523 = vadd.f32 %v3499, %v3514
      %v3524 = vadd.f32 %v3500, %v3514
      %v3525 = vadd.f32 %v3501, %v3514
      %v3526 = vadd.f32 %v3502, %v3514
      %v3527 = vadd.f32 %v3503, %v3514
      %v3528 = vadd.f32 %v3504, %v3514
      %v3529 = vadd.f32 %v3505, %v3514
      %v3530 = vadd.f32 %v3506, %v3514
      %v3531 = vadd.f32 %v3507, %v3514
      %v3532 = vadd.f32 %v3508, %v3514
      %v3533 = vadd.f32 %v3509, %v3514
      %v3534 = vadd.f32 %v3510, %v3514
      %v3535 = vadd.f32 %v3511, %v3514
      %v3536 = vmax.f32 %v3516, 0.0
      %v3537 = vmax.f32 %v3517, 0.0
      %v3538 = vmax.f32 %v3518, 0.0
      %v3539 = vmax.f32 %v3519, 0.0
      %v3540 = vmax.f32 %v3520, 0.0
      %v3541 = vmax.f32 %v3521, 0.0
      %v3542 = vmax.f32 %v3522, 0.0
      %v3543 = vmax.f32 %v3523, 0.0
      %v3544 = vmax.f32 %v3524, 0.0
      %v3545 = vmax.f32 %v3525, 0.0
      %v3546 = vmax.f32 %v3526, 0.0
      %v3547 = vmax.f32 %v3527, 0.0
      %v3548 = vmax.f32 %v3528, 0.0
      %v3549 = vmax.f32 %v3529, 0.0
      %v3550 = vmax.f32 %v3530, 0.0
      %v3551 = vmax.f32 %v3531, 0.0
      %v3552 = vmax.f32 %v3532, 0.0
      %v3553 = vmax.f32 %v3533, 0.0
      %v3554 = vmax.f32 %v3534, 0.0
      %v3555 = vmax.f32 %v3535, 0.0
      %3556 = vst.msk [vmem:[%s229] sm:$0xff] %vm235, %v3536
      %3557 = vst.msk [vmem:[%s229 + $0x8] sm:$0xff] %vm235, %v3537
      %3558 = vst.msk [vmem:[%s229 + $0x10] sm:$0xff] %vm235, %v3538
      %3559 = vst.msk [vmem:[%s229 + $0x18] sm:$0xff] %vm235, %v3539
      %3560 = vst.msk [vmem:[%s229 + $0x20] sm:$0xff] %vm235, %v3540
      %3561 = vst.msk [vmem:[%s229 + $0x28] sm:$0xff] %vm235, %v3541
      %3562 = vst.msk [vmem:[%s229 + $0x30] sm:$0xff] %vm235, %v3542
      %3563 = vst.msk [vmem:[%s229 + $0x38] sm:$0xff] %vm235, %v3543
      %3564 = vst.msk [vmem:[%s229 + $0x40] sm:$0xff] %vm235, %v3544
      %3565 = vst.msk [vmem:[%s229 + $0x48] sm:$0xff] %vm235, %v3545
      %3566 = vst.msk [vmem:[%s229 + $0x50] sm:$0xff] %vm235, %v3546
      %3567 = vst.msk [vmem:[%s229 + $0x58] sm:$0xff] %vm235, %v3547
      %3568 = vst.msk [vmem:[%s229 + $0x60] sm:$0xff] %vm235, %v3548
      %3569 = vst.msk [vmem:[%s229 + $0x68] sm:$0xff] %vm235, %v3549
      %3570 = vst.msk [vmem:[%s229 + $0x70] sm:$0xff] %vm235, %v3550
      %3571 = vst.msk [vmem:[%s229 + $0x78] sm:$0xff] %vm235, %v3551
      %3572 = vst.msk [vmem:[%s229 + $0x80] sm:$0xff] %vm235, %v3552
      %3573 = vst.msk [vmem:[%s229 + $0x88] sm:$0xff] %vm235, %v3553
      %3574 = vst.msk [vmem:[%s229 + $0x90] sm:$0xff] %vm235, %v3554
      %3575 = vst.msk [vmem:[%s229 + $0x98] sm:$0xff] %vm235, %v3555
      %s3576 = smul.u32 20, %s16
      %p3577 = scmp.lt.s32.totalorder %s3576, 39
      %s3578 = scalar_select %p3577, %s3576, 39
      %s3579 = smul.addr %s3578, 8
      %s3580 = scalar_lea.vmem %s5, %s3579
      // Predicated region
      $region41: #{_lambda_.1} parent=39 // pred_check
        %p3581 = pneg %p144
      $region42: #{_lambda_.1} parent=39 // pred_check_branch
        %3583 = sbr.rel (%p3581) target = $region44
      $region43: #{_lambda_.1} parent=39 // pred_region
        %s3584 = smul.u32 20, %s16
      $region44: #{_lambda_.1} parent=39 // pred_fallthru
        _
    $region40: #{_lambda_.1} parent=5 // pred_fallthru
      _
    %p3585 = scmp.le.s32.totalorder 2, %s11
    // Predicated region
    $region45: #{_lambda_.1} parent=5 // pred_check
      %p3586 = pneg %p3585
    $region46: #{_lambda_.1} parent=5 // pred_check_branch
      %3588 = sbr.rel (%p3586) target = $region48
    $region47: #{_lambda_.1} parent=5 // pred_region
      %s3589 = ssub.s32 %s11, 2
      // Predicated region
      $region49: #{_lambda_.1} parent=47 // pred_check
        %p3590 = pneg %p150
      $region50: #{_lambda_.1} parent=47 // pred_check_branch
        %3592 = sbr.rel (%p3590) target = $region52
      $region51: #{_lambda_.1} parent=47 // pred_region
        %s3593 = smul.u32 20, %s17
        %p3594 = scmp.lt.s32.totalorder %s3593, 39
        %s3595 = scalar_select %p3594, %s3593, 39
        %s3596 = smul.addr %s3595, 8
        %s3597 = scalar_lea.vmem %s5, %s3596
      $region52: #{_lambda_.1} parent=47 // pred_fallthru
        _
    $region48: #{_lambda_.1} parent=5 // pred_fallthru
      _
  $region6: #{_lambda_.1} parent=0 // loop_footer
    %s15 = sadd.s32 1, %s11
  $region7: #{_lambda_.1} parent=0 // loop_footer_branch
    %10 = sbr.rel target = $region3
  $region8: #{_lambda_.1} parent=0 // loop_exit
    _

</llo_original>
